<compile_context>
chip_gen: v6e
topology: v6e:2x2x1
jax: 0.10.0
libtpu: 0.0.40
codegen_flags: <defaults>
</compile_context>

<pallas_src>
import functools
import math

import jax
import jax.numpy as jnp
from jax.experimental import pallas as pl
from jax.experimental.pallas import tpu as pltpu


def _norm_torch(x, alpha, bias, eps, approx_recip):
    """Norm from models/Transformer.py.

    NOTE: intentionally matches the PyTorch module, NOT standard LayerNorm:
    torch.std() is *unbiased* (divides by d-1) and eps is added to the std
    (not the variance).  Do not "fix" this.
    """
    d = x.shape[-1]
    mean = jnp.mean(x, axis=-1, keepdims=True)
    c = x - mean
    var = jnp.sum(c * c, axis=-1, keepdims=True) * (1.0 / (d - 1))
    # Reciprocal goes to the EUP slot instead of a VPU divide sequence.
    inv = pl.reciprocal(jnp.sqrt(var) + eps, approx=approx_recip)
    return alpha * c * inv + bias


def _encoder_kernel(num_heads, d_k, eps, compute_dtype, approx_recip,
                    x_ref,
                    wq_ref, wk_ref, wv_ref, wo_ref,
                    bq_ref, bk_ref, bv_ref, bo_ref,
                    w1_ref, b1_ref, w2_ref, b2_ref,
                    a1_ref, g1_ref, a2_ref, g2_ref,
                    o_ref,
                    h1_scr, acc_scr):
    f_idx = pl.program_id(1)
    bblk, s, d = x_ref.shape
    m = bblk * s

    # ---- Attention + residual + Norm1: only on the first FFN-chunk step. ---
    @pl.when(f_idx == 0)
    def _attention_and_norm1():
        x = x_ref[...].reshape(m, d)
        xc = x.astype(compute_dtype)

        # Q/K/V projections, fp32 MXU accumulation.  1/sqrt(d_k) is already
        # folded into wq/bq by prepare_encoder_params (no per-step scale).
        q = jnp.dot(xc, wq_ref[...], preferred_element_type=jnp.float32) + bq_ref[...]
        k = jnp.dot(xc, wk_ref[...], preferred_element_type=jnp.float32) + bk_ref[...]
        v = jnp.dot(xc, wv_ref[...], preferred_element_type=jnp.float32) + bv_ref[...]

        # Per-head attention (static unroll).  Scores contract d_k directly
        # (no explicit K transpose); softmax normalization is applied AFTER
        # the PV matmul (S*d_k multiplies instead of S*S per head).
        # TODO(synk): src_mask and attention-weight dropout are not
        # implemented (eval mode, mask=None only).
        # TODO(synk): for very long S, add a KV-tile loop with online softmax
        # instead of materializing (Bblk, S, S) scores per head.
        ctx_heads = []
        for h in range(num_heads):
            lo = h * d_k
            qh = q[:, lo:lo + d_k].reshape(bblk, s, d_k).astype(compute_dtype)
            kh = k[:, lo:lo + d_k].reshape(bblk, s, d_k).astype(compute_dtype)
            vh = v[:, lo:lo + d_k].reshape(bblk, s, d_k).astype(compute_dtype)

            scores = jnp.einsum("bqd,bkd->bqk", qh, kh,
                                preferred_element_type=jnp.float32)
            mx = jnp.max(scores, axis=-1, keepdims=True)
            p = jnp.exp(scores - mx)
            denom = jnp.sum(p, axis=-1, keepdims=True)
            ctx_h = jnp.einsum("bqk,bkd->bqd", p.astype(compute_dtype), vh,
                               preferred_element_type=jnp.float32)
            ctx_h = ctx_h * pl.reciprocal(denom, approx=approx_recip)
            ctx_heads.append(ctx_h.reshape(m, d_k))

        # One lane concat, then a single K=D output projection (full MXU
        # contraction depth instead of H small K=d_k matmuls).
        ctx = jnp.concatenate(ctx_heads, axis=-1)
        attn_out = jnp.dot(ctx.astype(compute_dtype), wo_ref[...],
                           preferred_element_type=jnp.float32) + bo_ref[...]

        # Residual + Norm1 (fp32); kept resident in VMEM for all FFN steps.
        h1_scr[...] = _norm_torch(attn_out + x, a1_ref[...], g1_ref[...],
                                  eps, approx_recip)
        acc_scr[...] = jnp.zeros_like(acc_scr)

    # ---- FeedForward, tiled over d_ff: one (D, ffn_block) chunk per step. --
    h1 = h1_scr[...]
    fch = jnp.dot(h1.astype(compute_dtype), w1_ref[...],
                  preferred_element_type=jnp.float32) + b1_ref[...]
    fch = jnp.maximum(fch, 0.0)
    acc_scr[...] += jnp.dot(fch.astype(compute_dtype), w2_ref[...],
                            preferred_element_type=jnp.float32)

    # ---- Residual + Norm2 + store: only on the last FFN-chunk step. --------
    @pl.when(f_idx == pl.num_programs(1) - 1)
    def _finalize():
        out = _norm_torch(acc_scr[...] + b2_ref[...] + h1_scr[...],
                          a2_ref[...], g2_ref[...], eps, approx_recip)
        o_ref[...] = out.reshape(bblk, s, d).astype(o_ref.dtype)


def prepare_encoder_params(params, num_heads, *, compute_dtype=jnp.float32):
    """Hoist per-call weight transposes / casts / scale folding.

    Call once and reuse across forward calls (otherwise every forward re-runs
    ~12*D^2 element transposes+casts as separate XLA ops before the kernel).
    bf16 `compute_dtype` is worthwhile on all of v5e/v6e/v7x (bf16 MXU on
    every generation; halves weight HBM->VMEM traffic and residency); all
    softmax / Norm / accumulation math stays fp32.
    """
    cdt = jnp.dtype(compute_dtype)
    f32 = jnp.float32
    D = params["wq"].shape[0]
    d_ff = params["w1"].shape[0]              # torch Linear weight is (out, in)
    d_k = D // num_heads
    if d_k * num_heads != D:
        raise ValueError("d_model cannot be divided by num_heads.")
    scale = 1.0 / math.sqrt(d_k)
    return {
        "_prepared": True,
        "num_heads": num_heads,
        "d_model": D,
        "d_ff": d_ff,
        "compute_dtype": cdt,
        # 1/sqrt(d_k) folded into the Q projection (done once, here).
        "wq_t": (params["wq"].T.astype(f32) * scale).astype(cdt),
        "wk_t": params["wk"].T.astype(cdt),
        "wv_t": params["wv"].T.astype(cdt),
        "wo_t": params["wo"].T.astype(cdt),
        "w1_t": params["w1"].T.astype(cdt),   # (D, d_ff)
        "w2_t": params["w2"].T.astype(cdt),   # (d_ff, D)
        "bq": (params["bq"].astype(f32) * scale).reshape(1, D),
        "bk": params["bk"].reshape(1, D).astype(f32),
        "bv": params["bv"].reshape(1, D).astype(f32),
        "bo": params["bo"].reshape(1, D).astype(f32),
        "b1": params["b1"].reshape(1, d_ff).astype(f32),
        "b2": params["b2"].reshape(1, D).astype(f32),
        "a1": params["alpha1"].reshape(1, D).astype(f32),
        "g1": params["beta1"].reshape(1, D).astype(f32),
        "a2": params["alpha2"].reshape(1, D).astype(f32),
        "g2": params["beta2"].reshape(1, D).astype(f32),
    }


def encoder_forward(x, params, num_heads=None, *, eps=1e-6,
                    compute_dtype=jnp.float32, batch_block=None,
                    ffn_block=None, single_buffer_weights=True,
                    vmem_limit_bytes=None):
    """Fused Encoder forward.  x: (B, S, d_model) float32.

    `params` is either the raw PyTorch-layout dict or (preferred) the cached
    output of prepare_encoder_params.
    """
    if not params.get("_prepared", False):
        if num_heads is None:
            raise ValueError("num_heads is required with raw params.")
        params = prepare_encoder_params(params, num_heads,
                                        compute_dtype=compute_dtype)
    p = params
    num_heads = p["num_heads"]
    cdt = p["compute_dtype"]
    B, S, D = x.shape
    if D != p["d_model"]:
        raise ValueError("x feature dim does not match params.")
    d_ff = p["d_ff"]
    d_k = D // num_heads

    # Batch tiling: MXU-friendly M, but keep >= 2 parallel grid steps so both
    # v7x TensorCores get work (harmless on 1-TC v5e/v6e).
    if batch_block is None:
        target_rows = 256
        bb = max(1, min(B, -(-target_rows // S)))
        if B >= 2:
            bb = min(bb, B // 2)
        bb = max(bb, 1)
        while B % bb:
            bb -= 1
        batch_block = bb
    if B % batch_block:
        raise ValueError("batch_block must divide B")

    # FFN tiling over d_ff: bounds VMEM and streams w1/w2 chunks through the
    # pipeline so their DMA overlaps compute.
    if ffn_block is None:
        ffn_block = d_ff
        if d_ff > 1024:
            for cand in (1024, 512, 256, 128):
                if d_ff % cand == 0:
                    ffn_block = cand
                    break
    if d_ff % ffn_block:
        raise ValueError("ffn_block must divide d_ff")
    n_ffn = d_ff // ffn_block
    grid = (B // batch_block, n_ffn)

    # Scoped-VMEM limit sized to the real working set (clamped to the chip).
    if vmem_limit_bytes is None:
        ic = cdt.itemsize
        m = batch_block * S
        wbuf = 1 if single_buffer_weights else 2
        est = (
            4 * D * D * ic * wbuf                  # resident attention weights
            + 9 * D * 4 * wbuf                     # biases + norm params
            + 2 * D * ffn_block * ic * 2           # streamed FFN chunks (x2 buf)
            + ffn_block * 4 * 2                    # b1 chunk
            + 2 * m * D * 4 * 2                    # x / out tiles (x2 buf)
            + 2 * m * D * 4                        # h1 + FFN-acc scratch
            + 3 * m * D * (4 + ic)                 # q / k / v (+ casts)
            + 4 * batch_block * S * S * 4          # live per-head scores / p
            + 2 * m * D * 4                        # ctx pieces + attn_out
            + 2 * m * ffn_block * 4                # FFN chunk intermediates
        )
        try:
            cap = int(pltpu.get_tpu_info().vmem_capacity_bytes * 0.9)
        except Exception:                          # interpret mode / older jax
            cap = 58 << 20                         # ~0.9 * 64 MiB (v7x per-TC)
        vmem_limit_bytes = min(max(int(est * 1.5) + (4 << 20), 32 << 20), cap)

    kernel = functools.partial(
        _encoder_kernel, num_heads, d_k, eps, cdt,
        cdt == jnp.dtype(jnp.bfloat16))

    def _call(single_buf):
        wkw = {"pipeline_mode": pl.Buffered(1)} if single_buf else {}
        # Grid-invariant operands: constant index_map already skips re-fetch;
        # single-buffering additionally halves their VMEM footprint.
        w_dd = pl.BlockSpec((D, D), lambda b, f: (0, 0), **wkw)
        b_d = pl.BlockSpec((1, D), lambda b, f: (0, 0), **wkw)
        # FFN chunks change with f: keep default double-buffering so the next
        # chunk's DMA overlaps the current chunk's matmuls.
        w1_spec = pl.BlockSpec((D, ffn_block), lambda b, f: (0, f))
        b1_spec = pl.BlockSpec((1, ffn_block), lambda b, f: (0, f))
        w2_spec = pl.BlockSpec((ffn_block, D), lambda b, f: (f, 0))
        x_spec = pl.BlockSpec((batch_block, S, D), lambda b, f: (b, 0, 0))

        return pl.pallas_call(
            kernel,
            out_shape=jax.ShapeDtypeStruct((B, S, D), x.dtype),
            grid_spec=pltpu.PrefetchScalarGridSpec(
                num_scalar_prefetch=0,
                grid=grid,
                in_specs=[x_spec,
                          w_dd, w_dd, w_dd, w_dd,
                          b_d, b_d, b_d, b_d,
                          w1_spec, b1_spec, w2_spec, b_d,
                          b_d, b_d, b_d, b_d],
                out_specs=x_spec,
                scratch_shapes=[
                    pltpu.VMEM((batch_block * S, D), jnp.float32),  # h1
                    pltpu.VMEM((batch_block * S, D), jnp.float32),  # FFN acc
                ]),
            compiler_params=pltpu.CompilerParams(
                dimension_semantics=("parallel", "arbitrary"),
                vmem_limit_bytes=int(vmem_limit_bytes)),
        )(x,
          p["wq_t"], p["wk_t"], p["wv_t"], p["wo_t"],
          p["bq"], p["bk"], p["bv"], p["bo"],
          p["w1_t"], p["b1"], p["w2_t"], p["b2"],
          p["a1"], p["g1"], p["a2"], p["g2"])

    if single_buffer_weights:
        try:
            return _call(True)
        except Exception:
            # pipeline_mode=pl.Buffered(1) unsupported on this jax/libtpu:
            # fall back to default double-buffered weights (correctness same).
            pass
    return _call(False)


def _reference(x, params, num_heads, eps=1e-6):
    """Plain-JAX reference of the PyTorch Encoder forward (eval, no mask)."""
    B, S, D = x.shape
    d_k = D // num_heads

    def lin(t, w, b):
        return t @ w.T + b

    def norm(t, alpha, bias):
        d = t.shape[-1]
        mean = t.mean(axis=-1, keepdims=True)
        var = ((t - mean) ** 2).sum(axis=-1, keepdims=True) / (d - 1)  # unbiased
        return alpha * (t - mean) / (jnp.sqrt(var) + eps) + bias

    q = lin(x, params["wq"], params["bq"]).reshape(B, S, num_heads, d_k).transpose(0, 2, 1, 3)
    k = lin(x, params["wk"], params["bk"]).reshape(B, S, num_heads, d_k).transpose(0, 2, 1, 3)
    v = lin(x, params["wv"], params["bv"]).reshape(B, S, num_heads, d_k).transpose(0, 2, 1, 3)
    scores = jnp.einsum("bhqd,bhkd->bhqk", q, k) / math.sqrt(d_k)
    attn = jax.nn.softmax(scores, axis=-1)
    ctx = jnp.einsum("bhqk,bhkd->bhqd", attn, v).transpose(0, 2, 1, 3).reshape(B, S, D)
    attn_out = lin(ctx, params["wo"], params["bo"])

    h1 = norm(attn_out + x, params["alpha1"], params["beta1"])
    f = jax.nn.relu(lin(h1, params["w1"], params["b1"]))
    f = lin(f, params["w2"], params["b2"])
    return norm(f + h1, params["alpha2"], params["beta2"])


def _make_params(key, d_model, d_ff):
    ks = jax.random.split(key, 16)

    def xavier(k_, fan_out, fan_in):
        std = math.sqrt(2.0 / (fan_in + fan_out))
        return std * jax.random.normal(k_, (fan_out, fan_in), dtype=jnp.float32)

    return {
        "wq": xavier(ks[0], d_model, d_model),
        "wk": xavier(ks[1], d_model, d_model),
        "wv": xavier(ks[2], d_model, d_model),
        "wo": xavier(ks[3], d_model, d_model),
        "bq": 0.02 * jax.random.normal(ks[4], (d_model,), dtype=jnp.float32),
        "bk": 0.02 * jax.random.normal(ks[5], (d_model,), dtype=jnp.float32),
        "bv": 0.02 * jax.random.normal(ks[6], (d_model,), dtype=jnp.float32),
        "bo": 0.02 * jax.random.normal(ks[7], (d_model,), dtype=jnp.float32),
        "w1": xavier(ks[8], d_ff, d_model),
        "b1": 0.02 * jax.random.normal(ks[9], (d_ff,), dtype=jnp.float32),
        "w2": xavier(ks[10], d_model, d_ff),
        "b2": 0.02 * jax.random.normal(ks[11], (d_model,), dtype=jnp.float32),
        "alpha1": 1.0 + 0.05 * jax.random.normal(ks[12], (d_model,), dtype=jnp.float32),
        "beta1": 0.05 * jax.random.normal(ks[13], (d_model,), dtype=jnp.float32),
        "alpha2": 1.0 + 0.05 * jax.random.normal(ks[14], (d_model,), dtype=jnp.float32),
        "beta2": 0.05 * jax.random.normal(ks[15], (d_model,), dtype=jnp.float32),
    }


if __name__ == "__main__":
    def run_case(B, S, d_model, num_heads, *, ffn_block=None, seed=0):
        d_ff = 4 * d_model
        params = _make_params(jax.random.PRNGKey(seed), d_model, d_ff)
        x = jax.random.normal(jax.random.PRNGKey(seed + 100),
                              (B, S, d_model), dtype=jnp.float32)
        ref = jax.block_until_ready(_reference(x, params, num_heads))

        # fp32 path: strict numerical check.  Weight prep hoisted & reused.
        prep32 = prepare_encoder_params(params, num_heads,
                                        compute_dtype=jnp.float32)
        out = jax.block_until_ready(
            encoder_forward(x, prep32, ffn_block=ffn_block))
        assert out.shape == (B, S, d_model)
        assert jnp.allclose(out, ref, atol=1e-4, rtol=1e-4), (
            f"fp32 kernel mismatch vs reference (B={B}, S={S}, D={d_model})")

        # bf16-operand path (fp32 MXU accumulation): v5e/v6e/v7x throughput.
        prep16 = prepare_encoder_params(params, num_heads,
                                        compute_dtype=jnp.bfloat16)
        out16 = jax.block_until_ready(
            encoder_forward(x, prep16, ffn_block=ffn_block))
        assert jnp.allclose(out16, ref, atol=5e-2, rtol=5e-2), (
            f"bf16 kernel mismatch vs reference (B={B}, S={S}, D={d_model})")

    # Small config implied by the module defaults.
    run_case(2, 8, 32, 4, seed=0)
    # Lane-aligned config (D multiple of 128) that also exercises the
    # d_ff-chunked FFN accumulation (2 chunks) and a multi-step parallel grid.
    run_case(4, 16, 128, 8, ffn_block=256, seed=1)

    print("KERNEL_OK")
</pallas_src>

<mosaic_0001>
module attributes {stable_mosaic.version = 11 : i64} {
  func.func @_encoder_kernel(%arg0: i32, %arg1: i32, %arg2: memref<1x8x32xf32, #tpu.memory_space<vmem>>, %arg3: memref<32x32xf32, #tpu.memory_space<vmem>>, %arg4: memref<32x32xf32, #tpu.memory_space<vmem>>, %arg5: memref<32x32xf32, #tpu.memory_space<vmem>>, %arg6: memref<32x32xf32, #tpu.memory_space<vmem>>, %arg7: memref<1x32xf32, #tpu.memory_space<vmem>>, %arg8: memref<1x32xf32, #tpu.memory_space<vmem>>, %arg9: memref<1x32xf32, #tpu.memory_space<vmem>>, %arg10: memref<1x32xf32, #tpu.memory_space<vmem>>, %arg11: memref<32x128xf32, #tpu.memory_space<vmem>>, %arg12: memref<1x128xf32, #tpu.memory_space<vmem>>, %arg13: memref<128x32xf32, #tpu.memory_space<vmem>>, %arg14: memref<1x32xf32, #tpu.memory_space<vmem>>, %arg15: memref<1x32xf32, #tpu.memory_space<vmem>>, %arg16: memref<1x32xf32, #tpu.memory_space<vmem>>, %arg17: memref<1x32xf32, #tpu.memory_space<vmem>>, %arg18: memref<1x32xf32, #tpu.memory_space<vmem>>, %arg19: memref<1x8x32xf32, #tpu.memory_space<vmem>>, %arg20: memref<8x32xf32, #tpu.memory_space<vmem>>, %arg21: memref<8x32xf32, #tpu.memory_space<vmem>>) attributes {dimension_semantics = [#tpu.dimension_semantics<parallel>, #tpu.dimension_semantics<arbitrary>], iteration_bounds = array<i64: 2, 1>, scalar_prefetch = 0 : i64, scratch_operands = 2 : i64, tpu.core_type = #tpu.core_type<tc>, window_params = [{transform_indices = @transform_0, window_bounds = array<i64: 1, 8, 32>}, {pipeline_mode = #tpu.pipeline_mode<synchronous>, transform_indices = @transform_1, window_bounds = array<i64: 32, 32>}, {pipeline_mode = #tpu.pipeline_mode<synchronous>, transform_indices = @transform_2, window_bounds = array<i64: 32, 32>}, {pipeline_mode = #tpu.pipeline_mode<synchronous>, transform_indices = @transform_3, window_bounds = array<i64: 32, 32>}, {pipeline_mode = #tpu.pipeline_mode<synchronous>, transform_indices = @transform_4, window_bounds = array<i64: 32, 32>}, {pipeline_mode = #tpu.pipeline_mode<synchronous>, transform_indices = @transform_5, window_bounds = array<i64: 1, 32>}, {pipeline_mode = #tpu.pipeline_mode<synchronous>, transform_indices = @transform_6, window_bounds = array<i64: 1, 32>}, {pipeline_mode = #tpu.pipeline_mode<synchronous>, transform_indices = @transform_7, window_bounds = array<i64: 1, 32>}, {pipeline_mode = #tpu.pipeline_mode<synchronous>, transform_indices = @transform_8, window_bounds = array<i64: 1, 32>}, {transform_indices = @transform_9, window_bounds = array<i64: 32, 128>}, {transform_indices = @transform_10, window_bounds = array<i64: 1, 128>}, {transform_indices = @transform_11, window_bounds = array<i64: 128, 32>}, {pipeline_mode = #tpu.pipeline_mode<synchronous>, transform_indices = @transform_12, window_bounds = array<i64: 1, 32>}, {pipeline_mode = #tpu.pipeline_mode<synchronous>, transform_indices = @transform_13, window_bounds = array<i64: 1, 32>}, {pipeline_mode = #tpu.pipeline_mode<synchronous>, transform_indices = @transform_14, window_bounds = array<i64: 1, 32>}, {pipeline_mode = #tpu.pipeline_mode<synchronous>, transform_indices = @transform_15, window_bounds = array<i64: 1, 32>}, {pipeline_mode = #tpu.pipeline_mode<synchronous>, transform_indices = @transform_16, window_bounds = array<i64: 1, 32>}, {transform_indices = @transform_17, window_bounds = array<i64: 1, 8, 32>}]} {
    %c0_i32 = arith.constant 0 : i32
    %0 = arith.cmpi eq, %arg1, %c0_i32 : i32
    %1 = arith.extui %0 : i1 to i32
    %c0_i32_0 = arith.constant 0 : i32
    %2 = arith.cmpi ne, %1, %c0_i32_0 : i32
    scf.if %2 {
      %c0_16 = arith.constant 0 : index
      %c0_17 = arith.constant 0 : index
      %c0_18 = arith.constant 0 : index
      %19 = vector.load %arg2[%c0_16, %c0_17, %c0_18] : memref<1x8x32xf32, #tpu.memory_space<vmem>>, vector<1x8x32xf32>
      %20 = vector.shape_cast %19 : vector<1x8x32xf32> to vector<8x32xf32>
      %c0_19 = arith.constant 0 : index
      %c0_20 = arith.constant 0 : index
      %21 = vector.load %arg3[%c0_19, %c0_20] : memref<32x32xf32, #tpu.memory_space<vmem>>, vector<32x32xf32>
      %cst_21 = arith.constant dense<0.000000e+00> : vector<8x32xf32>
      %22 = tpu.matmul %20, %21, %cst_21 {dimension_numbers = #tpu.dot_dimension_numbers<[1], [0], [0], [1], [0, 0, 1, 1], [], []>} : vector<8x32xf32>, vector<32x32xf32>, vector<8x32xf32> -> vector<8x32xf32>
      %c0_22 = arith.constant 0 : index
      %c0_23 = arith.constant 0 : index
      %23 = vector.load %arg7[%c0_22, %c0_23] : memref<1x32xf32, #tpu.memory_space<vmem>>, vector<1x32xf32>
      %24 = vector.broadcast %23 : vector<1x32xf32> to vector<8x32xf32>
      %25 = arith.addf %22, %24 : vector<8x32xf32>
      %c0_24 = arith.constant 0 : index
      %c0_25 = arith.constant 0 : index
      %26 = vector.load %arg4[%c0_24, %c0_25] : memref<32x32xf32, #tpu.memory_space<vmem>>, vector<32x32xf32>
      %cst_26 = arith.constant dense<0.000000e+00> : vector<8x32xf32>
      %27 = tpu.matmul %20, %26, %cst_26 {dimension_numbers = #tpu.dot_dimension_numbers<[1], [0], [0], [1], [0, 0, 1, 1], [], []>} : vector<8x32xf32>, vector<32x32xf32>, vector<8x32xf32> -> vector<8x32xf32>
      %c0_27 = arith.constant 0 : index
      %c0_28 = arith.constant 0 : index
      %28 = vector.load %arg8[%c0_27, %c0_28] : memref<1x32xf32, #tpu.memory_space<vmem>>, vector<1x32xf32>
      %29 = vector.broadcast %28 : vector<1x32xf32> to vector<8x32xf32>
      %30 = arith.addf %27, %29 : vector<8x32xf32>
      %c0_29 = arith.constant 0 : index
      %c0_30 = arith.constant 0 : index
      %31 = vector.load %arg5[%c0_29, %c0_30] : memref<32x32xf32, #tpu.memory_space<vmem>>, vector<32x32xf32>
      %cst_31 = arith.constant dense<0.000000e+00> : vector<8x32xf32>
      %32 = tpu.matmul %20, %31, %cst_31 {dimension_numbers = #tpu.dot_dimension_numbers<[1], [0], [0], [1], [0, 0, 1, 1], [], []>} : vector<8x32xf32>, vector<32x32xf32>, vector<8x32xf32> -> vector<8x32xf32>
      %c0_32 = arith.constant 0 : index
      %c0_33 = arith.constant 0 : index
      %33 = vector.load %arg9[%c0_32, %c0_33] : memref<1x32xf32, #tpu.memory_space<vmem>>, vector<1x32xf32>
      %34 = vector.broadcast %33 : vector<1x32xf32> to vector<8x32xf32>
      %35 = arith.addf %32, %34 : vector<8x32xf32>
      %36 = vector.extract_strided_slice %25 {offsets = [0, 0], sizes = [8, 8], strides = [1, 1]} : vector<8x32xf32> to vector<8x8xf32>
      %37 = vector.shape_cast %36 : vector<8x8xf32> to vector<1x8x8xf32>
      %38 = vector.extract_strided_slice %30 {offsets = [0, 0], sizes = [8, 8], strides = [1, 1]} : vector<8x32xf32> to vector<8x8xf32>
      %39 = vector.shape_cast %38 : vector<8x8xf32> to vector<1x8x8xf32>
      %40 = vector.extract_strided_slice %35 {offsets = [0, 0], sizes = [8, 8], strides = [1, 1]} : vector<8x32xf32> to vector<8x8xf32>
      %41 = vector.shape_cast %40 : vector<8x8xf32> to vector<1x8x8xf32>
      "tpu.trace_start"() <{level = 10 : i32, message = "bqd,bkd->bqk"}> : () -> ()
      %cst_34 = arith.constant dense<0.000000e+00> : vector<1x8x8xf32>
      %42 = tpu.matmul %37, %39, %cst_34 {dimension_numbers = #tpu.dot_dimension_numbers<[2], [2], [1], [1], [0, 0, 0, 1, 1, 1], [0], [0]>} : vector<1x8x8xf32>, vector<1x8x8xf32>, vector<1x8x8xf32> -> vector<1x8x8xf32>
      "tpu.trace_stop"() : () -> ()
      %cst_35 = arith.constant dense<0xFF800000> : vector<1x8xf32>
      %43 = vector.multi_reduction <maximumf>, %42, %cst_35 [2] : vector<1x8x8xf32> to vector<1x8xf32>
      %44 = vector.shape_cast %43 : vector<1x8xf32> to vector<1x8x1xf32>
      %45 = vector.broadcast %44 : vector<1x8x1xf32> to vector<1x8x8xf32>
      %46 = arith.subf %42, %45 : vector<1x8x8xf32>
      %47 = math.exp %46 : vector<1x8x8xf32>
      %cst_36 = arith.constant dense<0.000000e+00> : vector<1x8xf32>
      %48 = vector.multi_reduction <add>, %47, %cst_36 [2] : vector<1x8x8xf32> to vector<1x8xf32>
      %49 = vector.shape_cast %48 : vector<1x8xf32> to vector<1x8x1xf32>
      "tpu.trace_start"() <{level = 10 : i32, message = "bqk,bkd->bqd"}> : () -> ()
      %cst_37 = arith.constant dense<0.000000e+00> : vector<1x8x8xf32>
      %50 = tpu.matmul %47, %41, %cst_37 {dimension_numbers = #tpu.dot_dimension_numbers<[2], [1], [1], [2], [0, 0, 0, 1, 1, 2], [0], [0]>} : vector<1x8x8xf32>, vector<1x8x8xf32>, vector<1x8x8xf32> -> vector<1x8x8xf32>
      "tpu.trace_stop"() : () -> ()
      %51 = tpu.reciprocal %49 : vector<1x8x1xf32> -> vector<1x8x1xf32>
      %52 = vector.broadcast %51 : vector<1x8x1xf32> to vector<1x8x8xf32>
      %53 = arith.mulf %50, %52 : vector<1x8x8xf32>
      %54 = vector.shape_cast %53 : vector<1x8x8xf32> to vector<8x8xf32>
      %55 = vector.extract_strided_slice %25 {offsets = [0, 8], sizes = [8, 8], strides = [1, 1]} : vector<8x32xf32> to vector<8x8xf32>
      %56 = vector.shape_cast %55 : vector<8x8xf32> to vector<1x8x8xf32>
      %57 = vector.extract_strided_slice %30 {offsets = [0, 8], sizes = [8, 8], strides = [1, 1]} : vector<8x32xf32> to vector<8x8xf32>
      %58 = vector.shape_cast %57 : vector<8x8xf32> to vector<1x8x8xf32>
      %59 = vector.extract_strided_slice %35 {offsets = [0, 8], sizes = [8, 8], strides = [1, 1]} : vector<8x32xf32> to vector<8x8xf32>
      %60 = vector.shape_cast %59 : vector<8x8xf32> to vector<1x8x8xf32>
      "tpu.trace_start"() <{level = 10 : i32, message = "bqd,bkd->bqk"}> : () -> ()
      %cst_38 = arith.constant dense<0.000000e+00> : vector<1x8x8xf32>
      %61 = tpu.matmul %56, %58, %cst_38 {dimension_numbers = #tpu.dot_dimension_numbers<[2], [2], [1], [1], [0, 0, 0, 1, 1, 1], [0], [0]>} : vector<1x8x8xf32>, vector<1x8x8xf32>, vector<1x8x8xf32> -> vector<1x8x8xf32>
      "tpu.trace_stop"() : () -> ()
      %cst_39 = arith.constant dense<0xFF800000> : vector<1x8xf32>
      %62 = vector.multi_reduction <maximumf>, %61, %cst_39 [2] : vector<1x8x8xf32> to vector<1x8xf32>
      %63 = vector.shape_cast %62 : vector<1x8xf32> to vector<1x8x1xf32>
      %64 = vector.broadcast %63 : vector<1x8x1xf32> to vector<1x8x8xf32>
      %65 = arith.subf %61, %64 : vector<1x8x8xf32>
      %66 = math.exp %65 : vector<1x8x8xf32>
      %cst_40 = arith.constant dense<0.000000e+00> : vector<1x8xf32>
      %67 = vector.multi_reduction <add>, %66, %cst_40 [2] : vector<1x8x8xf32> to vector<1x8xf32>
      %68 = vector.shape_cast %67 : vector<1x8xf32> to vector<1x8x1xf32>
      "tpu.trace_start"() <{level = 10 : i32, message = "bqk,bkd->bqd"}> : () -> ()
      %cst_41 = arith.constant dense<0.000000e+00> : vector<1x8x8xf32>
      %69 = tpu.matmul %66, %60, %cst_41 {dimension_numbers = #tpu.dot_dimension_numbers<[2], [1], [1], [2], [0, 0, 0, 1, 1, 2], [0], [0]>} : vector<1x8x8xf32>, vector<1x8x8xf32>, vector<1x8x8xf32> -> vector<1x8x8xf32>
      "tpu.trace_stop"() : () -> ()
      %70 = tpu.reciprocal %68 : vector<1x8x1xf32> -> vector<1x8x1xf32>
      %71 = vector.broadcast %70 : vector<1x8x1xf32> to vector<1x8x8xf32>
      %72 = arith.mulf %69, %71 : vector<1x8x8xf32>
      %73 = vector.shape_cast %72 : vector<1x8x8xf32> to vector<8x8xf32>
      %74 = vector.extract_strided_slice %25 {offsets = [0, 16], sizes = [8, 8], strides = [1, 1]} : vector<8x32xf32> to vector<8x8xf32>
      %75 = vector.shape_cast %74 : vector<8x8xf32> to vector<1x8x8xf32>
      %76 = vector.extract_strided_slice %30 {offsets = [0, 16], sizes = [8, 8], strides = [1, 1]} : vector<8x32xf32> to vector<8x8xf32>
      %77 = vector.shape_cast %76 : vector<8x8xf32> to vector<1x8x8xf32>
      %78 = vector.extract_strided_slice %35 {offsets = [0, 16], sizes = [8, 8], strides = [1, 1]} : vector<8x32xf32> to vector<8x8xf32>
      %79 = vector.shape_cast %78 : vector<8x8xf32> to vector<1x8x8xf32>
      "tpu.trace_start"() <{level = 10 : i32, message = "bqd,bkd->bqk"}> : () -> ()
      %cst_42 = arith.constant dense<0.000000e+00> : vector<1x8x8xf32>
      %80 = tpu.matmul %75, %77, %cst_42 {dimension_numbers = #tpu.dot_dimension_numbers<[2], [2], [1], [1], [0, 0, 0, 1, 1, 1], [0], [0]>} : vector<1x8x8xf32>, vector<1x8x8xf32>, vector<1x8x8xf32> -> vector<1x8x8xf32>
      "tpu.trace_stop"() : () -> ()
      %cst_43 = arith.constant dense<0xFF800000> : vector<1x8xf32>
      %81 = vector.multi_reduction <maximumf>, %80, %cst_43 [2] : vector<1x8x8xf32> to vector<1x8xf32>
      %82 = vector.shape_cast %81 : vector<1x8xf32> to vector<1x8x1xf32>
      %83 = vector.broadcast %82 : vector<1x8x1xf32> to vector<1x8x8xf32>
      %84 = arith.subf %80, %83 : vector<1x8x8xf32>
      %85 = math.exp %84 : vector<1x8x8xf32>
      %cst_44 = arith.constant dense<0.000000e+00> : vector<1x8xf32>
      %86 = vector.multi_reduction <add>, %85, %cst_44 [2] : vector<1x8x8xf32> to vector<1x8xf32>
      %87 = vector.shape_cast %86 : vector<1x8xf32> to vector<1x8x1xf32>
      "tpu.trace_start"() <{level = 10 : i32, message = "bqk,bkd->bqd"}> : () -> ()
      %cst_45 = arith.constant dense<0.000000e+00> : vector<1x8x8xf32>
      %88 = tpu.matmul %85, %79, %cst_45 {dimension_numbers = #tpu.dot_dimension_numbers<[2], [1], [1], [2], [0, 0, 0, 1, 1, 2], [0], [0]>} : vector<1x8x8xf32>, vector<1x8x8xf32>, vector<1x8x8xf32> -> vector<1x8x8xf32>
      "tpu.trace_stop"() : () -> ()
      %89 = tpu.reciprocal %87 : vector<1x8x1xf32> -> vector<1x8x1xf32>
      %90 = vector.broadcast %89 : vector<1x8x1xf32> to vector<1x8x8xf32>
      %91 = arith.mulf %88, %90 : vector<1x8x8xf32>
      %92 = vector.shape_cast %91 : vector<1x8x8xf32> to vector<8x8xf32>
      %93 = vector.extract_strided_slice %25 {offsets = [0, 24], sizes = [8, 8], strides = [1, 1]} : vector<8x32xf32> to vector<8x8xf32>
      %94 = vector.shape_cast %93 : vector<8x8xf32> to vector<1x8x8xf32>
      %95 = vector.extract_strided_slice %30 {offsets = [0, 24], sizes = [8, 8], strides = [1, 1]} : vector<8x32xf32> to vector<8x8xf32>
      %96 = vector.shape_cast %95 : vector<8x8xf32> to vector<1x8x8xf32>
      %97 = vector.extract_strided_slice %35 {offsets = [0, 24], sizes = [8, 8], strides = [1, 1]} : vector<8x32xf32> to vector<8x8xf32>
      %98 = vector.shape_cast %97 : vector<8x8xf32> to vector<1x8x8xf32>
      "tpu.trace_start"() <{level = 10 : i32, message = "bqd,bkd->bqk"}> : () -> ()
      %cst_46 = arith.constant dense<0.000000e+00> : vector<1x8x8xf32>
      %99 = tpu.matmul %94, %96, %cst_46 {dimension_numbers = #tpu.dot_dimension_numbers<[2], [2], [1], [1], [0, 0, 0, 1, 1, 1], [0], [0]>} : vector<1x8x8xf32>, vector<1x8x8xf32>, vector<1x8x8xf32> -> vector<1x8x8xf32>
      "tpu.trace_stop"() : () -> ()
      %cst_47 = arith.constant dense<0xFF800000> : vector<1x8xf32>
      %100 = vector.multi_reduction <maximumf>, %99, %cst_47 [2] : vector<1x8x8xf32> to vector<1x8xf32>
      %101 = vector.shape_cast %100 : vector<1x8xf32> to vector<1x8x1xf32>
      %102 = vector.broadcast %101 : vector<1x8x1xf32> to vector<1x8x8xf32>
      %103 = arith.subf %99, %102 : vector<1x8x8xf32>
      %104 = math.exp %103 : vector<1x8x8xf32>
      %cst_48 = arith.constant dense<0.000000e+00> : vector<1x8xf32>
      %105 = vector.multi_reduction <add>, %104, %cst_48 [2] : vector<1x8x8xf32> to vector<1x8xf32>
      %106 = vector.shape_cast %105 : vector<1x8xf32> to vector<1x8x1xf32>
      "tpu.trace_start"() <{level = 10 : i32, message = "bqk,bkd->bqd"}> : () -> ()
      %cst_49 = arith.constant dense<0.000000e+00> : vector<1x8x8xf32>
      %107 = tpu.matmul %104, %98, %cst_49 {dimension_numbers = #tpu.dot_dimension_numbers<[2], [1], [1], [2], [0, 0, 0, 1, 1, 2], [0], [0]>} : vector<1x8x8xf32>, vector<1x8x8xf32>, vector<1x8x8xf32> -> vector<1x8x8xf32>
      "tpu.trace_stop"() : () -> ()
      %108 = tpu.reciprocal %106 : vector<1x8x1xf32> -> vector<1x8x1xf32>
      %109 = vector.broadcast %108 : vector<1x8x1xf32> to vector<1x8x8xf32>
      %110 = arith.mulf %107, %109 : vector<1x8x8xf32>
      %111 = vector.shape_cast %110 : vector<1x8x8xf32> to vector<8x8xf32>
      %112 = tpu.concatenate %54, %73, %92, %111 in 1 : vector<8x8xf32>, vector<8x8xf32>, vector<8x8xf32>, vector<8x8xf32> -> vector<8x32xf32>
      %c0_50 = arith.constant 0 : index
      %c0_51 = arith.constant 0 : index
      %113 = vector.load %arg6[%c0_50, %c0_51] : memref<32x32xf32, #tpu.memory_space<vmem>>, vector<32x32xf32>
      %cst_52 = arith.constant dense<0.000000e+00> : vector<8x32xf32>
      %114 = tpu.matmul %112, %113, %cst_52 {dimension_numbers = #tpu.dot_dimension_numbers<[1], [0], [0], [1], [0, 0, 1, 1], [], []>} : vector<8x32xf32>, vector<32x32xf32>, vector<8x32xf32> -> vector<8x32xf32>
      %c0_53 = arith.constant 0 : index
      %c0_54 = arith.constant 0 : index
      %115 = vector.load %arg10[%c0_53, %c0_54] : memref<1x32xf32, #tpu.memory_space<vmem>>, vector<1x32xf32>
      %116 = vector.broadcast %115 : vector<1x32xf32> to vector<8x32xf32>
      %117 = arith.addf %114, %116 : vector<8x32xf32>
      %118 = arith.addf %117, %20 : vector<8x32xf32>
      %c0_55 = arith.constant 0 : index
      %c0_56 = arith.constant 0 : index
      %119 = vector.load %arg15[%c0_55, %c0_56] : memref<1x32xf32, #tpu.memory_space<vmem>>, vector<1x32xf32>
      %c0_57 = arith.constant 0 : index
      %c0_58 = arith.constant 0 : index
      %120 = vector.load %arg16[%c0_57, %c0_58] : memref<1x32xf32, #tpu.memory_space<vmem>>, vector<1x32xf32>
      %cst_59 = arith.constant dense<0.000000e+00> : vector<8xf32>
      %121 = vector.multi_reduction <add>, %118, %cst_59 [1] : vector<8x32xf32> to vector<8xf32>
      %122 = vector.shape_cast %121 : vector<8xf32> to vector<8x1xf32>
      %cst_60 = arith.constant 3.200000e+01 : f32
      %123 = vector.broadcast %cst_60 : f32 to vector<8x1xf32>
      %124 = arith.divf %122, %123 : vector<8x1xf32>
      %125 = vector.broadcast %124 : vector<8x1xf32> to vector<8x32xf32>
      %126 = arith.subf %118, %125 : vector<8x32xf32>
      %127 = arith.mulf %126, %126 : vector<8x32xf32>
      %cst_61 = arith.constant dense<0.000000e+00> : vector<8xf32>
      %128 = vector.multi_reduction <add>, %127, %cst_61 [1] : vector<8x32xf32> to vector<8xf32>
      %129 = vector.shape_cast %128 : vector<8xf32> to vector<8x1xf32>
      %cst_62 = arith.constant 0.0322580636 : f32
      %130 = vector.broadcast %cst_62 : f32 to vector<8x1xf32>
      %131 = arith.mulf %129, %130 : vector<8x1xf32>
      %132 = math.sqrt %131 : vector<8x1xf32>
      %cst_63 = arith.constant 9.99999997E-7 : f32
      %133 = vector.broadcast %cst_63 : f32 to vector<8x1xf32>
      %134 = arith.addf %132, %133 : vector<8x1xf32>
      %135 = tpu.reciprocal %134 : vector<8x1xf32> -> vector<8x1xf32>
      %136 = vector.broadcast %119 : vector<1x32xf32> to vector<8x32xf32>
      %137 = arith.mulf %136, %126 : vector<8x32xf32>
      %138 = vector.broadcast %135 : vector<8x1xf32> to vector<8x32xf32>
      %139 = arith.mulf %137, %138 : vector<8x32xf32>
      %140 = vector.broadcast %120 : vector<1x32xf32> to vector<8x32xf32>
      %141 = arith.addf %139, %140 : vector<8x32xf32>
      %c0_64 = arith.constant 0 : index
      %c0_65 = arith.constant 0 : index
      %142 = vector.load %arg20[%c0_64, %c0_65] : memref<8x32xf32, #tpu.memory_space<vmem>>, vector<8x32xf32>
      tpu.vector_store %arg20[%c0_64, %c0_65], %141 {strides = array<i32>} : memref<8x32xf32, #tpu.memory_space<vmem>>, vector<8x32xf32>,
      %cst_66 = arith.constant 0.000000e+00 : f32
      %143 = vector.broadcast %cst_66 : f32 to vector<8x32xf32>
      %c0_67 = arith.constant 0 : index
      %c0_68 = arith.constant 0 : index
      %144 = vector.load %arg21[%c0_67, %c0_68] : memref<8x32xf32, #tpu.memory_space<vmem>>, vector<8x32xf32>
      tpu.vector_store %arg21[%c0_67, %c0_68], %143 {strides = array<i32>} : memref<8x32xf32, #tpu.memory_space<vmem>>, vector<8x32xf32>,
    } else {
    }
    %c0 = arith.constant 0 : index
    %c0_1 = arith.constant 0 : index
    %3 = vector.load %arg20[%c0, %c0_1] : memref<8x32xf32, #tpu.memory_space<vmem>>, vector<8x32xf32>
    %c0_2 = arith.constant 0 : index
    %c0_3 = arith.constant 0 : index
    %4 = vector.load %arg11[%c0_2, %c0_3] : memref<32x128xf32, #tpu.memory_space<vmem>>, vector<32x128xf32>
    %cst = arith.constant dense<0.000000e+00> : vector<8x128xf32>
    %5 = tpu.matmul %3, %4, %cst {dimension_numbers = #tpu.dot_dimension_numbers<[1], [0], [0], [1], [0, 0, 1, 1], [], []>} : vector<8x32xf32>, vector<32x128xf32>, vector<8x128xf32> -> vector<8x128xf32>
    %c0_4 = arith.constant 0 : index
    %c0_5 = arith.constant 0 : index
    %6 = vector.load %arg12[%c0_4, %c0_5] : memref<1x128xf32, #tpu.memory_space<vmem>>, vector<1x128xf32>
    %7 = vector.broadcast %6 : vector<1x128xf32> to vector<8x128xf32>
    %8 = arith.addf %5, %7 : vector<8x128xf32>
    %cst_6 = arith.constant 0.000000e+00 : f32
    %9 = vector.broadcast %cst_6 : f32 to vector<8x128xf32>
    %10 = arith.maximumf %8, %9 : vector<8x128xf32>
    %c0_7 = arith.constant 0 : index
    %c0_8 = arith.constant 0 : index
    %11 = vector.load %arg21[%c0_7, %c0_8] : memref<8x32xf32, #tpu.memory_space<vmem>>, vector<8x32xf32>
    %c0_9 = arith.constant 0 : index
    %c0_10 = arith.constant 0 : index
    %12 = vector.load %arg13[%c0_9, %c0_10] : memref<128x32xf32, #tpu.memory_space<vmem>>, vector<128x32xf32>
    %cst_11 = arith.constant dense<0.000000e+00> : vector<8x32xf32>
    %13 = tpu.matmul %10, %12, %cst_11 {dimension_numbers = #tpu.dot_dimension_numbers<[1], [0], [0], [1], [0, 0, 1, 1], [], []>} : vector<8x128xf32>, vector<128x32xf32>, vector<8x32xf32> -> vector<8x32xf32>
    %14 = arith.addf %11, %13 : vector<8x32xf32>
    %c0_12 = arith.constant 0 : index
    %c0_13 = arith.constant 0 : index
    %15 = vector.load %arg21[%c0_12, %c0_13] : memref<8x32xf32, #tpu.memory_space<vmem>>, vector<8x32xf32>
    tpu.vector_store %arg21[%c0_12, %c0_13], %14 {strides = array<i32>} : memref<8x32xf32, #tpu.memory_space<vmem>>, vector<8x32xf32>,
    %c0_i32_14 = arith.constant 0 : i32
    %16 = arith.cmpi eq, %arg1, %c0_i32_14 : i32
    %17 = arith.extui %16 : i1 to i32
    %c0_i32_15 = arith.constant 0 : i32
    %18 = arith.cmpi ne, %17, %c0_i32_15 : i32
    scf.if %18 {
      %c0_16 = arith.constant 0 : index
      %c0_17 = arith.constant 0 : index
      %19 = vector.load %arg21[%c0_16, %c0_17] : memref<8x32xf32, #tpu.memory_space<vmem>>, vector<8x32xf32>
      %c0_18 = arith.constant 0 : index
      %c0_19 = arith.constant 0 : index
      %20 = vector.load %arg14[%c0_18, %c0_19] : memref<1x32xf32, #tpu.memory_space<vmem>>, vector<1x32xf32>
      %21 = vector.broadcast %20 : vector<1x32xf32> to vector<8x32xf32>
      %22 = arith.addf %19, %21 : vector<8x32xf32>
      %c0_20 = arith.constant 0 : index
      %c0_21 = arith.constant 0 : index
      %23 = vector.load %arg20[%c0_20, %c0_21] : memref<8x32xf32, #tpu.memory_space<vmem>>, vector<8x32xf32>
      %24 = arith.addf %22, %23 : vector<8x32xf32>
      %c0_22 = arith.constant 0 : index
      %c0_23 = arith.constant 0 : index
      %25 = vector.load %arg17[%c0_22, %c0_23] : memref<1x32xf32, #tpu.memory_space<vmem>>, vector<1x32xf32>
      %c0_24 = arith.constant 0 : index
      %c0_25 = arith.constant 0 : index
      %26 = vector.load %arg18[%c0_24, %c0_25] : memref<1x32xf32, #tpu.memory_space<vmem>>, vector<1x32xf32>
      %cst_26 = arith.constant dense<0.000000e+00> : vector<8xf32>
      %27 = vector.multi_reduction <add>, %24, %cst_26 [1] : vector<8x32xf32> to vector<8xf32>
      %28 = vector.shape_cast %27 : vector<8xf32> to vector<8x1xf32>
      %cst_27 = arith.constant 3.200000e+01 : f32
      %29 = vector.broadcast %cst_27 : f32 to vector<8x1xf32>
      %30 = arith.divf %28, %29 : vector<8x1xf32>
      %31 = vector.broadcast %30 : vector<8x1xf32> to vector<8x32xf32>
      %32 = arith.subf %24, %31 : vector<8x32xf32>
      %33 = arith.mulf %32, %32 : vector<8x32xf32>
      %cst_28 = arith.constant dense<0.000000e+00> : vector<8xf32>
      %34 = vector.multi_reduction <add>, %33, %cst_28 [1] : vector<8x32xf32> to vector<8xf32>
      %35 = vector.shape_cast %34 : vector<8xf32> to vector<8x1xf32>
      %cst_29 = arith.constant 0.0322580636 : f32
      %36 = vector.broadcast %cst_29 : f32 to vector<8x1xf32>
      %37 = arith.mulf %35, %36 : vector<8x1xf32>
      %38 = math.sqrt %37 : vector<8x1xf32>
      %cst_30 = arith.constant 9.99999997E-7 : f32
      %39 = vector.broadcast %cst_30 : f32 to vector<8x1xf32>
      %40 = arith.addf %38, %39 : vector<8x1xf32>
      %41 = tpu.reciprocal %40 : vector<8x1xf32> -> vector<8x1xf32>
      %42 = vector.broadcast %25 : vector<1x32xf32> to vector<8x32xf32>
      %43 = arith.mulf %42, %32 : vector<8x32xf32>
      %44 = vector.broadcast %41 : vector<8x1xf32> to vector<8x32xf32>
      %45 = arith.mulf %43, %44 : vector<8x32xf32>
      %46 = vector.broadcast %26 : vector<1x32xf32> to vector<8x32xf32>
      %47 = arith.addf %45, %46 : vector<8x32xf32>
      %48 = vector.shape_cast %47 : vector<8x32xf32> to vector<1x8x32xf32>
      %c0_31 = arith.constant 0 : index
      %c0_32 = arith.constant 0 : index
      %c0_33 = arith.constant 0 : index
      %49 = vector.load %arg19[%c0_31, %c0_32, %c0_33] : memref<1x8x32xf32, #tpu.memory_space<vmem>>, vector<1x8x32xf32>
      tpu.vector_store %arg19[%c0_31, %c0_32, %c0_33], %48 {strides = array<i32>} : memref<1x8x32xf32, #tpu.memory_space<vmem>>, vector<1x8x32xf32>,
    } else {
    }
    return
  }
  func.func @transform_0(%arg0: i32, %arg1: i32) -> (i32, i32, i32) {
    %c0_i32 = arith.constant 0 : i32
    %c0_i32_0 = arith.constant 0 : i32
    %c0_i32_1 = arith.constant 0 : i32
    return %arg0, %c0_i32, %c0_i32_0 : i32, i32, i32
  }
  func.func @transform_1(%arg0: i32, %arg1: i32) -> (i32, i32) {
    %c0_i32 = arith.constant 0 : i32
    %c0_i32_0 = arith.constant 0 : i32
    %c0_i32_1 = arith.constant 0 : i32
    return %c0_i32, %c0_i32_0 : i32, i32
  }
  func.func @transform_2(%arg0: i32, %arg1: i32) -> (i32, i32) {
    %c0_i32 = arith.constant 0 : i32
    %c0_i32_0 = arith.constant 0 : i32
    %c0_i32_1 = arith.constant 0 : i32
    return %c0_i32, %c0_i32_0 : i32, i32
  }
  func.func @transform_3(%arg0: i32, %arg1: i32) -> (i32, i32) {
    %c0_i32 = arith.constant 0 : i32
    %c0_i32_0 = arith.constant 0 : i32
    %c0_i32_1 = arith.constant 0 : i32
    return %c0_i32, %c0_i32_0 : i32, i32
  }
  func.func @transform_4(%arg0: i32, %arg1: i32) -> (i32, i32) {
    %c0_i32 = arith.constant 0 : i32
    %c0_i32_0 = arith.constant 0 : i32
    %c0_i32_1 = arith.constant 0 : i32
    return %c0_i32, %c0_i32_0 : i32, i32
  }
  func.func @transform_5(%arg0: i32, %arg1: i32) -> (i32, i32) {
    %c0_i32 = arith.constant 0 : i32
    %c0_i32_0 = arith.constant 0 : i32
    %c0_i32_1 = arith.constant 0 : i32
    return %c0_i32, %c0_i32_0 : i32, i32
  }
  func.func @transform_6(%arg0: i32, %arg1: i32) -> (i32, i32) {
    %c0_i32 = arith.constant 0 : i32
    %c0_i32_0 = arith.constant 0 : i32
    %c0_i32_1 = arith.constant 0 : i32
    return %c0_i32, %c0_i32_0 : i32, i32
  }
  func.func @transform_7(%arg0: i32, %arg1: i32) -> (i32, i32) {
    %c0_i32 = arith.constant 0 : i32
    %c0_i32_0 = arith.constant 0 : i32
    %c0_i32_1 = arith.constant 0 : i32
    return %c0_i32, %c0_i32_0 : i32, i32
  }
  func.func @transform_8(%arg0: i32, %arg1: i32) -> (i32, i32) {
    %c0_i32 = arith.constant 0 : i32
    %c0_i32_0 = arith.constant 0 : i32
    %c0_i32_1 = arith.constant 0 : i32
    return %c0_i32, %c0_i32_0 : i32, i32
  }
  func.func @transform_9(%arg0: i32, %arg1: i32) -> (i32, i32) {
    %c0_i32 = arith.constant 0 : i32
    %c0_i32_0 = arith.constant 0 : i32
    return %c0_i32, %arg1 : i32, i32
  }
  func.func @transform_10(%arg0: i32, %arg1: i32) -> (i32, i32) {
    %c0_i32 = arith.constant 0 : i32
    %c0_i32_0 = arith.constant 0 : i32
    return %c0_i32, %arg1 : i32, i32
  }
  func.func @transform_11(%arg0: i32, %arg1: i32) -> (i32, i32) {
    %c0_i32 = arith.constant 0 : i32
    %c0_i32_0 = arith.constant 0 : i32
    return %arg1, %c0_i32 : i32, i32
  }
  func.func @transform_12(%arg0: i32, %arg1: i32) -> (i32, i32) {
    %c0_i32 = arith.constant 0 : i32
    %c0_i32_0 = arith.constant 0 : i32
    %c0_i32_1 = arith.constant 0 : i32
    return %c0_i32, %c0_i32_0 : i32, i32
  }
  func.func @transform_13(%arg0: i32, %arg1: i32) -> (i32, i32) {
    %c0_i32 = arith.constant 0 : i32
    %c0_i32_0 = arith.constant 0 : i32
    %c0_i32_1 = arith.constant 0 : i32
    return %c0_i32, %c0_i32_0 : i32, i32
  }
  func.func @transform_14(%arg0: i32, %arg1: i32) -> (i32, i32) {
    %c0_i32 = arith.constant 0 : i32
    %c0_i32_0 = arith.constant 0 : i32
    %c0_i32_1 = arith.constant 0 : i32
    return %c0_i32, %c0_i32_0 : i32, i32
  }
  func.func @transform_15(%arg0: i32, %arg1: i32) -> (i32, i32) {
    %c0_i32 = arith.constant 0 : i32
    %c0_i32_0 = arith.constant 0 : i32
    %c0_i32_1 = arith.constant 0 : i32
    return %c0_i32, %c0_i32_0 : i32, i32
  }
  func.func @transform_16(%arg0: i32, %arg1: i32) -> (i32, i32) {
    %c0_i32 = arith.constant 0 : i32
    %c0_i32_0 = arith.constant 0 : i32
    %c0_i32_1 = arith.constant 0 : i32
    return %c0_i32, %c0_i32_0 : i32, i32
  }
  func.func @transform_17(%arg0: i32, %arg1: i32) -> (i32, i32, i32) {
    %c0_i32 = arith.constant 0 : i32
    %c0_i32_0 = arith.constant 0 : i32
    %c0_i32_1 = arith.constant 0 : i32
    return %arg0, %c0_i32, %c0_i32_0 : i32, i32, i32
  }
}

module attributes {stable_mosaic.version = 11 : i64} {
  func.func @_encoder_kernel(%arg0: i32, %arg1: i32, %arg2: memref<1x8x32xf32, #tpu.memory_space<vmem>>, %arg3: memref<32x32xf32, #tpu.memory_space<vmem>>, %arg4: memref<32x32xf32, #tpu.memory_space<vmem>>, %arg5: memref<32x32xf32, #tpu.memory_space<vmem>>, %arg6: memref<32x32xf32, #tpu.memory_space<vmem>>, %arg7: memref<1x32xf32, #tpu.memory_space<vmem>>, %arg8: memref<1x32xf32, #tpu.memory_space<vmem>>, %arg9: memref<1x32xf32, #tpu.memory_space<vmem>>, %arg10: memref<1x32xf32, #tpu.memory_space<vmem>>, %arg11: memref<32x128xf32, #tpu.memory_space<vmem>>, %arg12: memref<1x128xf32, #tpu.memory_space<vmem>>, %arg13: memref<128x32xf32, #tpu.memory_space<vmem>>, %arg14: memref<1x32xf32, #tpu.memory_space<vmem>>, %arg15: memref<1x32xf32, #tpu.memory_space<vmem>>, %arg16: memref<1x32xf32, #tpu.memory_space<vmem>>, %arg17: memref<1x32xf32, #tpu.memory_space<vmem>>, %arg18: memref<1x32xf32, #tpu.memory_space<vmem>>, %arg19: memref<1x8x32xf32, #tpu.memory_space<vmem>>, %arg20: memref<8x32xf32, #tpu.memory_space<vmem>>, %arg21: memref<8x32xf32, #tpu.memory_space<vmem>>) attributes {dimension_semantics = [#tpu.dimension_semantics<parallel>, #tpu.dimension_semantics<arbitrary>], iteration_bounds = array<i64: 2, 1>, scalar_prefetch = 0 : i64, scratch_operands = 2 : i64, tpu.core_type = #tpu.core_type<tc>, window_params = [{transform_indices = @transform_0, window_bounds = array<i64: 1, 8, 32>}, {pipeline_mode = #tpu.pipeline_mode<synchronous>, transform_indices = @transform_1, window_bounds = array<i64: 32, 32>}, {pipeline_mode = #tpu.pipeline_mode<synchronous>, transform_indices = @transform_2, window_bounds = array<i64: 32, 32>}, {pipeline_mode = #tpu.pipeline_mode<synchronous>, transform_indices = @transform_3, window_bounds = array<i64: 32, 32>}, {pipeline_mode = #tpu.pipeline_mode<synchronous>, transform_indices = @transform_4, window_bounds = array<i64: 32, 32>}, {pipeline_mode = #tpu.pipeline_mode<synchronous>, transform_indices = @transform_5, window_bounds = array<i64: 1, 32>}, {pipeline_mode = #tpu.pipeline_mode<synchronous>, transform_indices = @transform_6, window_bounds = array<i64: 1, 32>}, {pipeline_mode = #tpu.pipeline_mode<synchronous>, transform_indices = @transform_7, window_bounds = array<i64: 1, 32>}, {pipeline_mode = #tpu.pipeline_mode<synchronous>, transform_indices = @transform_8, window_bounds = array<i64: 1, 32>}, {transform_indices = @transform_9, window_bounds = array<i64: 32, 128>}, {transform_indices = @transform_10, window_bounds = array<i64: 1, 128>}, {transform_indices = @transform_11, window_bounds = array<i64: 128, 32>}, {pipeline_mode = #tpu.pipeline_mode<synchronous>, transform_indices = @transform_12, window_bounds = array<i64: 1, 32>}, {pipeline_mode = #tpu.pipeline_mode<synchronous>, transform_indices = @transform_13, window_bounds = array<i64: 1, 32>}, {pipeline_mode = #tpu.pipeline_mode<synchronous>, transform_indices = @transform_14, window_bounds = array<i64: 1, 32>}, {pipeline_mode = #tpu.pipeline_mode<synchronous>, transform_indices = @transform_15, window_bounds = array<i64: 1, 32>}, {pipeline_mode = #tpu.pipeline_mode<synchronous>, transform_indices = @transform_16, window_bounds = array<i64: 1, 32>}, {transform_indices = @transform_17, window_bounds = array<i64: 1, 8, 32>}]} {
    %c0_i32 = arith.constant 0 : i32
    %0 = arith.cmpi eq, %arg1, %c0_i32 : i32
    %1 = arith.extui %0 : i1 to i32
    %c0_i32_0 = arith.constant 0 : i32
    %2 = arith.cmpi ne, %1, %c0_i32_0 : i32
    scf.if %2 {
      %c0_16 = arith.constant 0 : index
      %c0_17 = arith.constant 0 : index
      %c0_18 = arith.constant 0 : index
      %19 = vector.load %arg2[%c0_16, %c0_17, %c0_18] : memref<1x8x32xf32, #tpu.memory_space<vmem>>, vector<1x8x32xf32>
      %20 = vector.shape_cast %19 : vector<1x8x32xf32> to vector<8x32xf32>
      %c0_19 = arith.constant 0 : index
      %c0_20 = arith.constant 0 : index
      %21 = vector.load %arg3[%c0_19, %c0_20] : memref<32x32xf32, #tpu.memory_space<vmem>>, vector<32x32xf32>
      %cst_21 = arith.constant dense<0.000000e+00> : vector<8x32xf32>
      %22 = tpu.matmul %20, %21, %cst_21 {dimension_numbers = #tpu.dot_dimension_numbers<[1], [0], [0], [1], [0, 0, 1, 1], [], []>} : vector<8x32xf32>, vector<32x32xf32>, vector<8x32xf32> -> vector<8x32xf32>
      %c0_22 = arith.constant 0 : index
      %c0_23 = arith.constant 0 : index
      %23 = vector.load %arg7[%c0_22, %c0_23] : memref<1x32xf32, #tpu.memory_space<vmem>>, vector<1x32xf32>
      %24 = vector.broadcast %23 : vector<1x32xf32> to vector<8x32xf32>
      %25 = arith.addf %22, %24 : vector<8x32xf32>
      %c0_24 = arith.constant 0 : index
      %c0_25 = arith.constant 0 : index
      %26 = vector.load %arg4[%c0_24, %c0_25] : memref<32x32xf32, #tpu.memory_space<vmem>>, vector<32x32xf32>
      %cst_26 = arith.constant dense<0.000000e+00> : vector<8x32xf32>
      %27 = tpu.matmul %20, %26, %cst_26 {dimension_numbers = #tpu.dot_dimension_numbers<[1], [0], [0], [1], [0, 0, 1, 1], [], []>} : vector<8x32xf32>, vector<32x32xf32>, vector<8x32xf32> -> vector<8x32xf32>
      %c0_27 = arith.constant 0 : index
      %c0_28 = arith.constant 0 : index
      %28 = vector.load %arg8[%c0_27, %c0_28] : memref<1x32xf32, #tpu.memory_space<vmem>>, vector<1x32xf32>
      %29 = vector.broadcast %28 : vector<1x32xf32> to vector<8x32xf32>
      %30 = arith.addf %27, %29 : vector<8x32xf32>
      %c0_29 = arith.constant 0 : index
      %c0_30 = arith.constant 0 : index
      %31 = vector.load %arg5[%c0_29, %c0_30] : memref<32x32xf32, #tpu.memory_space<vmem>>, vector<32x32xf32>
      %cst_31 = arith.constant dense<0.000000e+00> : vector<8x32xf32>
      %32 = tpu.matmul %20, %31, %cst_31 {dimension_numbers = #tpu.dot_dimension_numbers<[1], [0], [0], [1], [0, 0, 1, 1], [], []>} : vector<8x32xf32>, vector<32x32xf32>, vector<8x32xf32> -> vector<8x32xf32>
      %c0_32 = arith.constant 0 : index
      %c0_33 = arith.constant 0 : index
      %33 = vector.load %arg9[%c0_32, %c0_33] : memref<1x32xf32, #tpu.memory_space<vmem>>, vector<1x32xf32>
      %34 = vector.broadcast %33 : vector<1x32xf32> to vector<8x32xf32>
      %35 = arith.addf %32, %34 : vector<8x32xf32>
      %36 = vector.extract_strided_slice %25 {offsets = [0, 0], sizes = [8, 8], strides = [1, 1]} : vector<8x32xf32> to vector<8x8xf32>
      %37 = vector.shape_cast %36 : vector<8x8xf32> to vector<1x8x8xf32>
      %38 = vector.extract_strided_slice %30 {offsets = [0, 0], sizes = [8, 8], strides = [1, 1]} : vector<8x32xf32> to vector<8x8xf32>
      %39 = vector.shape_cast %38 : vector<8x8xf32> to vector<1x8x8xf32>
      %40 = vector.extract_strided_slice %35 {offsets = [0, 0], sizes = [8, 8], strides = [1, 1]} : vector<8x32xf32> to vector<8x8xf32>
      %41 = vector.shape_cast %40 : vector<8x8xf32> to vector<1x8x8xf32>
      "tpu.trace_start"() <{level = 10 : i32, message = "bqd,bkd->bqk"}> : () -> ()
      %cst_34 = arith.constant dense<0.000000e+00> : vector<1x8x8xf32>
      %42 = tpu.matmul %37, %39, %cst_34 {dimension_numbers = #tpu.dot_dimension_numbers<[2], [2], [1], [1], [0, 0, 0, 1, 1, 1], [0], [0]>} : vector<1x8x8xf32>, vector<1x8x8xf32>, vector<1x8x8xf32> -> vector<1x8x8xf32>
      "tpu.trace_stop"() : () -> ()
      %cst_35 = arith.constant dense<0xFF800000> : vector<1x8xf32>
      %43 = vector.multi_reduction <maximumf>, %42, %cst_35 [2] : vector<1x8x8xf32> to vector<1x8xf32>
      %44 = vector.shape_cast %43 : vector<1x8xf32> to vector<1x8x1xf32>
      %45 = vector.broadcast %44 : vector<1x8x1xf32> to vector<1x8x8xf32>
      %46 = arith.subf %42, %45 : vector<1x8x8xf32>
      %47 = math.exp %46 : vector<1x8x8xf32>
      %cst_36 = arith.constant dense<0.000000e+00> : vector<1x8xf32>
      %48 = vector.multi_reduction <add>, %47, %cst_36 [2] : vector<1x8x8xf32> to vector<1x8xf32>
      %49 = vector.shape_cast %48 : vector<1x8xf32> to vector<1x8x1xf32>
      "tpu.trace_start"() <{level = 10 : i32, message = "bqk,bkd->bqd"}> : () -> ()
      %cst_37 = arith.constant dense<0.000000e+00> : vector<1x8x8xf32>
      %50 = tpu.matmul %47, %41, %cst_37 {dimension_numbers = #tpu.dot_dimension_numbers<[2], [1], [1], [2], [0, 0, 0, 1, 1, 2], [0], [0]>} : vector<1x8x8xf32>, vector<1x8x8xf32>, vector<1x8x8xf32> -> vector<1x8x8xf32>
      "tpu.trace_stop"() : () -> ()
      %51 = tpu.reciprocal %49 : vector<1x8x1xf32> -> vector<1x8x1xf32>
      %52 = vector.broadcast %51 : vector<1x8x1xf32> to vector<1x8x8xf32>
      %53 = arith.mulf %50, %52 : vector<1x8x8xf32>
      %54 = vector.shape_cast %53 : vector<1x8x8xf32> to vector<8x8xf32>
      %55 = vector.extract_strided_slice %25 {offsets = [0, 8], sizes = [8, 8], strides = [1, 1]} : vector<8x32xf32> to vector<8x8xf32>
      %56 = vector.shape_cast %55 : vector<8x8xf32> to vector<1x8x8xf32>
      %57 = vector.extract_strided_slice %30 {offsets = [0, 8], sizes = [8, 8], strides = [1, 1]} : vector<8x32xf32> to vector<8x8xf32>
      %58 = vector.shape_cast %57 : vector<8x8xf32> to vector<1x8x8xf32>
      %59 = vector.extract_strided_slice %35 {offsets = [0, 8], sizes = [8, 8], strides = [1, 1]} : vector<8x32xf32> to vector<8x8xf32>
      %60 = vector.shape_cast %59 : vector<8x8xf32> to vector<1x8x8xf32>
      "tpu.trace_start"() <{level = 10 : i32, message = "bqd,bkd->bqk"}> : () -> ()
      %cst_38 = arith.constant dense<0.000000e+00> : vector<1x8x8xf32>
      %61 = tpu.matmul %56, %58, %cst_38 {dimension_numbers = #tpu.dot_dimension_numbers<[2], [2], [1], [1], [0, 0, 0, 1, 1, 1], [0], [0]>} : vector<1x8x8xf32>, vector<1x8x8xf32>, vector<1x8x8xf32> -> vector<1x8x8xf32>
      "tpu.trace_stop"() : () -> ()
      %cst_39 = arith.constant dense<0xFF800000> : vector<1x8xf32>
      %62 = vector.multi_reduction <maximumf>, %61, %cst_39 [2] : vector<1x8x8xf32> to vector<1x8xf32>
      %63 = vector.shape_cast %62 : vector<1x8xf32> to vector<1x8x1xf32>
      %64 = vector.broadcast %63 : vector<1x8x1xf32> to vector<1x8x8xf32>
      %65 = arith.subf %61, %64 : vector<1x8x8xf32>
      %66 = math.exp %65 : vector<1x8x8xf32>
      %cst_40 = arith.constant dense<0.000000e+00> : vector<1x8xf32>
      %67 = vector.multi_reduction <add>, %66, %cst_40 [2] : vector<1x8x8xf32> to vector<1x8xf32>
      %68 = vector.shape_cast %67 : vector<1x8xf32> to vector<1x8x1xf32>
      "tpu.trace_start"() <{level = 10 : i32, message = "bqk,bkd->bqd"}> : () -> ()
      %cst_41 = arith.constant dense<0.000000e+00> : vector<1x8x8xf32>
      %69 = tpu.matmul %66, %60, %cst_41 {dimension_numbers = #tpu.dot_dimension_numbers<[2], [1], [1], [2], [0, 0, 0, 1, 1, 2], [0], [0]>} : vector<1x8x8xf32>, vector<1x8x8xf32>, vector<1x8x8xf32> -> vector<1x8x8xf32>
      "tpu.trace_stop"() : () -> ()
      %70 = tpu.reciprocal %68 : vector<1x8x1xf32> -> vector<1x8x1xf32>
      %71 = vector.broadcast %70 : vector<1x8x1xf32> to vector<1x8x8xf32>
      %72 = arith.mulf %69, %71 : vector<1x8x8xf32>
      %73 = vector.shape_cast %72 : vector<1x8x8xf32> to vector<8x8xf32>
      %74 = vector.extract_strided_slice %25 {offsets = [0, 16], sizes = [8, 8], strides = [1, 1]} : vector<8x32xf32> to vector<8x8xf32>
      %75 = vector.shape_cast %74 : vector<8x8xf32> to vector<1x8x8xf32>
      %76 = vector.extract_strided_slice %30 {offsets = [0, 16], sizes = [8, 8], strides = [1, 1]} : vector<8x32xf32> to vector<8x8xf32>
      %77 = vector.shape_cast %76 : vector<8x8xf32> to vector<1x8x8xf32>
      %78 = vector.extract_strided_slice %35 {offsets = [0, 16], sizes = [8, 8], strides = [1, 1]} : vector<8x32xf32> to vector<8x8xf32>
      %79 = vector.shape_cast %78 : vector<8x8xf32> to vector<1x8x8xf32>
      "tpu.trace_start"() <{level = 10 : i32, message = "bqd,bkd->bqk"}> : () -> ()
      %cst_42 = arith.constant dense<0.000000e+00> : vector<1x8x8xf32>
      %80 = tpu.matmul %75, %77, %cst_42 {dimension_numbers = #tpu.dot_dimension_numbers<[2], [2], [1], [1], [0, 0, 0, 1, 1, 1], [0], [0]>} : vector<1x8x8xf32>, vector<1x8x8xf32>, vector<1x8x8xf32> -> vector<1x8x8xf32>
      "tpu.trace_stop"() : () -> ()
      %cst_43 = arith.constant dense<0xFF800000> : vector<1x8xf32>
      %81 = vector.multi_reduction <maximumf>, %80, %cst_43 [2] : vector<1x8x8xf32> to vector<1x8xf32>
      %82 = vector.shape_cast %81 : vector<1x8xf32> to vector<1x8x1xf32>
      %83 = vector.broadcast %82 : vector<1x8x1xf32> to vector<1x8x8xf32>
      %84 = arith.subf %80, %83 : vector<1x8x8xf32>
      %85 = math.exp %84 : vector<1x8x8xf32>
      %cst_44 = arith.constant dense<0.000000e+00> : vector<1x8xf32>
      %86 = vector.multi_reduction <add>, %85, %cst_44 [2] : vector<1x8x8xf32> to vector<1x8xf32>
      %87 = vector.shape_cast %86 : vector<1x8xf32> to vector<1x8x1xf32>
      "tpu.trace_start"() <{level = 10 : i32, message = "bqk,bkd->bqd"}> : () -> ()
      %cst_45 = arith.constant dense<0.000000e+00> : vector<1x8x8xf32>
      %88 = tpu.matmul %85, %79, %cst_45 {dimension_numbers = #tpu.dot_dimension_numbers<[2], [1], [1], [2], [0, 0, 0, 1, 1, 2], [0], [0]>} : vector<1x8x8xf32>, vector<1x8x8xf32>, vector<1x8x8xf32> -> vector<1x8x8xf32>
      "tpu.trace_stop"() : () -> ()
      %89 = tpu.reciprocal %87 : vector<1x8x1xf32> -> vector<1x8x1xf32>
      %90 = vector.broadcast %89 : vector<1x8x1xf32> to vector<1x8x8xf32>
      %91 = arith.mulf %88, %90 : vector<1x8x8xf32>
      %92 = vector.shape_cast %91 : vector<1x8x8xf32> to vector<8x8xf32>
      %93 = vector.extract_strided_slice %25 {offsets = [0, 24], sizes = [8, 8], strides = [1, 1]} : vector<8x32xf32> to vector<8x8xf32>
      %94 = vector.shape_cast %93 : vector<8x8xf32> to vector<1x8x8xf32>
      %95 = vector.extract_strided_slice %30 {offsets = [0, 24], sizes = [8, 8], strides = [1, 1]} : vector<8x32xf32> to vector<8x8xf32>
      %96 = vector.shape_cast %95 : vector<8x8xf32> to vector<1x8x8xf32>
      %97 = vector.extract_strided_slice %35 {offsets = [0, 24], sizes = [8, 8], strides = [1, 1]} : vector<8x32xf32> to vector<8x8xf32>
      %98 = vector.shape_cast %97 : vector<8x8xf32> to vector<1x8x8xf32>
      "tpu.trace_start"() <{level = 10 : i32, message = "bqd,bkd->bqk"}> : () -> ()
      %cst_46 = arith.constant dense<0.000000e+00> : vector<1x8x8xf32>
      %99 = tpu.matmul %94, %96, %cst_46 {dimension_numbers = #tpu.dot_dimension_numbers<[2], [2], [1], [1], [0, 0, 0, 1, 1, 1], [0], [0]>} : vector<1x8x8xf32>, vector<1x8x8xf32>, vector<1x8x8xf32> -> vector<1x8x8xf32>
      "tpu.trace_stop"() : () -> ()
      %cst_47 = arith.constant dense<0xFF800000> : vector<1x8xf32>
      %100 = vector.multi_reduction <maximumf>, %99, %cst_47 [2] : vector<1x8x8xf32> to vector<1x8xf32>
      %101 = vector.shape_cast %100 : vector<1x8xf32> to vector<1x8x1xf32>
      %102 = vector.broadcast %101 : vector<1x8x1xf32> to vector<1x8x8xf32>
      %103 = arith.subf %99, %102 : vector<1x8x8xf32>
      %104 = math.exp %103 : vector<1x8x8xf32>
      %cst_48 = arith.constant dense<0.000000e+00> : vector<1x8xf32>
      %105 = vector.multi_reduction <add>, %104, %cst_48 [2] : vector<1x8x8xf32> to vector<1x8xf32>
      %106 = vector.shape_cast %105 : vector<1x8xf32> to vector<1x8x1xf32>
      "tpu.trace_start"() <{level = 10 : i32, message = "bqk,bkd->bqd"}> : () -> ()
      %cst_49 = arith.constant dense<0.000000e+00> : vector<1x8x8xf32>
      %107 = tpu.matmul %104, %98, %cst_49 {dimension_numbers = #tpu.dot_dimension_numbers<[2], [1], [1], [2], [0, 0, 0, 1, 1, 2], [0], [0]>} : vector<1x8x8xf32>, vector<1x8x8xf32>, vector<1x8x8xf32> -> vector<1x8x8xf32>
      "tpu.trace_stop"() : () -> ()
      %108 = tpu.reciprocal %106 : vector<1x8x1xf32> -> vector<1x8x1xf32>
      %109 = vector.broadcast %108 : vector<1x8x1xf32> to vector<1x8x8xf32>
      %110 = arith.mulf %107, %109 : vector<1x8x8xf32>
      %111 = vector.shape_cast %110 : vector<1x8x8xf32> to vector<8x8xf32>
      %112 = tpu.concatenate %54, %73, %92, %111 in 1 : vector<8x8xf32>, vector<8x8xf32>, vector<8x8xf32>, vector<8x8xf32> -> vector<8x32xf32>
      %c0_50 = arith.constant 0 : index
      %c0_51 = arith.constant 0 : index
      %113 = vector.load %arg6[%c0_50, %c0_51] : memref<32x32xf32, #tpu.memory_space<vmem>>, vector<32x32xf32>
      %cst_52 = arith.constant dense<0.000000e+00> : vector<8x32xf32>
      %114 = tpu.matmul %112, %113, %cst_52 {dimension_numbers = #tpu.dot_dimension_numbers<[1], [0], [0], [1], [0, 0, 1, 1], [], []>} : vector<8x32xf32>, vector<32x32xf32>, vector<8x32xf32> -> vector<8x32xf32>
      %c0_53 = arith.constant 0 : index
      %c0_54 = arith.constant 0 : index
      %115 = vector.load %arg10[%c0_53, %c0_54] : memref<1x32xf32, #tpu.memory_space<vmem>>, vector<1x32xf32>
      %116 = vector.broadcast %115 : vector<1x32xf32> to vector<8x32xf32>
      %117 = arith.addf %114, %116 : vector<8x32xf32>
      %118 = arith.addf %117, %20 : vector<8x32xf32>
      %c0_55 = arith.constant 0 : index
      %c0_56 = arith.constant 0 : index
      %119 = vector.load %arg15[%c0_55, %c0_56] : memref<1x32xf32, #tpu.memory_space<vmem>>, vector<1x32xf32>
      %c0_57 = arith.constant 0 : index
      %c0_58 = arith.constant 0 : index
      %120 = vector.load %arg16[%c0_57, %c0_58] : memref<1x32xf32, #tpu.memory_space<vmem>>, vector<1x32xf32>
      %cst_59 = arith.constant dense<0.000000e+00> : vector<8xf32>
      %121 = vector.multi_reduction <add>, %118, %cst_59 [1] : vector<8x32xf32> to vector<8xf32>
      %122 = vector.shape_cast %121 : vector<8xf32> to vector<8x1xf32>
      %cst_60 = arith.constant 3.200000e+01 : f32
      %123 = vector.broadcast %cst_60 : f32 to vector<8x1xf32>
      %124 = arith.divf %122, %123 : vector<8x1xf32>
      %125 = vector.broadcast %124 : vector<8x1xf32> to vector<8x32xf32>
      %126 = arith.subf %118, %125 : vector<8x32xf32>
      %127 = arith.mulf %126, %126 : vector<8x32xf32>
      %cst_61 = arith.constant dense<0.000000e+00> : vector<8xf32>
      %128 = vector.multi_reduction <add>, %127, %cst_61 [1] : vector<8x32xf32> to vector<8xf32>
      %129 = vector.shape_cast %128 : vector<8xf32> to vector<8x1xf32>
      %cst_62 = arith.constant 0.0322580636 : f32
      %130 = vector.broadcast %cst_62 : f32 to vector<8x1xf32>
      %131 = arith.mulf %129, %130 : vector<8x1xf32>
      %132 = math.sqrt %131 : vector<8x1xf32>
      %cst_63 = arith.constant 9.99999997E-7 : f32
      %133 = vector.broadcast %cst_63 : f32 to vector<8x1xf32>
      %134 = arith.addf %132, %133 : vector<8x1xf32>
      %135 = tpu.reciprocal %134 : vector<8x1xf32> -> vector<8x1xf32>
      %136 = vector.broadcast %119 : vector<1x32xf32> to vector<8x32xf32>
      %137 = arith.mulf %136, %126 : vector<8x32xf32>
      %138 = vector.broadcast %135 : vector<8x1xf32> to vector<8x32xf32>
      %139 = arith.mulf %137, %138 : vector<8x32xf32>
      %140 = vector.broadcast %120 : vector<1x32xf32> to vector<8x32xf32>
      %141 = arith.addf %139, %140 : vector<8x32xf32>
      %c0_64 = arith.constant 0 : index
      %c0_65 = arith.constant 0 : index
      %142 = vector.load %arg20[%c0_64, %c0_65] : memref<8x32xf32, #tpu.memory_space<vmem>>, vector<8x32xf32>
      tpu.vector_store %arg20[%c0_64, %c0_65], %141 {strides = array<i32>} : memref<8x32xf32, #tpu.memory_space<vmem>>, vector<8x32xf32>,
      %cst_66 = arith.constant 0.000000e+00 : f32
      %143 = vector.broadcast %cst_66 : f32 to vector<8x32xf32>
      %c0_67 = arith.constant 0 : index
      %c0_68 = arith.constant 0 : index
      %144 = vector.load %arg21[%c0_67, %c0_68] : memref<8x32xf32, #tpu.memory_space<vmem>>, vector<8x32xf32>
      tpu.vector_store %arg21[%c0_67, %c0_68], %143 {strides = array<i32>} : memref<8x32xf32, #tpu.memory_space<vmem>>, vector<8x32xf32>,
    } else {
    }
    %c0 = arith.constant 0 : index
    %c0_1 = arith.constant 0 : index
    %3 = vector.load %arg20[%c0, %c0_1] : memref<8x32xf32, #tpu.memory_space<vmem>>, vector<8x32xf32>
    %c0_2 = arith.constant 0 : index
    %c0_3 = arith.constant 0 : index
    %4 = vector.load %arg11[%c0_2, %c0_3] : memref<32x128xf32, #tpu.memory_space<vmem>>, vector<32x128xf32>
    %cst = arith.constant dense<0.000000e+00> : vector<8x128xf32>
    %5 = tpu.matmul %3, %4, %cst {dimension_numbers = #tpu.dot_dimension_numbers<[1], [0], [0], [1], [0, 0, 1, 1], [], []>} : vector<8x32xf32>, vector<32x128xf32>, vector<8x128xf32> -> vector<8x128xf32>
    %c0_4 = arith.constant 0 : index
    %c0_5 = arith.constant 0 : index
    %6 = vector.load %arg12[%c0_4, %c0_5] : memref<1x128xf32, #tpu.memory_space<vmem>>, vector<1x128xf32>
    %7 = vector.broadcast %6 : vector<1x128xf32> to vector<8x128xf32>
    %8 = arith.addf %5, %7 : vector<8x128xf32>
    %cst_6 = arith.constant 0.000000e+00 : f32
    %9 = vector.broadcast %cst_6 : f32 to vector<8x128xf32>
    %10 = arith.maximumf %8, %9 : vector<8x128xf32>
    %c0_7 = arith.constant 0 : index
    %c0_8 = arith.constant 0 : index
    %11 = vector.load %arg21[%c0_7, %c0_8] : memref<8x32xf32, #tpu.memory_space<vmem>>, vector<8x32xf32>
    %c0_9 = arith.constant 0 : index
    %c0_10 = arith.constant 0 : index
    %12 = vector.load %arg13[%c0_9, %c0_10] : memref<128x32xf32, #tpu.memory_space<vmem>>, vector<128x32xf32>
    %cst_11 = arith.constant dense<0.000000e+00> : vector<8x32xf32>
    %13 = tpu.matmul %10, %12, %cst_11 {dimension_numbers = #tpu.dot_dimension_numbers<[1], [0], [0], [1], [0, 0, 1, 1], [], []>} : vector<8x128xf32>, vector<128x32xf32>, vector<8x32xf32> -> vector<8x32xf32>
    %14 = arith.addf %11, %13 : vector<8x32xf32>
    %c0_12 = arith.constant 0 : index
    %c0_13 = arith.constant 0 : index
    %15 = vector.load %arg21[%c0_12, %c0_13] : memref<8x32xf32, #tpu.memory_space<vmem>>, vector<8x32xf32>
    tpu.vector_store %arg21[%c0_12, %c0_13], %14 {strides = array<i32>} : memref<8x32xf32, #tpu.memory_space<vmem>>, vector<8x32xf32>,
    %c0_i32_14 = arith.constant 0 : i32
    %16 = arith.cmpi eq, %arg1, %c0_i32_14 : i32
    %17 = arith.extui %16 : i1 to i32
    %c0_i32_15 = arith.constant 0 : i32
    %18 = arith.cmpi ne, %17, %c0_i32_15 : i32
    scf.if %18 {
      %c0_16 = arith.constant 0 : index
      %c0_17 = arith.constant 0 : index
      %19 = vector.load %arg21[%c0_16, %c0_17] : memref<8x32xf32, #tpu.memory_space<vmem>>, vector<8x32xf32>
      %c0_18 = arith.constant 0 : index
      %c0_19 = arith.constant 0 : index
      %20 = vector.load %arg14[%c0_18, %c0_19] : memref<1x32xf32, #tpu.memory_space<vmem>>, vector<1x32xf32>
      %21 = vector.broadcast %20 : vector<1x32xf32> to vector<8x32xf32>
      %22 = arith.addf %19, %21 : vector<8x32xf32>
      %c0_20 = arith.constant 0 : index
      %c0_21 = arith.constant 0 : index
      %23 = vector.load %arg20[%c0_20, %c0_21] : memref<8x32xf32, #tpu.memory_space<vmem>>, vector<8x32xf32>
      %24 = arith.addf %22, %23 : vector<8x32xf32>
      %c0_22 = arith.constant 0 : index
      %c0_23 = arith.constant 0 : index
      %25 = vector.load %arg17[%c0_22, %c0_23] : memref<1x32xf32, #tpu.memory_space<vmem>>, vector<1x32xf32>
      %c0_24 = arith.constant 0 : index
      %c0_25 = arith.constant 0 : index
      %26 = vector.load %arg18[%c0_24, %c0_25] : memref<1x32xf32, #tpu.memory_space<vmem>>, vector<1x32xf32>
      %cst_26 = arith.constant dense<0.000000e+00> : vector<8xf32>
      %27 = vector.multi_reduction <add>, %24, %cst_26 [1] : vector<8x32xf32> to vector<8xf32>
      %28 = vector.shape_cast %27 : vector<8xf32> to vector<8x1xf32>
      %cst_27 = arith.constant 3.200000e+01 : f32
      %29 = vector.broadcast %cst_27 : f32 to vector<8x1xf32>
      %30 = arith.divf %28, %29 : vector<8x1xf32>
      %31 = vector.broadcast %30 : vector<8x1xf32> to vector<8x32xf32>
      %32 = arith.subf %24, %31 : vector<8x32xf32>
      %33 = arith.mulf %32, %32 : vector<8x32xf32>
      %cst_28 = arith.constant dense<0.000000e+00> : vector<8xf32>
      %34 = vector.multi_reduction <add>, %33, %cst_28 [1] : vector<8x32xf32> to vector<8xf32>
      %35 = vector.shape_cast %34 : vector<8xf32> to vector<8x1xf32>
      %cst_29 = arith.constant 0.0322580636 : f32
      %36 = vector.broadcast %cst_29 : f32 to vector<8x1xf32>
      %37 = arith.mulf %35, %36 : vector<8x1xf32>
      %38 = math.sqrt %37 : vector<8x1xf32>
      %cst_30 = arith.constant 9.99999997E-7 : f32
      %39 = vector.broadcast %cst_30 : f32 to vector<8x1xf32>
      %40 = arith.addf %38, %39 : vector<8x1xf32>
      %41 = tpu.reciprocal %40 : vector<8x1xf32> -> vector<8x1xf32>
      %42 = vector.broadcast %25 : vector<1x32xf32> to vector<8x32xf32>
      %43 = arith.mulf %42, %32 : vector<8x32xf32>
      %44 = vector.broadcast %41 : vector<8x1xf32> to vector<8x32xf32>
      %45 = arith.mulf %43, %44 : vector<8x32xf32>
      %46 = vector.broadcast %26 : vector<1x32xf32> to vector<8x32xf32>
      %47 = arith.addf %45, %46 : vector<8x32xf32>
      %48 = vector.shape_cast %47 : vector<8x32xf32> to vector<1x8x32xf32>
      %c0_31 = arith.constant 0 : index
      %c0_32 = arith.constant 0 : index
      %c0_33 = arith.constant 0 : index
      %49 = vector.load %arg19[%c0_31, %c0_32, %c0_33] : memref<1x8x32xf32, #tpu.memory_space<vmem>>, vector<1x8x32xf32>
      tpu.vector_store %arg19[%c0_31, %c0_32, %c0_33], %48 {strides = array<i32>} : memref<1x8x32xf32, #tpu.memory_space<vmem>>, vector<1x8x32xf32>,
    } else {
    }
    return
  }
  func.func @transform_0(%arg0: i32, %arg1: i32) -> (i32, i32, i32) {
    %c0_i32 = arith.constant 0 : i32
    %c0_i32_0 = arith.constant 0 : i32
    %c0_i32_1 = arith.constant 0 : i32
    return %arg0, %c0_i32, %c0_i32_0 : i32, i32, i32
  }
  func.func @transform_1(%arg0: i32, %arg1: i32) -> (i32, i32) {
    %c0_i32 = arith.constant 0 : i32
    %c0_i32_0 = arith.constant 0 : i32
    %c0_i32_1 = arith.constant 0 : i32
    return %c0_i32, %c0_i32_0 : i32, i32
  }
  func.func @transform_2(%arg0: i32, %arg1: i32) -> (i32, i32) {
    %c0_i32 = arith.constant 0 : i32
    %c0_i32_0 = arith.constant 0 : i32
    %c0_i32_1 = arith.constant 0 : i32
    return %c0_i32, %c0_i32_0 : i32, i32
  }
  func.func @transform_3(%arg0: i32, %arg1: i32) -> (i32, i32) {
    %c0_i32 = arith.constant 0 : i32
    %c0_i32_0 = arith.constant 0 : i32
    %c0_i32_1 = arith.constant 0 : i32
    return %c0_i32, %c0_i32_0 : i32, i32
  }
  func.func @transform_4(%arg0: i32, %arg1: i32) -> (i32, i32) {
    %c0_i32 = arith.constant 0 : i32
    %c0_i32_0 = arith.constant 0 : i32
    %c0_i32_1 = arith.constant 0 : i32
    return %c0_i32, %c0_i32_0 : i32, i32
  }
  func.func @transform_5(%arg0: i32, %arg1: i32) -> (i32, i32) {
    %c0_i32 = arith.constant 0 : i32
    %c0_i32_0 = arith.constant 0 : i32
    %c0_i32_1 = arith.constant 0 : i32
    return %c0_i32, %c0_i32_0 : i32, i32
  }
  func.func @transform_6(%arg0: i32, %arg1: i32) -> (i32, i32) {
    %c0_i32 = arith.constant 0 : i32
    %c0_i32_0 = arith.constant 0 : i32
    %c0_i32_1 = arith.constant 0 : i32
    return %c0_i32, %c0_i32_0 : i32, i32
  }
  func.func @transform_7(%arg0: i32, %arg1: i32) -> (i32, i32) {
    %c0_i32 = arith.constant 0 : i32
    %c0_i32_0 = arith.constant 0 : i32
    %c0_i32_1 = arith.constant 0 : i32
    return %c0_i32, %c0_i32_0 : i32, i32
  }
  func.func @transform_8(%arg0: i32, %arg1: i32) -> (i32, i32) {
    %c0_i32 = arith.constant 0 : i32
    %c0_i32_0 = arith.constant 0 : i32
    %c0_i32_1 = arith.constant 0 : i32
    return %c0_i32, %c0_i32_0 : i32, i32
  }
  func.func @transform_9(%arg0: i32, %arg1: i32) -> (i32, i32) {
    %c0_i32 = arith.constant 0 : i32
    %c0_i32_0 = arith.constant 0 : i32
    return %c0_i32, %arg1 : i32, i32
  }
  func.func @transform_10(%arg0: i32, %arg1: i32) -> (i32, i32) {
    %c0_i32 = arith.constant 0 : i32
    %c0_i32_0 = arith.constant 0 : i32
    return %c0_i32, %arg1 : i32, i32
  }
  func.func @transform_11(%arg0: i32, %arg1: i32) -> (i32, i32) {
    %c0_i32 = arith.constant 0 : i32
    %c0_i32_0 = arith.constant 0 : i32
    return %arg1, %c0_i32 : i32, i32
  }
  func.func @transform_12(%arg0: i32, %arg1: i32) -> (i32, i32) {
    %c0_i32 = arith.constant 0 : i32
    %c0_i32_0 = arith.constant 0 : i32
    %c0_i32_1 = arith.constant 0 : i32
    return %c0_i32, %c0_i32_0 : i32, i32
  }
  func.func @transform_13(%arg0: i32, %arg1: i32) -> (i32, i32) {
    %c0_i32 = arith.constant 0 : i32
    %c0_i32_0 = arith.constant 0 : i32
    %c0_i32_1 = arith.constant 0 : i32
    return %c0_i32, %c0_i32_0 : i32, i32
  }
  func.func @transform_14(%arg0: i32, %arg1: i32) -> (i32, i32) {
    %c0_i32 = arith.constant 0 : i32
    %c0_i32_0 = arith.constant 0 : i32
    %c0_i32_1 = arith.constant 0 : i32
    return %c0_i32, %c0_i32_0 : i32, i32
  }
  func.func @transform_15(%arg0: i32, %arg1: i32) -> (i32, i32) {
    %c0_i32 = arith.constant 0 : i32
    %c0_i32_0 = arith.constant 0 : i32
    %c0_i32_1 = arith.constant 0 : i32
    return %c0_i32, %c0_i32_0 : i32, i32
  }
  func.func @transform_16(%arg0: i32, %arg1: i32) -> (i32, i32) {
    %c0_i32 = arith.constant 0 : i32
    %c0_i32_0 = arith.constant 0 : i32
    %c0_i32_1 = arith.constant 0 : i32
    return %c0_i32, %c0_i32_0 : i32, i32
  }
  func.func @transform_17(%arg0: i32, %arg1: i32) -> (i32, i32, i32) {
    %c0_i32 = arith.constant 0 : i32
    %c0_i32_0 = arith.constant 0 : i32
    %c0_i32_1 = arith.constant 0 : i32
    return %arg0, %c0_i32, %c0_i32_0 : i32, i32, i32
  }
}

</mosaic_0001>

<llo_original>
// kernel: tpu_custom_call.1
$region0: #{tpu_custom_call.1}
  #allocation0 [shape = 'u32[]', space=smem, size = 0x4, offset = 0x4, fixed_abs, tag = 'smem constant byte address 0x4 - core index']
  #allocation1 [shape = 'u32[144,128]{1,0:T(1,128)}', space=vmem, size = 0x12000, scoped, tag = 'internal scratch']
  #allocation2 [shape = 'f32[8,32]{1,0:T(8,128)}', space=vmem, size = 0x1000, scoped, tag = 'scratch operand']
  #allocation3 [shape = 'f32[8,32]{1,0:T(8,128)}', space=vmem, size = 0x1000, scoped, tag = 'scratch operand']
  %s0 = inlined_call_operand.hbm [shape: f32[2,8,32], index: 0, kind: input, shape index: {}]
  %s1 = inlined_call_operand.vmem [shape: f32[32,32], index: 1, kind: input, shape index: {}]
  %s2 = inlined_call_operand.vmem [shape: f32[32,32], index: 2, kind: input, shape index: {}]
  %s3 = inlined_call_operand.vmem [shape: f32[32,32], index: 3, kind: input, shape index: {}]
  %s4 = inlined_call_operand.vmem [shape: f32[32,32], index: 4, kind: input, shape index: {}]
  %s5 = inlined_call_operand.vmem [shape: f32[1,32], index: 5, kind: input, shape index: {}]
  %s6 = inlined_call_operand.vmem [shape: f32[1,32], index: 6, kind: input, shape index: {}]
  %s7 = inlined_call_operand.vmem [shape: f32[1,32], index: 7, kind: input, shape index: {}]
  %s8 = inlined_call_operand.vmem [shape: f32[1,32], index: 8, kind: input, shape index: {}]
  %s9 = inlined_call_operand.vmem [shape: f32[32,128], index: 9, kind: input, shape index: {}]
  %s10 = inlined_call_operand.vmem [shape: f32[1,128], index: 10, kind: input, shape index: {}]
  %s11 = inlined_call_operand.vmem [shape: f32[128,32], index: 11, kind: input, shape index: {}]
  %s12 = inlined_call_operand.vmem [shape: f32[1,32], index: 12, kind: input, shape index: {}]
  %s13 = inlined_call_operand.vmem [shape: f32[1,32], index: 13, kind: input, shape index: {}]
  %s14 = inlined_call_operand.vmem [shape: f32[1,32], index: 14, kind: input, shape index: {}]
  %s15 = inlined_call_operand.vmem [shape: f32[1,32], index: 15, kind: input, shape index: {}]
  %s16 = inlined_call_operand.vmem [shape: f32[1,32], index: 16, kind: input, shape index: {}]
  %s17 = inlined_call_operand.hbm [shape: f32[2,8,32], index: 17, kind: output, shape index: {}]
  %s18 = sld [smem:[#allocation0]]
  $region113: #{tpu_custom_call.1} parent=0
    _
  %s20 = ssub.s32 1, %s18
  %s21 = scalar_select 0, %s20, %s18
  $region1: #{tpu_custom_call.1} parent=0
    #allocation4 [shape = 'u8[8192]{0}', space=vmem, size = 0x2000, scoped, tag = 'input window, operand 0']
    #allocation5 [shape = 's32[2]{0}', space=sflag, size = 0x8, scoped, tag = 'scoped memory for tpu_custom_call.1']
    #allocation6 [shape = 's32[2]{0}', space=sflag, size = 0x8, scoped, tag = 'scoped memory for tpu_custom_call.1']
    #allocation7 [shape = 'u8[8192]{0}', space=vmem, size = 0x2000, scoped, tag = 'output window, operand 0']
    %22 = vsyncpa [#allocation5], 0
    %s23 = scalar_lea.sflag [#allocation5], 1
    %24 = vsyncpa %s23, 0
    %25 = vsyncpa [#allocation6], 0
    %s26 = scalar_lea.sflag [#allocation6], 1
    %27 = vsyncpa %s26, 0
    loop: start=0, step=1, limit=4
    $region2: #{tpu_custom_call.1} parent=1 // loop_pre_header
      _
    $region3: #{tpu_custom_call.1} parent=1 // loop_header
      %s29 = sphi 0, %s33
      %p30 = scmp.ge.s32.totalorder %s29, 4
      %s36 = sphi 0, %s48
      %s37 = sphi 0, %s44
      %s38 = sphi 0, %s36
      %s39 = sphi 0, %s37
      %s40 = sphi 0, %s38
      %s41 = sphi 0, %s39
      %s51 = sphi 0, %s53
      %s54 = sphi 0, %s51
      %s55 = sphi 0, %s54
      %s71 = sphi 0, %s55
      %s75 = sphi 0, %s75
      %s77 = sphi 0, %s75
      %s78 = sphi 0, %s77
      %s92 = sphi 0, %s78
      %s96 = sphi 0, %s96
      %s98 = sphi 0, %s96
      %s99 = sphi 0, %s98
      %s113 = sphi 0, %s99
      %s117 = sphi 0, %s117
      %s119 = sphi 0, %s117
      %s120 = sphi 0, %s119
      %s134 = sphi 0, %s120
      %s138 = sphi 0, %s138
      %s140 = sphi 0, %s138
      %s141 = sphi 0, %s140
      %s155 = sphi 0, %s141
      %s159 = sphi 0, %s159
      %s161 = sphi 0, %s159
      %s162 = sphi 0, %s161
      %s176 = sphi 0, %s162
      %s180 = sphi 0, %s180
      %s182 = sphi 0, %s180
      %s183 = sphi 0, %s182
      %s197 = sphi 0, %s183
      %s201 = sphi 0, %s201
      %s203 = sphi 0, %s201
      %s204 = sphi 0, %s203
      %s218 = sphi 0, %s204
      %s222 = sphi 0, %s222
      %s224 = sphi 0, %s222
      %s225 = sphi 0, %s224
      %s239 = sphi 0, %s225
      %s245 = sphi 0, %s247
      %s248 = sphi 0, %s245
      %s249 = sphi 0, %s248
      %s265 = sphi 0, %s249
      %s271 = sphi 0, %s273
      %s274 = sphi 0, %s271
      %s275 = sphi 0, %s274
      %s291 = sphi 0, %s275
      %s297 = sphi 0, %s299
      %s300 = sphi 0, %s297
      %s301 = sphi 0, %s300
      %s317 = sphi 0, %s301
      %s321 = sphi 0, %s321
      %s323 = sphi 0, %s321
      %s324 = sphi 0, %s323
      %s338 = sphi 0, %s324
      %s342 = sphi 0, %s342
      %s344 = sphi 0, %s342
      %s345 = sphi 0, %s344
      %s359 = sphi 0, %s345
      %s363 = sphi 0, %s363
      %s365 = sphi 0, %s363
      %s366 = sphi 0, %s365
      %s380 = sphi 0, %s366
      %s384 = sphi 0, %s384
      %s386 = sphi 0, %s384
      %s387 = sphi 0, %s386
      %s401 = sphi 0, %s387
      %s405 = sphi 0, %s405
      %s407 = sphi 0, %s405
      %s408 = sphi 0, %s407
      %s422 = sphi 0, %s408
      %s428 = sphi 0, %s430
      %s431 = sphi 0, %s428
      %s432 = sphi 0, %s431
      %s448 = sphi 0, %s432
    $region4: #{tpu_custom_call.1} parent=1 // loop_header_branch
      %32 = sbr.rel (%p30) target = $region8
    $region5: #{tpu_custom_call.1} parent=1 // loop_body
      %s34 = ssub.s32 %s29, 1
      %s35 = ssub.s32 %s29, 2
      %s42 = sadd.s32 1, %s37
      %p43 = scmp.ge.s32.totalorder %s42, 1
      %s44 = scalar_select %p43, 0, %s42
      %s45 = sadd.s32 1, %s36
      %s46 = scalar_select %p43, %s45, %s36
      %p47 = scmp.ge.s32.totalorder %s46, 2
      %s48 = scalar_select %p47, 0, %s46
      %s49 = ssub.s32 %s36, %s48
      %p50 = scmp.eq.s32.totalorder %s49, 0
      %s52 = sadd.s32 %s51, 1
      %s53 = scalar_select %p50, %s51, %s52
      %p56 = pneg %p50
      %p57 = scmp.eq.s32.totalorder %s29, 1
      %p58 = por %p56, %p57
      %p59 = scmp.ne.s32.totalorder %s51, %s54
      %p60 = scmp.eq.s32.totalorder %s29, 0
      %p61 = por %p59, %p60
      %p62 = scmp.ne.s32.totalorder %s51, %s54
      %p63 = scmp.eq.s32.totalorder %s34, 1
      %p64 = por %p62, %p63
      %p65 = scmp.ne.s32.totalorder %s54, %s55
      %p66 = scmp.eq.s32.totalorder %s34, 0
      %p67 = por %p65, %p66
      %p68 = scmp.ne.s32.totalorder %s54, %s55
      %p69 = scmp.eq.s32.totalorder %s35, 1
      %p70 = por %p68, %p69
      %p72 = scmp.ne.s32.totalorder %s55, %s71
      %p73 = scmp.eq.s32.totalorder %s35, 0
      %p74 = por %p72, %p73
      %s76 = sadd.s32 %s75, 1
      %p79 = scmp.eq.s32.totalorder %s29, 1
      %p80 = scmp.ne.s32.totalorder %s75, %s77
      %p81 = scmp.eq.s32.totalorder %s29, 0
      %p82 = por %p80, %p81
      %p83 = scmp.ne.s32.totalorder %s75, %s77
      %p84 = scmp.eq.s32.totalorder %s34, 1
      %p85 = por %p83, %p84
      %p86 = scmp.ne.s32.totalorder %s77, %s78
      %p87 = scmp.eq.s32.totalorder %s34, 0
      %p88 = por %p86, %p87
      %p89 = scmp.ne.s32.totalorder %s77, %s78
      %p90 = scmp.eq.s32.totalorder %s35, 1
      %p91 = por %p89, %p90
      %p93 = scmp.ne.s32.totalorder %s78, %s92
      %p94 = scmp.eq.s32.totalorder %s35, 0
      %p95 = por %p93, %p94
      %s97 = sadd.s32 %s96, 1
      %p100 = scmp.eq.s32.totalorder %s29, 1
      %p101 = scmp.ne.s32.totalorder %s96, %s98
      %p102 = scmp.eq.s32.totalorder %s29, 0
      %p103 = por %p101, %p102
      %p104 = scmp.ne.s32.totalorder %s96, %s98
      %p105 = scmp.eq.s32.totalorder %s34, 1
      %p106 = por %p104, %p105
      %p107 = scmp.ne.s32.totalorder %s98, %s99
      %p108 = scmp.eq.s32.totalorder %s34, 0
      %p109 = por %p107, %p108
      %p110 = scmp.ne.s32.totalorder %s98, %s99
      %p111 = scmp.eq.s32.totalorder %s35, 1
      %p112 = por %p110, %p111
      %p114 = scmp.ne.s32.totalorder %s99, %s113
      %p115 = scmp.eq.s32.totalorder %s35, 0
      %p116 = por %p114, %p115
      %s118 = sadd.s32 %s117, 1
      %p121 = scmp.eq.s32.totalorder %s29, 1
      %p122 = scmp.ne.s32.totalorder %s117, %s119
      %p123 = scmp.eq.s32.totalorder %s29, 0
      %p124 = por %p122, %p123
      %p125 = scmp.ne.s32.totalorder %s117, %s119
      %p126 = scmp.eq.s32.totalorder %s34, 1
      %p127 = por %p125, %p126
      %p128 = scmp.ne.s32.totalorder %s119, %s120
      %p129 = scmp.eq.s32.totalorder %s34, 0
      %p130 = por %p128, %p129
      %p131 = scmp.ne.s32.totalorder %s119, %s120
      %p132 = scmp.eq.s32.totalorder %s35, 1
      %p133 = por %p131, %p132
      %p135 = scmp.ne.s32.totalorder %s120, %s134
      %p136 = scmp.eq.s32.totalorder %s35, 0
      %p137 = por %p135, %p136
      %s139 = sadd.s32 %s138, 1
      %p142 = scmp.eq.s32.totalorder %s29, 1
      %p143 = scmp.ne.s32.totalorder %s138, %s140
      %p144 = scmp.eq.s32.totalorder %s29, 0
      %p145 = por %p143, %p144
      %p146 = scmp.ne.s32.totalorder %s138, %s140
      %p147 = scmp.eq.s32.totalorder %s34, 1
      %p148 = por %p146, %p147
      %p149 = scmp.ne.s32.totalorder %s140, %s141
      %p150 = scmp.eq.s32.totalorder %s34, 0
      %p151 = por %p149, %p150
      %p152 = scmp.ne.s32.totalorder %s140, %s141
      %p153 = scmp.eq.s32.totalorder %s35, 1
      %p154 = por %p152, %p153
      %p156 = scmp.ne.s32.totalorder %s141, %s155
      %p157 = scmp.eq.s32.totalorder %s35, 0
      %p158 = por %p156, %p157
      %s160 = sadd.s32 %s159, 1
      %p163 = scmp.eq.s32.totalorder %s29, 1
      %p164 = scmp.ne.s32.totalorder %s159, %s161
      %p165 = scmp.eq.s32.totalorder %s29, 0
      %p166 = por %p164, %p165
      %p167 = scmp.ne.s32.totalorder %s159, %s161
      %p168 = scmp.eq.s32.totalorder %s34, 1
      %p169 = por %p167, %p168
      %p170 = scmp.ne.s32.totalorder %s161, %s162
      %p171 = scmp.eq.s32.totalorder %s34, 0
      %p172 = por %p170, %p171
      %p173 = scmp.ne.s32.totalorder %s161, %s162
      %p174 = scmp.eq.s32.totalorder %s35, 1
      %p175 = por %p173, %p174
      %p177 = scmp.ne.s32.totalorder %s162, %s176
      %p178 = scmp.eq.s32.totalorder %s35, 0
      %p179 = por %p177, %p178
      %s181 = sadd.s32 %s180, 1
      %p184 = scmp.eq.s32.totalorder %s29, 1
      %p185 = scmp.ne.s32.totalorder %s180, %s182
      %p186 = scmp.eq.s32.totalorder %s29, 0
      %p187 = por %p185, %p186
      %p188 = scmp.ne.s32.totalorder %s180, %s182
      %p189 = scmp.eq.s32.totalorder %s34, 1
      %p190 = por %p188, %p189
      %p191 = scmp.ne.s32.totalorder %s182, %s183
      %p192 = scmp.eq.s32.totalorder %s34, 0
      %p193 = por %p191, %p192
      %p194 = scmp.ne.s32.totalorder %s182, %s183
      %p195 = scmp.eq.s32.totalorder %s35, 1
      %p196 = por %p194, %p195
      %p198 = scmp.ne.s32.totalorder %s183, %s197
      %p199 = scmp.eq.s32.totalorder %s35, 0
      %p200 = por %p198, %p199
      %s202 = sadd.s32 %s201, 1
      %p205 = scmp.eq.s32.totalorder %s29, 1
      %p206 = scmp.ne.s32.totalorder %s201, %s203
      %p207 = scmp.eq.s32.totalorder %s29, 0
      %p208 = por %p206, %p207
      %p209 = scmp.ne.s32.totalorder %s201, %s203
      %p210 = scmp.eq.s32.totalorder %s34, 1
      %p211 = por %p209, %p210
      %p212 = scmp.ne.s32.totalorder %s203, %s204
      %p213 = scmp.eq.s32.totalorder %s34, 0
      %p214 = por %p212, %p213
      %p215 = scmp.ne.s32.totalorder %s203, %s204
      %p216 = scmp.eq.s32.totalorder %s35, 1
      %p217 = por %p215, %p216
      %p219 = scmp.ne.s32.totalorder %s204, %s218
      %p220 = scmp.eq.s32.totalorder %s35, 0
      %p221 = por %p219, %p220
      %s223 = sadd.s32 %s222, 1
      %p226 = scmp.eq.s32.totalorder %s29, 1
      %p227 = scmp.ne.s32.totalorder %s222, %s224
      %p228 = scmp.eq.s32.totalorder %s29, 0
      %p229 = por %p227, %p228
      %p230 = scmp.ne.s32.totalorder %s222, %s224
      %p231 = scmp.eq.s32.totalorder %s34, 1
      %p232 = por %p230, %p231
      %p233 = scmp.ne.s32.totalorder %s224, %s225
      %p234 = scmp.eq.s32.totalorder %s34, 0
      %p235 = por %p233, %p234
      %p236 = scmp.ne.s32.totalorder %s224, %s225
      %p237 = scmp.eq.s32.totalorder %s35, 1
      %p238 = por %p236, %p237
      %p240 = scmp.ne.s32.totalorder %s225, %s239
      %p241 = scmp.eq.s32.totalorder %s35, 0
      %p242 = por %p240, %p241
      %s243 = ssub.s32 %s37, %s44
      %p244 = scmp.eq.s32.totalorder %s243, 0
      %s246 = sadd.s32 %s245, 1
      %s247 = scalar_select %p244, %s245, %s246
      %p250 = pneg %p244
      %p251 = scmp.eq.s32.totalorder %s29, 1
      %p252 = por %p250, %p251
      %p253 = scmp.ne.s32.totalorder %s245, %s248
      %p254 = scmp.eq.s32.totalorder %s29, 0
      %p255 = por %p253, %p254
      %p256 = scmp.ne.s32.totalorder %s245, %s248
      %p257 = scmp.eq.s32.totalorder %s34, 1
      %p258 = por %p256, %p257
      %p259 = scmp.ne.s32.totalorder %s248, %s249
      %p260 = scmp.eq.s32.totalorder %s34, 0
      %p261 = por %p259, %p260
      %p262 = scmp.ne.s32.totalorder %s248, %s249
      %p263 = scmp.eq.s32.totalorder %s35, 1
      %p264 = por %p262, %p263
      %p266 = scmp.ne.s32.totalorder %s249, %s265
      %p267 = scmp.eq.s32.totalorder %s35, 0
      %p268 = por %p266, %p267
      %s269 = ssub.s32 %s37, %s44
      %p270 = scmp.eq.s32.totalorder %s269, 0
      %s272 = sadd.s32 %s271, 1
      %s273 = scalar_select %p270, %s271, %s272
      %p276 = pneg %p270
      %p277 = scmp.eq.s32.totalorder %s29, 1
      %p278 = por %p276, %p277
      %p279 = scmp.ne.s32.totalorder %s271, %s274
      %p280 = scmp.eq.s32.totalorder %s29, 0
      %p281 = por %p279, %p280
      %p282 = scmp.ne.s32.totalorder %s271, %s274
      %p283 = scmp.eq.s32.totalorder %s34, 1
      %p284 = por %p282, %p283
      %p285 = scmp.ne.s32.totalorder %s274, %s275
      %p286 = scmp.eq.s32.totalorder %s34, 0
      %p287 = por %p285, %p286
      %p288 = scmp.ne.s32.totalorder %s274, %s275
      %p289 = scmp.eq.s32.totalorder %s35, 1
      %p290 = por %p288, %p289
      %p292 = scmp.ne.s32.totalorder %s275, %s291
      %p293 = scmp.eq.s32.totalorder %s35, 0
      %p294 = por %p292, %p293
      %s295 = ssub.s32 %s37, %s44
      %p296 = scmp.eq.s32.totalorder %s295, 0
      %s298 = sadd.s32 %s297, 1
      %s299 = scalar_select %p296, %s297, %s298
      %p302 = pneg %p296
      %p303 = scmp.eq.s32.totalorder %s29, 1
      %p304 = por %p302, %p303
      %p305 = scmp.ne.s32.totalorder %s297, %s300
      %p306 = scmp.eq.s32.totalorder %s29, 0
      %p307 = por %p305, %p306
      %p308 = scmp.ne.s32.totalorder %s297, %s300
      %p309 = scmp.eq.s32.totalorder %s34, 1
      %p310 = por %p308, %p309
      %p311 = scmp.ne.s32.totalorder %s300, %s301
      %p312 = scmp.eq.s32.totalorder %s34, 0
      %p313 = por %p311, %p312
      %p314 = scmp.ne.s32.totalorder %s300, %s301
      %p315 = scmp.eq.s32.totalorder %s35, 1
      %p316 = por %p314, %p315
      %p318 = scmp.ne.s32.totalorder %s301, %s317
      %p319 = scmp.eq.s32.totalorder %s35, 0
      %p320 = por %p318, %p319
      %s322 = sadd.s32 %s321, 1
      %p325 = scmp.eq.s32.totalorder %s29, 1
      %p326 = scmp.ne.s32.totalorder %s321, %s323
      %p327 = scmp.eq.s32.totalorder %s29, 0
      %p328 = por %p326, %p327
      %p329 = scmp.ne.s32.totalorder %s321, %s323
      %p330 = scmp.eq.s32.totalorder %s34, 1
      %p331 = por %p329, %p330
      %p332 = scmp.ne.s32.totalorder %s323, %s324
      %p333 = scmp.eq.s32.totalorder %s34, 0
      %p334 = por %p332, %p333
      %p335 = scmp.ne.s32.totalorder %s323, %s324
      %p336 = scmp.eq.s32.totalorder %s35, 1
      %p337 = por %p335, %p336
      %p339 = scmp.ne.s32.totalorder %s324, %s338
      %p340 = scmp.eq.s32.totalorder %s35, 0
      %p341 = por %p339, %p340
      %s343 = sadd.s32 %s342, 1
      %p346 = scmp.eq.s32.totalorder %s29, 1
      %p347 = scmp.ne.s32.totalorder %s342, %s344
      %p348 = scmp.eq.s32.totalorder %s29, 0
      %p349 = por %p347, %p348
      %p350 = scmp.ne.s32.totalorder %s342, %s344
      %p351 = scmp.eq.s32.totalorder %s34, 1
      %p352 = por %p350, %p351
      %p353 = scmp.ne.s32.totalorder %s344, %s345
      %p354 = scmp.eq.s32.totalorder %s34, 0
      %p355 = por %p353, %p354
      %p356 = scmp.ne.s32.totalorder %s344, %s345
      %p357 = scmp.eq.s32.totalorder %s35, 1
      %p358 = por %p356, %p357
      %p360 = scmp.ne.s32.totalorder %s345, %s359
      %p361 = scmp.eq.s32.totalorder %s35, 0
      %p362 = por %p360, %p361
      %s364 = sadd.s32 %s363, 1
      %p367 = scmp.eq.s32.totalorder %s29, 1
      %p368 = scmp.ne.s32.totalorder %s363, %s365
      %p369 = scmp.eq.s32.totalorder %s29, 0
      %p370 = por %p368, %p369
      %p371 = scmp.ne.s32.totalorder %s363, %s365
      %p372 = scmp.eq.s32.totalorder %s34, 1
      %p373 = por %p371, %p372
      %p374 = scmp.ne.s32.totalorder %s365, %s366
      %p375 = scmp.eq.s32.totalorder %s34, 0
      %p376 = por %p374, %p375
      %p377 = scmp.ne.s32.totalorder %s365, %s366
      %p378 = scmp.eq.s32.totalorder %s35, 1
      %p379 = por %p377, %p378
      %p381 = scmp.ne.s32.totalorder %s366, %s380
      %p382 = scmp.eq.s32.totalorder %s35, 0
      %p383 = por %p381, %p382
      %s385 = sadd.s32 %s384, 1
      %p388 = scmp.eq.s32.totalorder %s29, 1
      %p389 = scmp.ne.s32.totalorder %s384, %s386
      %p390 = scmp.eq.s32.totalorder %s29, 0
      %p391 = por %p389, %p390
      %p392 = scmp.ne.s32.totalorder %s384, %s386
      %p393 = scmp.eq.s32.totalorder %s34, 1
      %p394 = por %p392, %p393
      %p395 = scmp.ne.s32.totalorder %s386, %s387
      %p396 = scmp.eq.s32.totalorder %s34, 0
      %p397 = por %p395, %p396
      %p398 = scmp.ne.s32.totalorder %s386, %s387
      %p399 = scmp.eq.s32.totalorder %s35, 1
      %p400 = por %p398, %p399
      %p402 = scmp.ne.s32.totalorder %s387, %s401
      %p403 = scmp.eq.s32.totalorder %s35, 0
      %p404 = por %p402, %p403
      %s406 = sadd.s32 %s405, 1
      %p409 = scmp.eq.s32.totalorder %s29, 1
      %p410 = scmp.ne.s32.totalorder %s405, %s407
      %p411 = scmp.eq.s32.totalorder %s29, 0
      %p412 = por %p410, %p411
      %p413 = scmp.ne.s32.totalorder %s405, %s407
      %p414 = scmp.eq.s32.totalorder %s34, 1
      %p415 = por %p413, %p414
      %p416 = scmp.ne.s32.totalorder %s407, %s408
      %p417 = scmp.eq.s32.totalorder %s34, 0
      %p418 = por %p416, %p417
      %p419 = scmp.ne.s32.totalorder %s407, %s408
      %p420 = scmp.eq.s32.totalorder %s35, 1
      %p421 = por %p419, %p420
      %p423 = scmp.ne.s32.totalorder %s408, %s422
      %p424 = scmp.eq.s32.totalorder %s35, 0
      %p425 = por %p423, %p424
      %s426 = ssub.s32 %s36, %s48
      %p427 = scmp.eq.s32.totalorder %s426, 0
      %s429 = sadd.s32 %s428, 1
      %s430 = scalar_select %p427, %s428, %s429
      %p433 = pneg %p427
      %p434 = scmp.eq.s32.totalorder %s29, 1
      %p435 = por %p433, %p434
      %p436 = scmp.ne.s32.totalorder %s428, %s431
      %p437 = scmp.eq.s32.totalorder %s29, 0
      %p438 = por %p436, %p437
      %p439 = scmp.ne.s32.totalorder %s428, %s431
      %p440 = scmp.eq.s32.totalorder %s34, 1
      %p441 = por %p439, %p440
      %p442 = scmp.ne.s32.totalorder %s431, %s432
      %p443 = scmp.eq.s32.totalorder %s34, 0
      %p444 = por %p442, %p443
      %p445 = scmp.ne.s32.totalorder %s431, %s432
      %p446 = scmp.eq.s32.totalorder %s35, 1
      %p447 = por %p445, %p446
      %p449 = scmp.ne.s32.totalorder %s432, %s448
      %p450 = scmp.eq.s32.totalorder %s35, 0
      %p451 = por %p449, %p450
      %p452 = scmp.le.s32.totalorder 1, %s29
      %p453 = scmp.lt.s32.totalorder %s29, 3
      %p454 = pnand %p452, %p453
      %p455 = pneg %p454
      // Predicated region
      $region9: #{tpu_custom_call.1} parent=5 // pred_check
        _
      $region10: #{tpu_custom_call.1} parent=5 // pred_check_branch
        %457 = sbr.rel (%p454) target = $region12
      $region11: #{tpu_custom_call.1} parent=5 // pred_region
        %s458 = ssub.s32 %s29, 1
        // Predicated region
        $region13: #{tpu_custom_call.1} parent=11 // pred_check
          %p459 = pneg %p88
        $region14: #{tpu_custom_call.1} parent=11 // pred_check_branch
          %461 = sbr.rel (%p459) target = $region16
        $region15: #{tpu_custom_call.1} parent=11 // pred_region
          _
        $region16: #{tpu_custom_call.1} parent=11 // pred_fallthru
          _
        // Predicated region
        $region17: #{tpu_custom_call.1} parent=11 // pred_check
          %p462 = pneg %p109
        $region18: #{tpu_custom_call.1} parent=11 // pred_check_branch
          %464 = sbr.rel (%p462) target = $region20
        $region19: #{tpu_custom_call.1} parent=11 // pred_region
          _
        $region20: #{tpu_custom_call.1} parent=11 // pred_fallthru
          _
        // Predicated region
        $region21: #{tpu_custom_call.1} parent=11 // pred_check
          %p465 = pneg %p130
        $region22: #{tpu_custom_call.1} parent=11 // pred_check_branch
          %467 = sbr.rel (%p465) target = $region24
        $region23: #{tpu_custom_call.1} parent=11 // pred_region
          _
        $region24: #{tpu_custom_call.1} parent=11 // pred_fallthru
          _
        // Predicated region
        $region25: #{tpu_custom_call.1} parent=11 // pred_check
          %p468 = pneg %p151
        $region26: #{tpu_custom_call.1} parent=11 // pred_check_branch
          %470 = sbr.rel (%p468) target = $region28
        $region27: #{tpu_custom_call.1} parent=11 // pred_region
          _
        $region28: #{tpu_custom_call.1} parent=11 // pred_fallthru
          _
        // Predicated region
        $region29: #{tpu_custom_call.1} parent=11 // pred_check
          %p471 = pneg %p172
        $region30: #{tpu_custom_call.1} parent=11 // pred_check_branch
          %473 = sbr.rel (%p471) target = $region32
        $region31: #{tpu_custom_call.1} parent=11 // pred_region
          _
        $region32: #{tpu_custom_call.1} parent=11 // pred_fallthru
          _
        // Predicated region
        $region33: #{tpu_custom_call.1} parent=11 // pred_check
          %p474 = pneg %p193
        $region34: #{tpu_custom_call.1} parent=11 // pred_check_branch
          %476 = sbr.rel (%p474) target = $region36
        $region35: #{tpu_custom_call.1} parent=11 // pred_region
          _
        $region36: #{tpu_custom_call.1} parent=11 // pred_fallthru
          _
        // Predicated region
        $region37: #{tpu_custom_call.1} parent=11 // pred_check
          %p477 = pneg %p214
        $region38: #{tpu_custom_call.1} parent=11 // pred_check_branch
          %479 = sbr.rel (%p477) target = $region40
        $region39: #{tpu_custom_call.1} parent=11 // pred_region
          _
        $region40: #{tpu_custom_call.1} parent=11 // pred_fallthru
          _
        // Predicated region
        $region41: #{tpu_custom_call.1} parent=11 // pred_check
          %p480 = pneg %p235
        $region42: #{tpu_custom_call.1} parent=11 // pred_check_branch
          %482 = sbr.rel (%p480) target = $region44
        $region43: #{tpu_custom_call.1} parent=11 // pred_region
          _
        $region44: #{tpu_custom_call.1} parent=11 // pred_fallthru
          _
        // Predicated region
        $region45: #{tpu_custom_call.1} parent=11 // pred_check
          %p483 = pneg %p261
        $region46: #{tpu_custom_call.1} parent=11 // pred_check_branch
          %485 = sbr.rel (%p483) target = $region48
        $region47: #{tpu_custom_call.1} parent=11 // pred_region
          %p486 = scmp.lt.s32.totalorder %s39, 0
          %s487 = scalar_select %p486, %s39, 0
          %s488 = smul.addr %s487, 8
          %s489 = scalar_lea.vmem %s9, %s488
        $region48: #{tpu_custom_call.1} parent=11 // pred_fallthru
          _
        // Predicated region
        $region49: #{tpu_custom_call.1} parent=11 // pred_check
          %p490 = pneg %p287
        $region50: #{tpu_custom_call.1} parent=11 // pred_check_branch
          %492 = sbr.rel (%p490) target = $region52
        $region51: #{tpu_custom_call.1} parent=11 // pred_region
          %p493 = scmp.lt.s32.totalorder %s39, 0
          %s494 = scalar_select %p493, %s39, 0
          %s495 = scalar_lea.vmem %s10, %s494
        $region52: #{tpu_custom_call.1} parent=11 // pred_fallthru
          _
        // Predicated region
        $region53: #{tpu_custom_call.1} parent=11 // pred_check
          %p496 = pneg %p313
        $region54: #{tpu_custom_call.1} parent=11 // pred_check_branch
          %498 = sbr.rel (%p496) target = $region56
        $region55: #{tpu_custom_call.1} parent=11 // pred_region
          %s499 = smul.u32 16, %s39
          %p500 = scmp.lt.s32.totalorder %s499, 15
          %s501 = scalar_select %p500, %s499, 15
          %s502 = smul.addr %s501, 8
          %s503 = scalar_lea.vmem %s11, %s502
          %s504 = smul.u32 16, %s39
        $region56: #{tpu_custom_call.1} parent=11 // pred_fallthru
          _
        // Predicated region
        $region57: #{tpu_custom_call.1} parent=11 // pred_check
          %p505 = pneg %p334
        $region58: #{tpu_custom_call.1} parent=11 // pred_check_branch
          %507 = sbr.rel (%p505) target = $region60
        $region59: #{tpu_custom_call.1} parent=11 // pred_region
          _
        $region60: #{tpu_custom_call.1} parent=11 // pred_fallthru
          _
        // Predicated region
        $region61: #{tpu_custom_call.1} parent=11 // pred_check
          %p508 = pneg %p355
        $region62: #{tpu_custom_call.1} parent=11 // pred_check_branch
          %510 = sbr.rel (%p508) target = $region64
        $region63: #{tpu_custom_call.1} parent=11 // pred_region
          _
        $region64: #{tpu_custom_call.1} parent=11 // pred_fallthru
          _
        // Predicated region
        $region65: #{tpu_custom_call.1} parent=11 // pred_check
          %p511 = pneg %p376
        $region66: #{tpu_custom_call.1} parent=11 // pred_check_branch
          %513 = sbr.rel (%p511) target = $region68
        $region67: #{tpu_custom_call.1} parent=11 // pred_region
          _
        $region68: #{tpu_custom_call.1} parent=11 // pred_fallthru
          _
        // Predicated region
        $region69: #{tpu_custom_call.1} parent=11 // pred_check
          %p514 = pneg %p397
        $region70: #{tpu_custom_call.1} parent=11 // pred_check_branch
          %516 = sbr.rel (%p514) target = $region72
        $region71: #{tpu_custom_call.1} parent=11 // pred_region
          _
        $region72: #{tpu_custom_call.1} parent=11 // pred_fallthru
          _
        // Predicated region
        $region73: #{tpu_custom_call.1} parent=11 // pred_check
          %p517 = pneg %p418
        $region74: #{tpu_custom_call.1} parent=11 // pred_check_branch
          %519 = sbr.rel (%p517) target = $region76
        $region75: #{tpu_custom_call.1} parent=11 // pred_region
          _
        $region76: #{tpu_custom_call.1} parent=11 // pred_fallthru
          _
      $region12: #{tpu_custom_call.1} parent=5 // pred_fallthru
        _
      %p520 = scmp.lt.s32.totalorder %s29, 2
      // Predicated region
      $region77: #{tpu_custom_call.1} parent=5 // pred_check
        %p521 = pneg %p520
      $region78: #{tpu_custom_call.1} parent=5 // pred_check_branch
        %523 = sbr.rel (%p521) target = $region80
      $region79: #{tpu_custom_call.1} parent=5 // pred_region
        // Predicated region
        $region81: #{tpu_custom_call.1} parent=79 // pred_check
          %p524 = pneg %p61
        $region82: #{tpu_custom_call.1} parent=79 // pred_check_branch
          %526 = sbr.rel (%p524) target = $region84
        $region83: #{tpu_custom_call.1} parent=79 // pred_region
          %s527 = sand.u32 %s51, 1
          %s528 = scalar_lea.sflag [#allocation5], %s527
          %s529 = sand.u32 %s51, 1
          %s530 = smul.addr %s529, 8
          %s531 = scalar_lea.vmem [#allocation4], %s530
          %s533 = ssub.s32 128, 128
          %534 = vsyncadd %s528, %s533
          %s535 = smul.addr %s36, 128
          %s536 = scalar_lea.hbm %s0, %s535
          %s538 = sshll.u32 %s531, 4
          %s539 = int_to_ptr.vmem [resolvable:$true] %s538
          %541 = dma.hbm_to_vmem [thread:$0]  %s536, 128, %s539, %s528
        $region84: #{tpu_custom_call.1} parent=79 // pred_fallthru
          _
      $region80: #{tpu_custom_call.1} parent=5 // pred_fallthru
        _
      %p542 = scmp.le.s32.totalorder 1, %s29
      %p543 = scmp.lt.s32.totalorder %s29, 3
      %p544 = pnand %p542, %p543
      %p545 = pneg %p544
      // Predicated region
      $region85: #{tpu_custom_call.1} parent=5 // pred_check
        _
      $region86: #{tpu_custom_call.1} parent=5 // pred_check_branch
        %547 = sbr.rel (%p544) target = $region88
      $region87: #{tpu_custom_call.1} parent=5 // pred_region
        %s548 = ssub.s32 %s29, 1
        %s549 = sand.u32 %s54, 1
        %s550 = scalar_lea.sflag [#allocation5], %s549
        %s551 = sand.u32 %s54, 1
        %s552 = smul.addr %s551, 8
        %s553 = scalar_lea.vmem [#allocation4], %s552
        // Predicated region
        $region89: #{tpu_custom_call.1} parent=87 // pred_check
          %p554 = pneg %p67
        $region90: #{tpu_custom_call.1} parent=87 // pred_check_branch
          %556 = sbr.rel (%p554) target = $region92
        $region91: #{tpu_custom_call.1} parent=87 // pred_region
          %557 = dma.done %s550, 128
        $region92: #{tpu_custom_call.1} parent=87 // pred_fallthru
          _
        %s558 = sand.u32 %s54, 1
        %s559 = scalar_lea.sflag [#allocation5], %s558
        %s560 = sand.u32 %s54, 1
        %s561 = smul.addr %s560, 8
        %s562 = scalar_lea.vmem [#allocation4], %s561
        %p563 = pneg %p67
        %p564 = pneg %p64
        %p565 = pneg %p88
        %p566 = pneg %p85
        %p567 = pneg %p109
        %p568 = pneg %p106
        %p569 = pneg %p130
        %p570 = pneg %p127
        %p571 = pneg %p151
        %p572 = pneg %p148
        %p573 = pneg %p172
        %p574 = pneg %p169
        %p575 = pneg %p193
        %p576 = pneg %p190
        %p577 = pneg %p214
        %p578 = pneg %p211
        %p579 = pneg %p235
        %p580 = pneg %p232
        %p581 = scmp.lt.s32.totalorder %s39, 0
        %s582 = scalar_select %p581, %s39, 0
        %s583 = smul.addr %s582, 8
        %s584 = scalar_lea.vmem %s9, %s583
        %p585 = pneg %p261
        %p586 = pneg %p258
        %p587 = scmp.lt.s32.totalorder %s39, 0
        %s588 = scalar_select %p587, %s39, 0
        %s589 = scalar_lea.vmem %s10, %s588
        %p590 = pneg %p287
        %p591 = pneg %p284
        %s592 = smul.u32 16, %s39
        %p593 = scmp.lt.s32.totalorder %s592, 15
        %s594 = scalar_select %p593, %s592, 15
        %s595 = smul.addr %s594, 8
        %s596 = scalar_lea.vmem %s11, %s595
        %p597 = pneg %p313
        %p598 = pneg %p310
        %p599 = pneg %p334
        %p600 = pneg %p331
        %p601 = pneg %p355
        %p602 = pneg %p352
        %p603 = pneg %p376
        %p604 = pneg %p373
        %p605 = pneg %p397
        %p606 = pneg %p394
        %p607 = pneg %p418
        %p608 = pneg %p415
        %p609 = pneg %p444
        %p610 = pneg %p441
        %s611 = sand.u32 %s431, 1
        %s612 = scalar_lea.sflag [#allocation6], %s611
        %s613 = sand.u32 %s431, 1
        %s614 = smul.addr %s613, 8
        %s615 = scalar_lea.vmem [#allocation7], %s614
        %p616 = scmp.lt.s32.totalorder %s39, 0
        %s617 = scalar_select %p616, %s39, 0
        %s618 = smul.addr %s617, 8
        %s619 = scalar_lea.vmem %s9, %s618
        %p620 = scmp.lt.s32.totalorder %s39, 0
        %s621 = scalar_select %p620, %s39, 0
        %s622 = scalar_lea.vmem %s10, %s621
        %s623 = smul.u32 16, %s39
        %p624 = scmp.lt.s32.totalorder %s623, 15
        %s625 = scalar_select %p624, %s623, 15
        %s626 = smul.addr %s625, 8
        %s627 = scalar_lea.vmem %s11, %s626
        %s628 = smul.u32 16, %s39
        %p629 = scmp.eq.s32.totalorder %s39, 0
        // Predicated region
        $region93: #{tpu_custom_call.1} parent=87 // pred_check
          %p630 = pneg %p629
        $region94: #{tpu_custom_call.1} parent=87 // pred_check_branch
          %632 = sbr.rel (%p630) target = $region96
        $region95: #{tpu_custom_call.1} parent=87 // pred_region
          %v633 = vld [vmem:[%s553] sm:$0xff]
          %v634 = vld [vmem:[%s1] sm:$0xff]
          %v635 = vld [vmem:[%s1 + $0x8] sm:$0xff]
          %v636 = vld [vmem:[%s1 + $0x10] sm:$0xff]
          %v637 = vld [vmem:[%s1 + $0x18] sm:$0xff]
          %v638 = vld [vmem:[%s5] sm:$0x1]
          %v640 = vlaneseq
          %v641 = vshrl.u32 %v640, 7
          %v642 = vsub.s32 0, %v641
          %v643 = vrot.slane %v638, %v642
          %vm645 = vcmask 261120
          %v647 = vsel %vm645, %v633, 0
          %649 = vmatprep.subr.mxu0 0.0
          %650 = vmatpush1.msra.mxu0 0.0
          %651 = vmatprep.subr.mxu0 0.0
          %652 = vmatpush1.msra.mxu0 0.0
          %653 = vmatprep.subr.mxu0 0.0
          %654 = vmatpush1.msra.mxu0 0.0
          %655 = vmatprep.subr.mxu0 0.0
          %656 = vmatpush1.msra.mxu0 0.0
          %657 = vmatprep.subr.mxu0 0.0
          %658 = vmatpush1.msra.mxu0 0.0
          %659 = vmatprep.subr.mxu0 0.0
          %660 = vmatpush1.msra.mxu0 0.0
          %661 = vmatprep.subr.mxu0 0.0
          %662 = vmatpush1.msra.mxu0 0.0
          %663 = vmatprep.subr.mxu0 0.0
          %664 = vmatpush1.msra.mxu0 0.0
          %665 = vmatprep.subr.mxu0 0.0
          %666 = vmatpush1.msra.mxu0 0.0
          %667 = vmatprep.subr.mxu0 0.0
          %668 = vmatpush1.msra.mxu0 0.0
          %669 = vmatprep.subr.mxu0 0.0
          %670 = vmatpush1.msra.mxu0 0.0
          %671 = vmatprep.subr.mxu0 0.0
          %672 = vmatpush1.msra.mxu0 0.0
          %673 = vmatprep.subr.mxu0 0.0
          %674 = vmatpush1.msra.mxu0 %v637
          %675 = vmatprep.subr.mxu0 0.0
          %676 = vmatpush1.msra.mxu0 %v636
          %677 = vmatprep.subr.mxu0 0.0
          %678 = vmatpush1.msra.mxu0 %v635
          %679 = vmatprep.subr.mxu0 0.0
          %680 = vmatpush1.msra.mxu0 %v634
          %681 = vmatprep.subr.mxu0 0.0
          %682 = vmatpush2.msra.mxu0 0.0
          %683 = vmatprep.subr.mxu0 0.0
          %684 = vmatpush2.msra.mxu0 0.0
          %685 = vmatprep.subr.mxu0 0.0
          %686 = vmatpush2.msra.mxu0 0.0
          %687 = vmatprep.subr.mxu0 0.0
          %688 = vmatpush2.msra.mxu0 0.0
          %689 = vmatprep.subr.mxu0 0.0
          %690 = vmatpush2.msra.mxu0 0.0
          %691 = vmatprep.subr.mxu0 0.0
          %692 = vmatpush2.msra.mxu0 0.0
          %693 = vmatprep.subr.mxu0 0.0
          %694 = vmatpush2.msra.mxu0 0.0
          %695 = vmatprep.subr.mxu0 0.0
          %696 = vmatpush2.msra.mxu0 0.0
          %697 = vmatprep.subr.mxu0 0.0
          %698 = vmatpush2.msra.mxu0 0.0
          %699 = vmatprep.subr.mxu0 0.0
          %700 = vmatpush2.msra.mxu0 0.0
          %701 = vmatprep.subr.mxu0 0.0
          %702 = vmatpush2.msra.mxu0 0.0
          %703 = vmatprep.subr.mxu0 0.0
          %704 = vmatpush2.msra.mxu0 0.0
          %705 = vmatprep.subr.mxu0 0.0
          %706 = vmatpush2.msra.mxu0 0.0
          %707 = vmatprep.subr.mxu0 0.0
          %708 = vmatpush2.msra.mxu0 0.0
          %709 = vmatprep.subr.mxu0 0.0
          %710 = vmatpush2.msra.mxu0 0.0
          %711 = vmatprep.subr.mxu0 0.0
          %712 = vmatpush2.msra.mxu0 0.0
          %713 = vmatprep.mubr.f32.mxu0 0.0
          %714 = vmatmul.mubr.f32.gmra.mxu0 %v647
          %v715 = vpop.f32.mrf.mxu0
          %v716 = vadd.f32 %v643, %v715
          %v717 = vpop.f32.mrf.mxu0
          %718 = vdwg.mxu0
          %v719 = vld [vmem:[%s2] sm:$0xff]
          %v720 = vld [vmem:[%s2 + $0x8] sm:$0xff]
          %v721 = vld [vmem:[%s2 + $0x10] sm:$0xff]
          %v722 = vld [vmem:[%s2 + $0x18] sm:$0xff]
          %v723 = vld [vmem:[%s6] sm:$0x1]
          %v725 = vlaneseq
          %v726 = vshrl.u32 %v725, 7
          %v727 = vsub.s32 0, %v726
          %v728 = vrot.slane %v723, %v727
          %730 = vmatprep.subr.mxu0 0.0
          %731 = vmatpush1.msra.mxu0 0.0
          %732 = vmatprep.subr.mxu0 0.0
          %733 = vmatpush1.msra.mxu0 0.0
          %734 = vmatprep.subr.mxu0 0.0
          %735 = vmatpush1.msra.mxu0 0.0
          %736 = vmatprep.subr.mxu0 0.0
          %737 = vmatpush1.msra.mxu0 0.0
          %738 = vmatprep.subr.mxu0 0.0
          %739 = vmatpush1.msra.mxu0 0.0
          %740 = vmatprep.subr.mxu0 0.0
          %741 = vmatpush1.msra.mxu0 0.0
          %742 = vmatprep.subr.mxu0 0.0
          %743 = vmatpush1.msra.mxu0 0.0
          %744 = vmatprep.subr.mxu0 0.0
          %745 = vmatpush1.msra.mxu0 0.0
          %746 = vmatprep.subr.mxu0 0.0
          %747 = vmatpush1.msra.mxu0 0.0
          %748 = vmatprep.subr.mxu0 0.0
          %749 = vmatpush1.msra.mxu0 0.0
          %750 = vmatprep.subr.mxu0 0.0
          %751 = vmatpush1.msra.mxu0 0.0
          %752 = vmatprep.subr.mxu0 0.0
          %753 = vmatpush1.msra.mxu0 0.0
          %754 = vmatprep.subr.mxu0 0.0
          %755 = vmatpush1.msra.mxu0 %v722
          %756 = vmatprep.subr.mxu0 0.0
          %757 = vmatpush1.msra.mxu0 %v721
          %758 = vmatprep.subr.mxu0 0.0
          %759 = vmatpush1.msra.mxu0 %v720
          %760 = vmatprep.subr.mxu0 0.0
          %761 = vmatpush1.msra.mxu0 %v719
          %762 = vmatprep.subr.mxu0 0.0
          %763 = vmatpush2.msra.mxu0 0.0
          %764 = vmatprep.subr.mxu0 0.0
          %765 = vmatpush2.msra.mxu0 0.0
          %766 = vmatprep.subr.mxu0 0.0
          %767 = vmatpush2.msra.mxu0 0.0
          %768 = vmatprep.subr.mxu0 0.0
          %769 = vmatpush2.msra.mxu0 0.0
          %770 = vmatprep.subr.mxu0 0.0
          %771 = vmatpush2.msra.mxu0 0.0
          %772 = vmatprep.subr.mxu0 0.0
          %773 = vmatpush2.msra.mxu0 0.0
          %774 = vmatprep.subr.mxu0 0.0
          %775 = vmatpush2.msra.mxu0 0.0
          %776 = vmatprep.subr.mxu0 0.0
          %777 = vmatpush2.msra.mxu0 0.0
          %778 = vmatprep.subr.mxu0 0.0
          %779 = vmatpush2.msra.mxu0 0.0
          %780 = vmatprep.subr.mxu0 0.0
          %781 = vmatpush2.msra.mxu0 0.0
          %782 = vmatprep.subr.mxu0 0.0
          %783 = vmatpush2.msra.mxu0 0.0
          %784 = vmatprep.subr.mxu0 0.0
          %785 = vmatpush2.msra.mxu0 0.0
          %786 = vmatprep.subr.mxu0 0.0
          %787 = vmatpush2.msra.mxu0 0.0
          %788 = vmatprep.subr.mxu0 0.0
          %789 = vmatpush2.msra.mxu0 0.0
          %790 = vmatprep.subr.mxu0 0.0
          %791 = vmatpush2.msra.mxu0 0.0
          %792 = vmatprep.subr.mxu0 0.0
          %793 = vmatpush2.msra.mxu0 0.0
          %794 = vmatprep.mubr.f32.mxu0 0.0
          %795 = vmatmul.mubr.f32.gmra.mxu0 %v647
          %v796 = vpop.f32.mrf.mxu0
          %v797 = vadd.f32 %v728, %v796
          %v798 = vpop.f32.mrf.mxu0
          %799 = vdwg.mxu0
          %v800 = vld [vmem:[%s3] sm:$0xff]
          %v801 = vld [vmem:[%s3 + $0x8] sm:$0xff]
          %v802 = vld [vmem:[%s3 + $0x10] sm:$0xff]
          %v803 = vld [vmem:[%s3 + $0x18] sm:$0xff]
          %v804 = vld [vmem:[%s7] sm:$0x1]
          %v806 = vlaneseq
          %v807 = vshrl.u32 %v806, 7
          %v808 = vsub.s32 0, %v807
          %v809 = vrot.slane %v804, %v808
          %811 = vmatprep.subr.mxu0 0.0
          %812 = vmatpush1.msra.mxu0 0.0
          %813 = vmatprep.subr.mxu0 0.0
          %814 = vmatpush1.msra.mxu0 0.0
          %815 = vmatprep.subr.mxu0 0.0
          %816 = vmatpush1.msra.mxu0 0.0
          %817 = vmatprep.subr.mxu0 0.0
          %818 = vmatpush1.msra.mxu0 0.0
          %819 = vmatprep.subr.mxu0 0.0
          %820 = vmatpush1.msra.mxu0 0.0
          %821 = vmatprep.subr.mxu0 0.0
          %822 = vmatpush1.msra.mxu0 0.0
          %823 = vmatprep.subr.mxu0 0.0
          %824 = vmatpush1.msra.mxu0 0.0
          %825 = vmatprep.subr.mxu0 0.0
          %826 = vmatpush1.msra.mxu0 0.0
          %827 = vmatprep.subr.mxu0 0.0
          %828 = vmatpush1.msra.mxu0 0.0
          %829 = vmatprep.subr.mxu0 0.0
          %830 = vmatpush1.msra.mxu0 0.0
          %831 = vmatprep.subr.mxu0 0.0
          %832 = vmatpush1.msra.mxu0 0.0
          %833 = vmatprep.subr.mxu0 0.0
          %834 = vmatpush1.msra.mxu0 0.0
          %835 = vmatprep.subr.mxu0 0.0
          %836 = vmatpush1.msra.mxu0 %v803
          %837 = vmatprep.subr.mxu0 0.0
          %838 = vmatpush1.msra.mxu0 %v802
          %839 = vmatprep.subr.mxu0 0.0
          %840 = vmatpush1.msra.mxu0 %v801
          %841 = vmatprep.subr.mxu0 0.0
          %842 = vmatpush1.msra.mxu0 %v800
          %843 = vmatprep.subr.mxu0 0.0
          %844 = vmatpush2.msra.mxu0 0.0
          %845 = vmatprep.subr.mxu0 0.0
          %846 = vmatpush2.msra.mxu0 0.0
          %847 = vmatprep.subr.mxu0 0.0
          %848 = vmatpush2.msra.mxu0 0.0
          %849 = vmatprep.subr.mxu0 0.0
          %850 = vmatpush2.msra.mxu0 0.0
          %851 = vmatprep.subr.mxu0 0.0
          %852 = vmatpush2.msra.mxu0 0.0
          %853 = vmatprep.subr.mxu0 0.0
          %854 = vmatpush2.msra.mxu0 0.0
          %855 = vmatprep.subr.mxu0 0.0
          %856 = vmatpush2.msra.mxu0 0.0
          %857 = vmatprep.subr.mxu0 0.0
          %858 = vmatpush2.msra.mxu0 0.0
          %859 = vmatprep.subr.mxu0 0.0
          %860 = vmatpush2.msra.mxu0 0.0
          %861 = vmatprep.subr.mxu0 0.0
          %862 = vmatpush2.msra.mxu0 0.0
          %863 = vmatprep.subr.mxu0 0.0
          %864 = vmatpush2.msra.mxu0 0.0
          %865 = vmatprep.subr.mxu0 0.0
          %866 = vmatpush2.msra.mxu0 0.0
          %867 = vmatprep.subr.mxu0 0.0
          %868 = vmatpush2.msra.mxu0 0.0
          %869 = vmatprep.subr.mxu0 0.0
          %870 = vmatpush2.msra.mxu0 0.0
          %871 = vmatprep.subr.mxu0 0.0
          %872 = vmatpush2.msra.mxu0 0.0
          %873 = vmatprep.subr.mxu0 0.0
          %874 = vmatpush2.msra.mxu0 0.0
          %875 = vmatprep.mubr.f32.mxu0 0.0
          %876 = vmatmul.mubr.f32.gmra.mxu0 %v647
          %v877 = vpop.f32.mrf.mxu0
          %v878 = vadd.f32 %v809, %v877
          %v879 = vpop.f32.mrf.mxu0
          %880 = vdwg.mxu0
          %vm881 = vcmask 64512
          %v883 = vsel %vm881, %v716, 0
          %v886 = vsel %vm881, %v797, 0
          %888 = vmatprep.subr.mxu0 0.0
          %889 = vmatpush1.xpose.msra.mxu0 0.0
          %890 = vmatprep.subr.mxu0 0.0
          %891 = vmatpush1.xpose.msra.mxu0 0.0
          %892 = vmatprep.subr.mxu0 0.0
          %893 = vmatpush1.xpose.msra.mxu0 0.0
          %894 = vmatprep.subr.mxu0 0.0
          %895 = vmatpush1.xpose.msra.mxu0 0.0
          %896 = vmatprep.subr.mxu0 0.0
          %897 = vmatpush1.xpose.msra.mxu0 0.0
          %898 = vmatprep.subr.mxu0 0.0
          %899 = vmatpush1.xpose.msra.mxu0 0.0
          %900 = vmatprep.subr.mxu0 0.0
          %901 = vmatpush1.xpose.msra.mxu0 0.0
          %902 = vmatprep.subr.mxu0 0.0
          %903 = vmatpush1.xpose.msra.mxu0 0.0
          %904 = vmatprep.subr.mxu0 0.0
          %905 = vmatpush1.xpose.msra.mxu0 0.0
          %906 = vmatprep.subr.mxu0 0.0
          %907 = vmatpush1.xpose.msra.mxu0 0.0
          %908 = vmatprep.subr.mxu0 0.0
          %909 = vmatpush1.xpose.msra.mxu0 0.0
          %910 = vmatprep.subr.mxu0 0.0
          %911 = vmatpush1.xpose.msra.mxu0 0.0
          %912 = vmatprep.subr.mxu0 0.0
          %913 = vmatpush1.xpose.msra.mxu0 0.0
          %914 = vmatprep.subr.mxu0 0.0
          %915 = vmatpush1.xpose.msra.mxu0 0.0
          %916 = vmatprep.subr.mxu0 0.0
          %917 = vmatpush1.xpose.msra.mxu0 0.0
          %918 = vmatprep.subr.mxu0 0.0
          %919 = vmatpush1.xpose.msra.mxu0 %v886
          %920 = vmatprep.subr.mxu0 0.0
          %921 = vmatpush2.xpose.msra.mxu0 0.0
          %922 = vmatprep.subr.mxu0 0.0
          %923 = vmatpush2.xpose.msra.mxu0 0.0
          %924 = vmatprep.subr.mxu0 0.0
          %925 = vmatpush2.xpose.msra.mxu0 0.0
          %926 = vmatprep.subr.mxu0 0.0
          %927 = vmatpush2.xpose.msra.mxu0 0.0
          %928 = vmatprep.subr.mxu0 0.0
          %929 = vmatpush2.xpose.msra.mxu0 0.0
          %930 = vmatprep.subr.mxu0 0.0
          %931 = vmatpush2.xpose.msra.mxu0 0.0
          %932 = vmatprep.subr.mxu0 0.0
          %933 = vmatpush2.xpose.msra.mxu0 0.0
          %934 = vmatprep.subr.mxu0 0.0
          %935 = vmatpush2.xpose.msra.mxu0 0.0
          %936 = vmatprep.subr.mxu0 0.0
          %937 = vmatpush2.xpose.msra.mxu0 0.0
          %938 = vmatprep.subr.mxu0 0.0
          %939 = vmatpush2.xpose.msra.mxu0 0.0
          %940 = vmatprep.subr.mxu0 0.0
          %941 = vmatpush2.xpose.msra.mxu0 0.0
          %942 = vmatprep.subr.mxu0 0.0
          %943 = vmatpush2.xpose.msra.mxu0 0.0
          %944 = vmatprep.subr.mxu0 0.0
          %945 = vmatpush2.xpose.msra.mxu0 0.0
          %946 = vmatprep.subr.mxu0 0.0
          %947 = vmatpush2.xpose.msra.mxu0 0.0
          %948 = vmatprep.subr.mxu0 0.0
          %949 = vmatpush2.xpose.msra.mxu0 0.0
          %950 = vmatprep.subr.mxu0 0.0
          %951 = vmatpush2.xpose.msra.mxu0 0.0
          %952 = vmatprep.mubr.f32.mxu0 0.0
          %953 = vmatmul.mubr.f32.gmra.mxu0 %v883
          %v954 = vpop.f32.mrf.mxu0
          %v955 = vadd.f32 0.0, %v954
          %v956 = vpop.f32.mrf.mxu0
          %957 = vdwg.mxu0
          %v958 = vsel %vm881, %v955, -inf
          %959 = vmax.xlane.f32.xlu0 %v958
          %v960 = vpop.xlane.xlu0 %959
          %v961 = vsub.f32 %v955, %v960
          %v962 = vmul.f32 %v961, 1.442695
          %v963 = vpow.pop %v962
          %v964 = vsel %vm881, %v963, 0.0
          %965 = vadd.xlane.f32.xlu0 %v964
          %v966 = vpop.xlane.xlu0 %965
          %v968 = vsel %vm881, %v963, 0
          %970 = vmatprep.subr.mxu0 0.0
          %971 = vmatpush1.msra.mxu0 0.0
          %972 = vmatprep.subr.mxu0 0.0
          %973 = vmatpush1.msra.mxu0 0.0
          %974 = vmatprep.subr.mxu0 0.0
          %975 = vmatpush1.msra.mxu0 0.0
          %976 = vmatprep.subr.mxu0 0.0
          %977 = vmatpush1.msra.mxu0 0.0
          %978 = vmatprep.subr.mxu0 0.0
          %979 = vmatpush1.msra.mxu0 0.0
          %980 = vmatprep.subr.mxu0 0.0
          %981 = vmatpush1.msra.mxu0 0.0
          %982 = vmatprep.subr.mxu0 0.0
          %983 = vmatpush1.msra.mxu0 0.0
          %984 = vmatprep.subr.mxu0 0.0
          %985 = vmatpush1.msra.mxu0 0.0
          %986 = vmatprep.subr.mxu0 0.0
          %987 = vmatpush1.msra.mxu0 0.0
          %988 = vmatprep.subr.mxu0 0.0
          %989 = vmatpush1.msra.mxu0 0.0
          %990 = vmatprep.subr.mxu0 0.0
          %991 = vmatpush1.msra.mxu0 0.0
          %992 = vmatprep.subr.mxu0 0.0
          %993 = vmatpush1.msra.mxu0 0.0
          %994 = vmatprep.subr.mxu0 0.0
          %995 = vmatpush1.msra.mxu0 0.0
          %996 = vmatprep.subr.mxu0 0.0
          %997 = vmatpush1.msra.mxu0 0.0
          %998 = vmatprep.subr.mxu0 0.0
          %999 = vmatpush1.msra.mxu0 0.0
          %1000 = vmatprep.subr.mxu0 0.0
          %1001 = vmatpush1.msra.mxu0 %v878
          %1002 = vmatprep.subr.mxu0 0.0
          %1003 = vmatpush2.msra.mxu0 0.0
          %1004 = vmatprep.subr.mxu0 0.0
          %1005 = vmatpush2.msra.mxu0 0.0
          %1006 = vmatprep.subr.mxu0 0.0
          %1007 = vmatpush2.msra.mxu0 0.0
          %1008 = vmatprep.subr.mxu0 0.0
          %1009 = vmatpush2.msra.mxu0 0.0
          %1010 = vmatprep.subr.mxu0 0.0
          %1011 = vmatpush2.msra.mxu0 0.0
          %1012 = vmatprep.subr.mxu0 0.0
          %1013 = vmatpush2.msra.mxu0 0.0
          %1014 = vmatprep.subr.mxu0 0.0
          %1015 = vmatpush2.msra.mxu0 0.0
          %1016 = vmatprep.subr.mxu0 0.0
          %1017 = vmatpush2.msra.mxu0 0.0
          %1018 = vmatprep.subr.mxu0 0.0
          %1019 = vmatpush2.msra.mxu0 0.0
          %1020 = vmatprep.subr.mxu0 0.0
          %1021 = vmatpush2.msra.mxu0 0.0
          %1022 = vmatprep.subr.mxu0 0.0
          %1023 = vmatpush2.msra.mxu0 0.0
          %1024 = vmatprep.subr.mxu0 0.0
          %1025 = vmatpush2.msra.mxu0 0.0
          %1026 = vmatprep.subr.mxu0 0.0
          %1027 = vmatpush2.msra.mxu0 0.0
          %1028 = vmatprep.subr.mxu0 0.0
          %1029 = vmatpush2.msra.mxu0 0.0
          %1030 = vmatprep.subr.mxu0 0.0
          %1031 = vmatpush2.msra.mxu0 0.0
          %1032 = vmatprep.subr.mxu0 0.0
          %1033 = vmatpush2.msra.mxu0 0.0
          %1034 = vmatprep.mubr.f32.mxu0 0.0
          %1035 = vmatmul.mubr.f32.gmra.mxu0 %v968
          %v1036 = vpop.f32.mrf.mxu0
          %v1037 = vadd.f32 0.0, %v1036
          %v1038 = vpop.f32.mrf.mxu0
          %1039 = vdwg.mxu0
          %v1040 = vrcp.pop %v966
          %v1041 = vmul.f32 %v1037, %v1040
          %1042 = vrot.lane.b32.xlu0 %v716, 120
          %v1043 = vpop.permute.xlu0 %1042
          %1044 = vrot.lane.b32.xlu0 %v797, 120
          %v1045 = vpop.permute.xlu0 %1044
          %v1046 = vsel %vm881, %v1043, 0
          %v1048 = vsel %vm881, %v1045, 0
          %1050 = vmatprep.subr.mxu0 0.0
          %1051 = vmatpush1.xpose.msra.mxu0 0.0
          %1052 = vmatprep.subr.mxu0 0.0
          %1053 = vmatpush1.xpose.msra.mxu0 0.0
          %1054 = vmatprep.subr.mxu0 0.0
          %1055 = vmatpush1.xpose.msra.mxu0 0.0
          %1056 = vmatprep.subr.mxu0 0.0
          %1057 = vmatpush1.xpose.msra.mxu0 0.0
          %1058 = vmatprep.subr.mxu0 0.0
          %1059 = vmatpush1.xpose.msra.mxu0 0.0
          %1060 = vmatprep.subr.mxu0 0.0
          %1061 = vmatpush1.xpose.msra.mxu0 0.0
          %1062 = vmatprep.subr.mxu0 0.0
          %1063 = vmatpush1.xpose.msra.mxu0 0.0
          %1064 = vmatprep.subr.mxu0 0.0
          %1065 = vmatpush1.xpose.msra.mxu0 0.0
          %1066 = vmatprep.subr.mxu0 0.0
          %1067 = vmatpush1.xpose.msra.mxu0 0.0
          %1068 = vmatprep.subr.mxu0 0.0
          %1069 = vmatpush1.xpose.msra.mxu0 0.0
          %1070 = vmatprep.subr.mxu0 0.0
          %1071 = vmatpush1.xpose.msra.mxu0 0.0
          %1072 = vmatprep.subr.mxu0 0.0
          %1073 = vmatpush1.xpose.msra.mxu0 0.0
          %1074 = vmatprep.subr.mxu0 0.0
          %1075 = vmatpush1.xpose.msra.mxu0 0.0
          %1076 = vmatprep.subr.mxu0 0.0
          %1077 = vmatpush1.xpose.msra.mxu0 0.0
          %1078 = vmatprep.subr.mxu0 0.0
          %1079 = vmatpush1.xpose.msra.mxu0 0.0
          %1080 = vmatprep.subr.mxu0 0.0
          %1081 = vmatpush1.xpose.msra.mxu0 %v1048
          %1082 = vmatprep.subr.mxu0 0.0
          %1083 = vmatpush2.xpose.msra.mxu0 0.0
          %1084 = vmatprep.subr.mxu0 0.0
          %1085 = vmatpush2.xpose.msra.mxu0 0.0
          %1086 = vmatprep.subr.mxu0 0.0
          %1087 = vmatpush2.xpose.msra.mxu0 0.0
          %1088 = vmatprep.subr.mxu0 0.0
          %1089 = vmatpush2.xpose.msra.mxu0 0.0
          %1090 = vmatprep.subr.mxu0 0.0
          %1091 = vmatpush2.xpose.msra.mxu0 0.0
          %1092 = vmatprep.subr.mxu0 0.0
          %1093 = vmatpush2.xpose.msra.mxu0 0.0
          %1094 = vmatprep.subr.mxu0 0.0
          %1095 = vmatpush2.xpose.msra.mxu0 0.0
          %1096 = vmatprep.subr.mxu0 0.0
          %1097 = vmatpush2.xpose.msra.mxu0 0.0
          %1098 = vmatprep.subr.mxu0 0.0
          %1099 = vmatpush2.xpose.msra.mxu0 0.0
          %1100 = vmatprep.subr.mxu0 0.0
          %1101 = vmatpush2.xpose.msra.mxu0 0.0
          %1102 = vmatprep.subr.mxu0 0.0
          %1103 = vmatpush2.xpose.msra.mxu0 0.0
          %1104 = vmatprep.subr.mxu0 0.0
          %1105 = vmatpush2.xpose.msra.mxu0 0.0
          %1106 = vmatprep.subr.mxu0 0.0
          %1107 = vmatpush2.xpose.msra.mxu0 0.0
          %1108 = vmatprep.subr.mxu0 0.0
          %1109 = vmatpush2.xpose.msra.mxu0 0.0
          %1110 = vmatprep.subr.mxu0 0.0
          %1111 = vmatpush2.xpose.msra.mxu0 0.0
          %1112 = vmatprep.subr.mxu0 0.0
          %1113 = vmatpush2.xpose.msra.mxu0 0.0
          %1114 = vmatprep.mubr.f32.mxu0 0.0
          %1115 = vmatmul.mubr.f32.gmra.mxu0 %v1046
          %v1116 = vpop.f32.mrf.mxu0
          %v1117 = vadd.f32 0.0, %v1116
          %v1118 = vpop.f32.mrf.mxu0
          %1119 = vdwg.mxu0
          %v1120 = vsel %vm881, %v1117, -inf
          %1121 = vmax.xlane.f32.xlu0 %v1120
          %v1122 = vpop.xlane.xlu0 %1121
          %v1123 = vsub.f32 %v1117, %v1122
          %v1124 = vmul.f32 %v1123, 1.442695
          %v1125 = vpow.pop %v1124
          %v1126 = vsel %vm881, %v1125, 0.0
          %1127 = vadd.xlane.f32.xlu0 %v1126
          %v1128 = vpop.xlane.xlu0 %1127
          %1130 = vrot.lane.b32.xlu0 %v878, 120
          %v1131 = vpop.permute.xlu0 %1130
          %v1134 = vsel %vm881, %v1125, 0
          %1136 = vmatprep.subr.mxu0 0.0
          %1137 = vmatpush1.msra.mxu0 0.0
          %1138 = vmatprep.subr.mxu0 0.0
          %1139 = vmatpush1.msra.mxu0 0.0
          %1140 = vmatprep.subr.mxu0 0.0
          %1141 = vmatpush1.msra.mxu0 0.0
          %1142 = vmatprep.subr.mxu0 0.0
          %1143 = vmatpush1.msra.mxu0 0.0
          %1144 = vmatprep.subr.mxu0 0.0
          %1145 = vmatpush1.msra.mxu0 0.0
          %1146 = vmatprep.subr.mxu0 0.0
          %1147 = vmatpush1.msra.mxu0 0.0
          %1148 = vmatprep.subr.mxu0 0.0
          %1149 = vmatpush1.msra.mxu0 0.0
          %1150 = vmatprep.subr.mxu0 0.0
          %1151 = vmatpush1.msra.mxu0 0.0
          %1152 = vmatprep.subr.mxu0 0.0
          %1153 = vmatpush1.msra.mxu0 0.0
          %1154 = vmatprep.subr.mxu0 0.0
          %1155 = vmatpush1.msra.mxu0 0.0
          %1156 = vmatprep.subr.mxu0 0.0
          %1157 = vmatpush1.msra.mxu0 0.0
          %1158 = vmatprep.subr.mxu0 0.0
          %1159 = vmatpush1.msra.mxu0 0.0
          %1160 = vmatprep.subr.mxu0 0.0
          %1161 = vmatpush1.msra.mxu0 0.0
          %1162 = vmatprep.subr.mxu0 0.0
          %1163 = vmatpush1.msra.mxu0 0.0
          %1164 = vmatprep.subr.mxu0 0.0
          %1165 = vmatpush1.msra.mxu0 0.0
          %1166 = vmatprep.subr.mxu0 0.0
          %1167 = vmatpush1.msra.mxu0 %v1131
          %1168 = vmatprep.subr.mxu0 0.0
          %1169 = vmatpush2.msra.mxu0 0.0
          %1170 = vmatprep.subr.mxu0 0.0
          %1171 = vmatpush2.msra.mxu0 0.0
          %1172 = vmatprep.subr.mxu0 0.0
          %1173 = vmatpush2.msra.mxu0 0.0
          %1174 = vmatprep.subr.mxu0 0.0
          %1175 = vmatpush2.msra.mxu0 0.0
          %1176 = vmatprep.subr.mxu0 0.0
          %1177 = vmatpush2.msra.mxu0 0.0
          %1178 = vmatprep.subr.mxu0 0.0
          %1179 = vmatpush2.msra.mxu0 0.0
          %1180 = vmatprep.subr.mxu0 0.0
          %1181 = vmatpush2.msra.mxu0 0.0
          %1182 = vmatprep.subr.mxu0 0.0
          %1183 = vmatpush2.msra.mxu0 0.0
          %1184 = vmatprep.subr.mxu0 0.0
          %1185 = vmatpush2.msra.mxu0 0.0
          %1186 = vmatprep.subr.mxu0 0.0
          %1187 = vmatpush2.msra.mxu0 0.0
          %1188 = vmatprep.subr.mxu0 0.0
          %1189 = vmatpush2.msra.mxu0 0.0
          %1190 = vmatprep.subr.mxu0 0.0
          %1191 = vmatpush2.msra.mxu0 0.0
          %1192 = vmatprep.subr.mxu0 0.0
          %1193 = vmatpush2.msra.mxu0 0.0
          %1194 = vmatprep.subr.mxu0 0.0
          %1195 = vmatpush2.msra.mxu0 0.0
          %1196 = vmatprep.subr.mxu0 0.0
          %1197 = vmatpush2.msra.mxu0 0.0
          %1198 = vmatprep.subr.mxu0 0.0
          %1199 = vmatpush2.msra.mxu0 0.0
          %1200 = vmatprep.mubr.f32.mxu0 0.0
          %1201 = vmatmul.mubr.f32.gmra.mxu0 %v1134
          %v1202 = vpop.f32.mrf.mxu0
          %v1203 = vadd.f32 0.0, %v1202
          %v1204 = vpop.f32.mrf.mxu0
          %1205 = vdwg.mxu0
          %v1206 = vrcp.pop %v1128
          %v1207 = vmul.f32 %v1203, %v1206
          %1208 = vrot.lane.b32.xlu0 %v716, 112
          %v1209 = vpop.permute.xlu0 %1208
          %1210 = vrot.lane.b32.xlu0 %v797, 112
          %v1211 = vpop.permute.xlu0 %1210
          %v1212 = vsel %vm881, %v1209, 0
          %v1214 = vsel %vm881, %v1211, 0
          %1216 = vmatprep.subr.mxu0 0.0
          %1217 = vmatpush1.xpose.msra.mxu0 0.0
          %1218 = vmatprep.subr.mxu0 0.0
          %1219 = vmatpush1.xpose.msra.mxu0 0.0
          %1220 = vmatprep.subr.mxu0 0.0
          %1221 = vmatpush1.xpose.msra.mxu0 0.0
          %1222 = vmatprep.subr.mxu0 0.0
          %1223 = vmatpush1.xpose.msra.mxu0 0.0
          %1224 = vmatprep.subr.mxu0 0.0
          %1225 = vmatpush1.xpose.msra.mxu0 0.0
          %1226 = vmatprep.subr.mxu0 0.0
          %1227 = vmatpush1.xpose.msra.mxu0 0.0
          %1228 = vmatprep.subr.mxu0 0.0
          %1229 = vmatpush1.xpose.msra.mxu0 0.0
          %1230 = vmatprep.subr.mxu0 0.0
          %1231 = vmatpush1.xpose.msra.mxu0 0.0
          %1232 = vmatprep.subr.mxu0 0.0
          %1233 = vmatpush1.xpose.msra.mxu0 0.0
          %1234 = vmatprep.subr.mxu0 0.0
          %1235 = vmatpush1.xpose.msra.mxu0 0.0
          %1236 = vmatprep.subr.mxu0 0.0
          %1237 = vmatpush1.xpose.msra.mxu0 0.0
          %1238 = vmatprep.subr.mxu0 0.0
          %1239 = vmatpush1.xpose.msra.mxu0 0.0
          %1240 = vmatprep.subr.mxu0 0.0
          %1241 = vmatpush1.xpose.msra.mxu0 0.0
          %1242 = vmatprep.subr.mxu0 0.0
          %1243 = vmatpush1.xpose.msra.mxu0 0.0
          %1244 = vmatprep.subr.mxu0 0.0
          %1245 = vmatpush1.xpose.msra.mxu0 0.0
          %1246 = vmatprep.subr.mxu0 0.0
          %1247 = vmatpush1.xpose.msra.mxu0 %v1214
          %1248 = vmatprep.subr.mxu0 0.0
          %1249 = vmatpush2.xpose.msra.mxu0 0.0
          %1250 = vmatprep.subr.mxu0 0.0
          %1251 = vmatpush2.xpose.msra.mxu0 0.0
          %1252 = vmatprep.subr.mxu0 0.0
          %1253 = vmatpush2.xpose.msra.mxu0 0.0
          %1254 = vmatprep.subr.mxu0 0.0
          %1255 = vmatpush2.xpose.msra.mxu0 0.0
          %1256 = vmatprep.subr.mxu0 0.0
          %1257 = vmatpush2.xpose.msra.mxu0 0.0
          %1258 = vmatprep.subr.mxu0 0.0
          %1259 = vmatpush2.xpose.msra.mxu0 0.0
          %1260 = vmatprep.subr.mxu0 0.0
          %1261 = vmatpush2.xpose.msra.mxu0 0.0
          %1262 = vmatprep.subr.mxu0 0.0
          %1263 = vmatpush2.xpose.msra.mxu0 0.0
          %1264 = vmatprep.subr.mxu0 0.0
          %1265 = vmatpush2.xpose.msra.mxu0 0.0
          %1266 = vmatprep.subr.mxu0 0.0
          %1267 = vmatpush2.xpose.msra.mxu0 0.0
          %1268 = vmatprep.subr.mxu0 0.0
          %1269 = vmatpush2.xpose.msra.mxu0 0.0
          %1270 = vmatprep.subr.mxu0 0.0
          %1271 = vmatpush2.xpose.msra.mxu0 0.0
          %1272 = vmatprep.subr.mxu0 0.0
          %1273 = vmatpush2.xpose.msra.mxu0 0.0
          %1274 = vmatprep.subr.mxu0 0.0
          %1275 = vmatpush2.xpose.msra.mxu0 0.0
          %1276 = vmatprep.subr.mxu0 0.0
          %1277 = vmatpush2.xpose.msra.mxu0 0.0
          %1278 = vmatprep.subr.mxu0 0.0
          %1279 = vmatpush2.xpose.msra.mxu0 0.0
          %1280 = vmatprep.mubr.f32.mxu0 0.0
          %1281 = vmatmul.mubr.f32.gmra.mxu0 %v1212
          %v1282 = vpop.f32.mrf.mxu0
          %v1283 = vadd.f32 0.0, %v1282
          %v1284 = vpop.f32.mrf.mxu0
          %1285 = vdwg.mxu0
          %v1286 = vsel %vm881, %v1283, -inf
          %1287 = vmax.xlane.f32.xlu0 %v1286
          %v1288 = vpop.xlane.xlu0 %1287
          %v1289 = vsub.f32 %v1283, %v1288
          %v1290 = vmul.f32 %v1289, 1.442695
          %v1291 = vpow.pop %v1290
          %v1292 = vsel %vm881, %v1291, 0.0
          %1293 = vadd.xlane.f32.xlu0 %v1292
          %v1294 = vpop.xlane.xlu0 %1293
          %1295 = vrot.lane.b32.xlu0 %v878, 112
          %v1296 = vpop.permute.xlu0 %1295
          %v1299 = vsel %vm881, %v1291, 0
          %1301 = vmatprep.subr.mxu0 0.0
          %1302 = vmatpush1.msra.mxu0 0.0
          %1303 = vmatprep.subr.mxu0 0.0
          %1304 = vmatpush1.msra.mxu0 0.0
          %1305 = vmatprep.subr.mxu0 0.0
          %1306 = vmatpush1.msra.mxu0 0.0
          %1307 = vmatprep.subr.mxu0 0.0
          %1308 = vmatpush1.msra.mxu0 0.0
          %1309 = vmatprep.subr.mxu0 0.0
          %1310 = vmatpush1.msra.mxu0 0.0
          %1311 = vmatprep.subr.mxu0 0.0
          %1312 = vmatpush1.msra.mxu0 0.0
          %1313 = vmatprep.subr.mxu0 0.0
          %1314 = vmatpush1.msra.mxu0 0.0
          %1315 = vmatprep.subr.mxu0 0.0
          %1316 = vmatpush1.msra.mxu0 0.0
          %1317 = vmatprep.subr.mxu0 0.0
          %1318 = vmatpush1.msra.mxu0 0.0
          %1319 = vmatprep.subr.mxu0 0.0
          %1320 = vmatpush1.msra.mxu0 0.0
          %1321 = vmatprep.subr.mxu0 0.0
          %1322 = vmatpush1.msra.mxu0 0.0
          %1323 = vmatprep.subr.mxu0 0.0
          %1324 = vmatpush1.msra.mxu0 0.0
          %1325 = vmatprep.subr.mxu0 0.0
          %1326 = vmatpush1.msra.mxu0 0.0
          %1327 = vmatprep.subr.mxu0 0.0
          %1328 = vmatpush1.msra.mxu0 0.0
          %1329 = vmatprep.subr.mxu0 0.0
          %1330 = vmatpush1.msra.mxu0 0.0
          %1331 = vmatprep.subr.mxu0 0.0
          %1332 = vmatpush1.msra.mxu0 %v1296
          %1333 = vmatprep.subr.mxu0 0.0
          %1334 = vmatpush2.msra.mxu0 0.0
          %1335 = vmatprep.subr.mxu0 0.0
          %1336 = vmatpush2.msra.mxu0 0.0
          %1337 = vmatprep.subr.mxu0 0.0
          %1338 = vmatpush2.msra.mxu0 0.0
          %1339 = vmatprep.subr.mxu0 0.0
          %1340 = vmatpush2.msra.mxu0 0.0
          %1341 = vmatprep.subr.mxu0 0.0
          %1342 = vmatpush2.msra.mxu0 0.0
          %1343 = vmatprep.subr.mxu0 0.0
          %1344 = vmatpush2.msra.mxu0 0.0
          %1345 = vmatprep.subr.mxu0 0.0
          %1346 = vmatpush2.msra.mxu0 0.0
          %1347 = vmatprep.subr.mxu0 0.0
          %1348 = vmatpush2.msra.mxu0 0.0
          %1349 = vmatprep.subr.mxu0 0.0
          %1350 = vmatpush2.msra.mxu0 0.0
          %1351 = vmatprep.subr.mxu0 0.0
          %1352 = vmatpush2.msra.mxu0 0.0
          %1353 = vmatprep.subr.mxu0 0.0
          %1354 = vmatpush2.msra.mxu0 0.0
          %1355 = vmatprep.subr.mxu0 0.0
          %1356 = vmatpush2.msra.mxu0 0.0
          %1357 = vmatprep.subr.mxu0 0.0
          %1358 = vmatpush2.msra.mxu0 0.0
          %1359 = vmatprep.subr.mxu0 0.0
          %1360 = vmatpush2.msra.mxu0 0.0
          %1361 = vmatprep.subr.mxu0 0.0
          %1362 = vmatpush2.msra.mxu0 0.0
          %1363 = vmatprep.subr.mxu0 0.0
          %1364 = vmatpush2.msra.mxu0 0.0
          %1365 = vmatprep.mubr.f32.mxu0 0.0
          %1366 = vmatmul.mubr.f32.gmra.mxu0 %v1299
          %v1367 = vpop.f32.mrf.mxu0
          %v1368 = vadd.f32 0.0, %v1367
          %v1369 = vpop.f32.mrf.mxu0
          %1370 = vdwg.mxu0
          %v1371 = vrcp.pop %v1294
          %v1372 = vmul.f32 %v1368, %v1371
          %1373 = vrot.lane.b32.xlu0 %v716, 104
          %v1374 = vpop.permute.xlu0 %1373
          %1375 = vrot.lane.b32.xlu0 %v797, 104
          %v1376 = vpop.permute.xlu0 %1375
          %v1377 = vsel %vm881, %v1374, 0
          %v1379 = vsel %vm881, %v1376, 0
          %1381 = vmatprep.subr.mxu0 0.0
          %1382 = vmatpush1.xpose.msra.mxu0 0.0
          %1383 = vmatprep.subr.mxu0 0.0
          %1384 = vmatpush1.xpose.msra.mxu0 0.0
          %1385 = vmatprep.subr.mxu0 0.0
          %1386 = vmatpush1.xpose.msra.mxu0 0.0
          %1387 = vmatprep.subr.mxu0 0.0
          %1388 = vmatpush1.xpose.msra.mxu0 0.0
          %1389 = vmatprep.subr.mxu0 0.0
          %1390 = vmatpush1.xpose.msra.mxu0 0.0
          %1391 = vmatprep.subr.mxu0 0.0
          %1392 = vmatpush1.xpose.msra.mxu0 0.0
          %1393 = vmatprep.subr.mxu0 0.0
          %1394 = vmatpush1.xpose.msra.mxu0 0.0
          %1395 = vmatprep.subr.mxu0 0.0
          %1396 = vmatpush1.xpose.msra.mxu0 0.0
          %1397 = vmatprep.subr.mxu0 0.0
          %1398 = vmatpush1.xpose.msra.mxu0 0.0
          %1399 = vmatprep.subr.mxu0 0.0
          %1400 = vmatpush1.xpose.msra.mxu0 0.0
          %1401 = vmatprep.subr.mxu0 0.0
          %1402 = vmatpush1.xpose.msra.mxu0 0.0
          %1403 = vmatprep.subr.mxu0 0.0
          %1404 = vmatpush1.xpose.msra.mxu0 0.0
          %1405 = vmatprep.subr.mxu0 0.0
          %1406 = vmatpush1.xpose.msra.mxu0 0.0
          %1407 = vmatprep.subr.mxu0 0.0
          %1408 = vmatpush1.xpose.msra.mxu0 0.0
          %1409 = vmatprep.subr.mxu0 0.0
          %1410 = vmatpush1.xpose.msra.mxu0 0.0
          %1411 = vmatprep.subr.mxu0 0.0
          %1412 = vmatpush1.xpose.msra.mxu0 %v1379
          %1413 = vmatprep.subr.mxu0 0.0
          %1414 = vmatpush2.xpose.msra.mxu0 0.0
          %1415 = vmatprep.subr.mxu0 0.0
          %1416 = vmatpush2.xpose.msra.mxu0 0.0
          %1417 = vmatprep.subr.mxu0 0.0
          %1418 = vmatpush2.xpose.msra.mxu0 0.0
          %1419 = vmatprep.subr.mxu0 0.0
          %1420 = vmatpush2.xpose.msra.mxu0 0.0
          %1421 = vmatprep.subr.mxu0 0.0
          %1422 = vmatpush2.xpose.msra.mxu0 0.0
          %1423 = vmatprep.subr.mxu0 0.0
          %1424 = vmatpush2.xpose.msra.mxu0 0.0
          %1425 = vmatprep.subr.mxu0 0.0
          %1426 = vmatpush2.xpose.msra.mxu0 0.0
          %1427 = vmatprep.subr.mxu0 0.0
          %1428 = vmatpush2.xpose.msra.mxu0 0.0
          %1429 = vmatprep.subr.mxu0 0.0
          %1430 = vmatpush2.xpose.msra.mxu0 0.0
          %1431 = vmatprep.subr.mxu0 0.0
          %1432 = vmatpush2.xpose.msra.mxu0 0.0
          %1433 = vmatprep.subr.mxu0 0.0
          %1434 = vmatpush2.xpose.msra.mxu0 0.0
          %1435 = vmatprep.subr.mxu0 0.0
          %1436 = vmatpush2.xpose.msra.mxu0 0.0
          %1437 = vmatprep.subr.mxu0 0.0
          %1438 = vmatpush2.xpose.msra.mxu0 0.0
          %1439 = vmatprep.subr.mxu0 0.0
          %1440 = vmatpush2.xpose.msra.mxu0 0.0
          %1441 = vmatprep.subr.mxu0 0.0
          %1442 = vmatpush2.xpose.msra.mxu0 0.0
          %1443 = vmatprep.subr.mxu0 0.0
          %1444 = vmatpush2.xpose.msra.mxu0 0.0
          %1445 = vmatprep.mubr.f32.mxu0 0.0
          %1446 = vmatmul.mubr.f32.gmra.mxu0 %v1377
          %v1447 = vpop.f32.mrf.mxu0
          %v1448 = vadd.f32 0.0, %v1447
          %v1449 = vpop.f32.mrf.mxu0
          %1450 = vdwg.mxu0
          %v1451 = vsel %vm881, %v1448, -inf
          %1452 = vmax.xlane.f32.xlu0 %v1451
          %v1453 = vpop.xlane.xlu0 %1452
          %v1454 = vsub.f32 %v1448, %v1453
          %v1455 = vmul.f32 %v1454, 1.442695
          %v1456 = vpow.pop %v1455
          %v1457 = vsel %vm881, %v1456, 0.0
          %1458 = vadd.xlane.f32.xlu0 %v1457
          %v1459 = vpop.xlane.xlu0 %1458
          %1460 = vrot.lane.b32.xlu0 %v878, 104
          %v1461 = vpop.permute.xlu0 %1460
          %v1464 = vsel %vm881, %v1456, 0
          %1466 = vmatprep.subr.mxu0 0.0
          %1467 = vmatpush1.msra.mxu0 0.0
          %1468 = vmatprep.subr.mxu0 0.0
          %1469 = vmatpush1.msra.mxu0 0.0
          %1470 = vmatprep.subr.mxu0 0.0
          %1471 = vmatpush1.msra.mxu0 0.0
          %1472 = vmatprep.subr.mxu0 0.0
          %1473 = vmatpush1.msra.mxu0 0.0
          %1474 = vmatprep.subr.mxu0 0.0
          %1475 = vmatpush1.msra.mxu0 0.0
          %1476 = vmatprep.subr.mxu0 0.0
          %1477 = vmatpush1.msra.mxu0 0.0
          %1478 = vmatprep.subr.mxu0 0.0
          %1479 = vmatpush1.msra.mxu0 0.0
          %1480 = vmatprep.subr.mxu0 0.0
          %1481 = vmatpush1.msra.mxu0 0.0
          %1482 = vmatprep.subr.mxu0 0.0
          %1483 = vmatpush1.msra.mxu0 0.0
          %1484 = vmatprep.subr.mxu0 0.0
          %1485 = vmatpush1.msra.mxu0 0.0
          %1486 = vmatprep.subr.mxu0 0.0
          %1487 = vmatpush1.msra.mxu0 0.0
          %1488 = vmatprep.subr.mxu0 0.0
          %1489 = vmatpush1.msra.mxu0 0.0
          %1490 = vmatprep.subr.mxu0 0.0
          %1491 = vmatpush1.msra.mxu0 0.0
          %1492 = vmatprep.subr.mxu0 0.0
          %1493 = vmatpush1.msra.mxu0 0.0
          %1494 = vmatprep.subr.mxu0 0.0
          %1495 = vmatpush1.msra.mxu0 0.0
          %1496 = vmatprep.subr.mxu0 0.0
          %1497 = vmatpush1.msra.mxu0 %v1461
          %1498 = vmatprep.subr.mxu0 0.0
          %1499 = vmatpush2.msra.mxu0 0.0
          %1500 = vmatprep.subr.mxu0 0.0
          %1501 = vmatpush2.msra.mxu0 0.0
          %1502 = vmatprep.subr.mxu0 0.0
          %1503 = vmatpush2.msra.mxu0 0.0
          %1504 = vmatprep.subr.mxu0 0.0
          %1505 = vmatpush2.msra.mxu0 0.0
          %1506 = vmatprep.subr.mxu0 0.0
          %1507 = vmatpush2.msra.mxu0 0.0
          %1508 = vmatprep.subr.mxu0 0.0
          %1509 = vmatpush2.msra.mxu0 0.0
          %1510 = vmatprep.subr.mxu0 0.0
          %1511 = vmatpush2.msra.mxu0 0.0
          %1512 = vmatprep.subr.mxu0 0.0
          %1513 = vmatpush2.msra.mxu0 0.0
          %1514 = vmatprep.subr.mxu0 0.0
          %1515 = vmatpush2.msra.mxu0 0.0
          %1516 = vmatprep.subr.mxu0 0.0
          %1517 = vmatpush2.msra.mxu0 0.0
          %1518 = vmatprep.subr.mxu0 0.0
          %1519 = vmatpush2.msra.mxu0 0.0
          %1520 = vmatprep.subr.mxu0 0.0
          %1521 = vmatpush2.msra.mxu0 0.0
          %1522 = vmatprep.subr.mxu0 0.0
          %1523 = vmatpush2.msra.mxu0 0.0
          %1524 = vmatprep.subr.mxu0 0.0
          %1525 = vmatpush2.msra.mxu0 0.0
          %1526 = vmatprep.subr.mxu0 0.0
          %1527 = vmatpush2.msra.mxu0 0.0
          %1528 = vmatprep.subr.mxu0 0.0
          %1529 = vmatpush2.msra.mxu0 0.0
          %1530 = vmatprep.mubr.f32.mxu0 0.0
          %1531 = vmatmul.mubr.f32.gmra.mxu0 %v1464
          %v1532 = vpop.f32.mrf.mxu0
          %v1533 = vadd.f32 0.0, %v1532
          %v1534 = vpop.f32.mrf.mxu0
          %1535 = vdwg.mxu0
          %v1536 = vrcp.pop %v1459
          %v1537 = vmul.f32 %v1533, %v1536
          %1539 = vrot.lane.b32.xlu0 %v1207, 8
          %v1540 = vpop.permute.xlu0 %1539
          %1543 = vrot.lane.b32.xlu0 %v1372, 16
          %v1544 = vpop.permute.xlu0 %1543
          %1547 = vrot.lane.b32.xlu0 %v1537, 24
          %v1548 = vpop.permute.xlu0 %1547
          %v1550 = vsel %vm881, %v1041, %v1540
          %vm1551 = vcmask 130048
          %v1552 = vsel %vm1551, %v1550, %v1544
          %vm1553 = vcmask 195584
          %v1554 = vsel %vm1553, %v1552, %v1548
          %v1555 = vld [vmem:[%s4] sm:$0xff]
          %v1556 = vld [vmem:[%s4 + $0x8] sm:$0xff]
          %v1557 = vld [vmem:[%s4 + $0x10] sm:$0xff]
          %v1558 = vld [vmem:[%s4 + $0x18] sm:$0xff]
          %v1559 = vld [vmem:[%s8] sm:$0x1]
          %v1561 = vlaneseq
          %v1562 = vshrl.u32 %v1561, 7
          %v1563 = vsub.s32 0, %v1562
          %v1564 = vrot.slane %v1559, %v1563
          %v1567 = vsel %vm645, %v1554, 0
          %1569 = vmatprep.subr.mxu0 0.0
          %1570 = vmatpush1.msra.mxu0 0.0
          %1571 = vmatprep.subr.mxu0 0.0
          %1572 = vmatpush1.msra.mxu0 0.0
          %1573 = vmatprep.subr.mxu0 0.0
          %1574 = vmatpush1.msra.mxu0 0.0
          %1575 = vmatprep.subr.mxu0 0.0
          %1576 = vmatpush1.msra.mxu0 0.0
          %1577 = vmatprep.subr.mxu0 0.0
          %1578 = vmatpush1.msra.mxu0 0.0
          %1579 = vmatprep.subr.mxu0 0.0
          %1580 = vmatpush1.msra.mxu0 0.0
          %1581 = vmatprep.subr.mxu0 0.0
          %1582 = vmatpush1.msra.mxu0 0.0
          %1583 = vmatprep.subr.mxu0 0.0
          %1584 = vmatpush1.msra.mxu0 0.0
          %1585 = vmatprep.subr.mxu0 0.0
          %1586 = vmatpush1.msra.mxu0 0.0
          %1587 = vmatprep.subr.mxu0 0.0
          %1588 = vmatpush1.msra.mxu0 0.0
          %1589 = vmatprep.subr.mxu0 0.0
          %1590 = vmatpush1.msra.mxu0 0.0
          %1591 = vmatprep.subr.mxu0 0.0
          %1592 = vmatpush1.msra.mxu0 0.0
          %1593 = vmatprep.subr.mxu0 0.0
          %1594 = vmatpush1.msra.mxu0 %v1558
          %1595 = vmatprep.subr.mxu0 0.0
          %1596 = vmatpush1.msra.mxu0 %v1557
          %1597 = vmatprep.subr.mxu0 0.0
          %1598 = vmatpush1.msra.mxu0 %v1556
          %1599 = vmatprep.subr.mxu0 0.0
          %1600 = vmatpush1.msra.mxu0 %v1555
          %1601 = vmatprep.subr.mxu0 0.0
          %1602 = vmatpush2.msra.mxu0 0.0
          %1603 = vmatprep.subr.mxu0 0.0
          %1604 = vmatpush2.msra.mxu0 0.0
          %1605 = vmatprep.subr.mxu0 0.0
          %1606 = vmatpush2.msra.mxu0 0.0
          %1607 = vmatprep.subr.mxu0 0.0
          %1608 = vmatpush2.msra.mxu0 0.0
          %1609 = vmatprep.subr.mxu0 0.0
          %1610 = vmatpush2.msra.mxu0 0.0
          %1611 = vmatprep.subr.mxu0 0.0
          %1612 = vmatpush2.msra.mxu0 0.0
          %1613 = vmatprep.subr.mxu0 0.0
          %1614 = vmatpush2.msra.mxu0 0.0
          %1615 = vmatprep.subr.mxu0 0.0
          %1616 = vmatpush2.msra.mxu0 0.0
          %1617 = vmatprep.subr.mxu0 0.0
          %1618 = vmatpush2.msra.mxu0 0.0
          %1619 = vmatprep.subr.mxu0 0.0
          %1620 = vmatpush2.msra.mxu0 0.0
          %1621 = vmatprep.subr.mxu0 0.0
          %1622 = vmatpush2.msra.mxu0 0.0
          %1623 = vmatprep.subr.mxu0 0.0
          %1624 = vmatpush2.msra.mxu0 0.0
          %1625 = vmatprep.subr.mxu0 0.0
          %1626 = vmatpush2.msra.mxu0 0.0
          %1627 = vmatprep.subr.mxu0 0.0
          %1628 = vmatpush2.msra.mxu0 0.0
          %1629 = vmatprep.subr.mxu0 0.0
          %1630 = vmatpush2.msra.mxu0 0.0
          %1631 = vmatprep.subr.mxu0 0.0
          %1632 = vmatpush2.msra.mxu0 0.0
          %1633 = vmatprep.mubr.f32.mxu0 0.0
          %1634 = vmatmul.mubr.f32.gmra.mxu0 %v1567
          %v1635 = vpop.f32.mrf.mxu0
          %v1636 = vadd.f32 %v1564, %v1635
          %v1637 = vpop.f32.mrf.mxu0
          %1638 = vdwg.mxu0
          %v1639 = vadd.f32 %v1636, %v633
          %v1640 = vld [vmem:[%s13] sm:$0x1]
          %v1641 = vld [vmem:[%s14] sm:$0x1]
          %v1642 = vsel %vm645, %v1639, 0.0
          %1643 = vadd.xlane.f32.xlu0 %v1642
          %v1644 = vpop.xlane.xlu0 %1643
          %v1645 = vrcp.pop 32.0
          %v1646 = vmul.f32 %v1644, %v1645
          %v1647 = vsub.f32 %v1639, %v1646
          %v1648 = vmul.f32 %v1647, %v1647
          %v1649 = vsel %vm645, %v1648, 0.0
          %1650 = vadd.xlane.f32.xlu0 %v1649
          %v1651 = vpop.xlane.xlu0 %1650
          %v1652 = vmul.f32 %v1651, 0.032258064
          %v1653 = vrsqrt.pop %v1652
          %v1654 = vmul.f32 %v1652, %v1653
          %vm1655 = vcmp.eq.f32.partialorder %v1652, inf
          %v1656 = vsel %vm1655, %v1652, %v1654
          %vm1657 = vcmp.eq.f32.partialorder %v1652, 0.0
          %v1658 = vand.u32 %v1652, 2147483648
          %v1659 = vsel %vm1657, %v1658, %v1656
          %v1660 = vadd.f32 %v1659, 1e-06
          %v1661 = vrcp.pop %v1660
          %v1663 = vlaneseq
          %v1664 = vshrl.u32 %v1663, 7
          %v1665 = vsub.s32 0, %v1664
          %v1666 = vrot.slane %v1640, %v1665
          %v1668 = vmul.f32 %v1666, %v1647
          %v1669 = vmul.f32 %v1668, %v1661
          %v1671 = vlaneseq
          %v1672 = vshrl.u32 %v1671, 7
          %v1673 = vsub.s32 0, %v1672
          %v1674 = vrot.slane %v1641, %v1673
          %v1676 = vadd.f32 %v1669, %v1674
          %1677 = vst.msk [vmem:[#allocation2] sm:$0xff] %vm645, %v1676
          %1678 = vst.msk [vmem:[#allocation3] sm:$0xff] %vm645, 0.0
        $region96: #{tpu_custom_call.1} parent=87 // pred_fallthru
          _
        %v1679 = vld [vmem:[#allocation2] sm:$0xff]
        %v1680 = vld [vmem:[%s619] sm:$0xff]
        %v1681 = vld [vmem:[%s619 + $0x8] sm:$0xff]
        %v1682 = vld [vmem:[%s619 + $0x10] sm:$0xff]
        %v1683 = vld [vmem:[%s619 + $0x18] sm:$0xff]
        %v1684 = vld [vmem:[%s622] sm:$0x1]
        %v1686 = vlaneseq
        %v1687 = vshrl.u32 %v1686, 7
        %v1688 = vsub.s32 0, %v1687
        %v1689 = vrot.slane %v1684, %v1688
        %vm1691 = vcmask 261120
        %v1693 = vsel %vm1691, %v1679, 0
        %1695 = vmatprep.subr.mxu0 0.0
        %1696 = vmatpush1.msra.mxu0 0.0
        %1697 = vmatprep.subr.mxu0 0.0
        %1698 = vmatpush1.msra.mxu0 0.0
        %1699 = vmatprep.subr.mxu0 0.0
        %1700 = vmatpush1.msra.mxu0 0.0
        %1701 = vmatprep.subr.mxu0 0.0
        %1702 = vmatpush1.msra.mxu0 0.0
        %1703 = vmatprep.subr.mxu0 0.0
        %1704 = vmatpush1.msra.mxu0 0.0
        %1705 = vmatprep.subr.mxu0 0.0
        %1706 = vmatpush1.msra.mxu0 0.0
        %1707 = vmatprep.subr.mxu0 0.0
        %1708 = vmatpush1.msra.mxu0 0.0
        %1709 = vmatprep.subr.mxu0 0.0
        %1710 = vmatpush1.msra.mxu0 0.0
        %1711 = vmatprep.subr.mxu0 0.0
        %1712 = vmatpush1.msra.mxu0 0.0
        %1713 = vmatprep.subr.mxu0 0.0
        %1714 = vmatpush1.msra.mxu0 0.0
        %1715 = vmatprep.subr.mxu0 0.0
        %1716 = vmatpush1.msra.mxu0 0.0
        %1717 = vmatprep.subr.mxu0 0.0
        %1718 = vmatpush1.msra.mxu0 0.0
        %1719 = vmatprep.subr.mxu0 0.0
        %1720 = vmatpush1.msra.mxu0 %v1683
        %1721 = vmatprep.subr.mxu0 0.0
        %1722 = vmatpush1.msra.mxu0 %v1682
        %1723 = vmatprep.subr.mxu0 0.0
        %1724 = vmatpush1.msra.mxu0 %v1681
        %1725 = vmatprep.subr.mxu0 0.0
        %1726 = vmatpush1.msra.mxu0 %v1680
        %1727 = vmatprep.subr.mxu0 0.0
        %1728 = vmatpush2.msra.mxu0 0.0
        %1729 = vmatprep.subr.mxu0 0.0
        %1730 = vmatpush2.msra.mxu0 0.0
        %1731 = vmatprep.subr.mxu0 0.0
        %1732 = vmatpush2.msra.mxu0 0.0
        %1733 = vmatprep.subr.mxu0 0.0
        %1734 = vmatpush2.msra.mxu0 0.0
        %1735 = vmatprep.subr.mxu0 0.0
        %1736 = vmatpush2.msra.mxu0 0.0
        %1737 = vmatprep.subr.mxu0 0.0
        %1738 = vmatpush2.msra.mxu0 0.0
        %1739 = vmatprep.subr.mxu0 0.0
        %1740 = vmatpush2.msra.mxu0 0.0
        %1741 = vmatprep.subr.mxu0 0.0
        %1742 = vmatpush2.msra.mxu0 0.0
        %1743 = vmatprep.subr.mxu0 0.0
        %1744 = vmatpush2.msra.mxu0 0.0
        %1745 = vmatprep.subr.mxu0 0.0
        %1746 = vmatpush2.msra.mxu0 0.0
        %1747 = vmatprep.subr.mxu0 0.0
        %1748 = vmatpush2.msra.mxu0 0.0
        %1749 = vmatprep.subr.mxu0 0.0
        %1750 = vmatpush2.msra.mxu0 0.0
        %1751 = vmatprep.subr.mxu0 0.0
        %1752 = vmatpush2.msra.mxu0 0.0
        %1753 = vmatprep.subr.mxu0 0.0
        %1754 = vmatpush2.msra.mxu0 0.0
        %1755 = vmatprep.subr.mxu0 0.0
        %1756 = vmatpush2.msra.mxu0 0.0
        %1757 = vmatprep.subr.mxu0 0.0
        %1758 = vmatpush2.msra.mxu0 0.0
        %1759 = vmatprep.mubr.f32.mxu0 0.0
        %1760 = vmatmul.mubr.f32.gmra.mxu0 %v1693
        %v1761 = vpop.f32.mrf.mxu0
        %v1762 = vadd.f32 %v1689, %v1761
        %v1763 = vpop.f32.mrf.mxu0
        %1764 = vdwg.mxu0
        %v1765 = vmax.f32 %v1762, 0.0
        %v1766 = vld [vmem:[#allocation3] sm:$0xff]
        %v1767 = vld [vmem:[%s627] sm:$0xff]
        %v1768 = vld [vmem:[%s627 + $0x8] sm:$0xff]
        %v1769 = vld [vmem:[%s627 + $0x10] sm:$0xff]
        %v1770 = vld [vmem:[%s627 + $0x18] sm:$0xff]
        %v1771 = vld [vmem:[%s627 + $0x20] sm:$0xff]
        %v1772 = vld [vmem:[%s627 + $0x28] sm:$0xff]
        %v1773 = vld [vmem:[%s627 + $0x30] sm:$0xff]
        %v1774 = vld [vmem:[%s627 + $0x38] sm:$0xff]
        %v1775 = vld [vmem:[%s627 + $0x40] sm:$0xff]
        %v1776 = vld [vmem:[%s627 + $0x48] sm:$0xff]
        %v1777 = vld [vmem:[%s627 + $0x50] sm:$0xff]
        %v1778 = vld [vmem:[%s627 + $0x58] sm:$0xff]
        %v1779 = vld [vmem:[%s627 + $0x60] sm:$0xff]
        %v1780 = vld [vmem:[%s627 + $0x68] sm:$0xff]
        %v1781 = vld [vmem:[%s627 + $0x70] sm:$0xff]
        %v1782 = vld [vmem:[%s627 + $0x78] sm:$0xff]
        %1783 = vmatprep.subr.mxu0 0.0
        %1784 = vmatpush1.msra.mxu0 %v1782
        %1785 = vmatprep.subr.mxu0 0.0
        %1786 = vmatpush1.msra.mxu0 %v1781
        %1787 = vmatprep.subr.mxu0 0.0
        %1788 = vmatpush1.msra.mxu0 %v1780
        %1789 = vmatprep.subr.mxu0 0.0
        %1790 = vmatpush1.msra.mxu0 %v1779
        %1791 = vmatprep.subr.mxu0 0.0
        %1792 = vmatpush1.msra.mxu0 %v1778
        %1793 = vmatprep.subr.mxu0 0.0
        %1794 = vmatpush1.msra.mxu0 %v1777
        %1795 = vmatprep.subr.mxu0 0.0
        %1796 = vmatpush1.msra.mxu0 %v1776
        %1797 = vmatprep.subr.mxu0 0.0
        %1798 = vmatpush1.msra.mxu0 %v1775
        %1799 = vmatprep.subr.mxu0 0.0
        %1800 = vmatpush1.msra.mxu0 %v1774
        %1801 = vmatprep.subr.mxu0 0.0
        %1802 = vmatpush1.msra.mxu0 %v1773
        %1803 = vmatprep.subr.mxu0 0.0
        %1804 = vmatpush1.msra.mxu0 %v1772
        %1805 = vmatprep.subr.mxu0 0.0
        %1806 = vmatpush1.msra.mxu0 %v1771
        %1807 = vmatprep.subr.mxu0 0.0
        %1808 = vmatpush1.msra.mxu0 %v1770
        %1809 = vmatprep.subr.mxu0 0.0
        %1810 = vmatpush1.msra.mxu0 %v1769
        %1811 = vmatprep.subr.mxu0 0.0
        %1812 = vmatpush1.msra.mxu0 %v1768
        %1813 = vmatprep.subr.mxu0 0.0
        %1814 = vmatpush1.msra.mxu0 %v1767
        %1815 = vmatprep.subr.mxu0 0.0
        %1816 = vmatpush2.msra.mxu0 0.0
        %1817 = vmatprep.subr.mxu0 0.0
        %1818 = vmatpush2.msra.mxu0 0.0
        %1819 = vmatprep.subr.mxu0 0.0
        %1820 = vmatpush2.msra.mxu0 0.0
        %1821 = vmatprep.subr.mxu0 0.0
        %1822 = vmatpush2.msra.mxu0 0.0
        %1823 = vmatprep.subr.mxu0 0.0
        %1824 = vmatpush2.msra.mxu0 0.0
        %1825 = vmatprep.subr.mxu0 0.0
        %1826 = vmatpush2.msra.mxu0 0.0
        %1827 = vmatprep.subr.mxu0 0.0
        %1828 = vmatpush2.msra.mxu0 0.0
        %1829 = vmatprep.subr.mxu0 0.0
        %1830 = vmatpush2.msra.mxu0 0.0
        %1831 = vmatprep.subr.mxu0 0.0
        %1832 = vmatpush2.msra.mxu0 0.0
        %1833 = vmatprep.subr.mxu0 0.0
        %1834 = vmatpush2.msra.mxu0 0.0
        %1835 = vmatprep.subr.mxu0 0.0
        %1836 = vmatpush2.msra.mxu0 0.0
        %1837 = vmatprep.subr.mxu0 0.0
        %1838 = vmatpush2.msra.mxu0 0.0
        %1839 = vmatprep.subr.mxu0 0.0
        %1840 = vmatpush2.msra.mxu0 0.0
        %1841 = vmatprep.subr.mxu0 0.0
        %1842 = vmatpush2.msra.mxu0 0.0
        %1843 = vmatprep.subr.mxu0 0.0
        %1844 = vmatpush2.msra.mxu0 0.0
        %1845 = vmatprep.subr.mxu0 0.0
        %1846 = vmatpush2.msra.mxu0 0.0
        %1847 = vmatprep.mubr.f32.mxu0 0.0
        %1848 = vmatmul.mubr.f32.gmra.mxu0 %v1765
        %v1849 = vpop.f32.mrf.mxu0
        %v1850 = vadd.f32 0.0, %v1849
        %v1851 = vpop.f32.mrf.mxu0
        %1852 = vdwg.mxu0
        %v1853 = vadd.f32 %v1766, %v1850
        %1854 = vst.msk [vmem:[#allocation3] sm:$0xff] %vm1691, %v1853
        // Predicated region
        $region97: #{tpu_custom_call.1} parent=87 // pred_check
          %p1855 = pneg %p629
        $region98: #{tpu_custom_call.1} parent=87 // pred_check_branch
          %1857 = sbr.rel (%p1855) target = $region100
        $region99: #{tpu_custom_call.1} parent=87 // pred_region
          %v1858 = vld [vmem:[#allocation3] sm:$0xff]
          %v1859 = vld [vmem:[%s12] sm:$0x1]
          %v1861 = vlaneseq
          %v1862 = vshrl.u32 %v1861, 7
          %v1863 = vsub.s32 0, %v1862
          %v1864 = vrot.slane %v1859, %v1863
          %v1866 = vadd.f32 %v1858, %v1864
          %v1867 = vld [vmem:[#allocation2] sm:$0xff]
          %v1868 = vadd.f32 %v1866, %v1867
          %v1869 = vld [vmem:[%s15] sm:$0x1]
          %v1870 = vld [vmem:[%s16] sm:$0x1]
          %v1871 = vsel %vm1691, %v1868, 0.0
          %1872 = vadd.xlane.f32.xlu0 %v1871
          %v1873 = vpop.xlane.xlu0 %1872
          %v1874 = vrcp.pop 32.0
          %v1875 = vmul.f32 %v1873, %v1874
          %v1876 = vsub.f32 %v1868, %v1875
          %v1877 = vmul.f32 %v1876, %v1876
          %v1878 = vsel %vm1691, %v1877, 0.0
          %1879 = vadd.xlane.f32.xlu0 %v1878
          %v1880 = vpop.xlane.xlu0 %1879
          %v1881 = vmul.f32 %v1880, 0.032258064
          %v1882 = vrsqrt.pop %v1881
          %v1883 = vmul.f32 %v1881, %v1882
          %vm1884 = vcmp.eq.f32.partialorder %v1881, inf
          %v1885 = vsel %vm1884, %v1881, %v1883
          %vm1886 = vcmp.eq.f32.partialorder %v1881, 0.0
          %v1887 = vand.u32 %v1881, 2147483648
          %v1888 = vsel %vm1886, %v1887, %v1885
          %v1889 = vadd.f32 %v1888, 1e-06
          %v1890 = vrcp.pop %v1889
          %v1892 = vlaneseq
          %v1893 = vshrl.u32 %v1892, 7
          %v1894 = vsub.s32 0, %v1893
          %v1895 = vrot.slane %v1869, %v1894
          %v1897 = vmul.f32 %v1895, %v1876
          %v1898 = vmul.f32 %v1897, %v1890
          %v1900 = vlaneseq
          %v1901 = vshrl.u32 %v1900, 7
          %v1902 = vsub.s32 0, %v1901
          %v1903 = vrot.slane %v1870, %v1902
          %v1905 = vadd.f32 %v1898, %v1903
          %1906 = vst.msk [vmem:[%s615] sm:$0xff] %vm1691, %v1905
        $region100: #{tpu_custom_call.1} parent=87 // pred_fallthru
          _
        %s1907 = sand.u32 %s431, 1
        %s1908 = scalar_lea.sflag [#allocation6], %s1907
        %s1909 = sand.u32 %s431, 1
        %s1910 = smul.addr %s1909, 8
        %s1911 = scalar_lea.vmem [#allocation7], %s1910
        // Predicated region
        $region101: #{tpu_custom_call.1} parent=87 // pred_check
          %p1912 = pneg %p441
        $region102: #{tpu_custom_call.1} parent=87 // pred_check_branch
          %1914 = sbr.rel (%p1912) target = $region104
        $region103: #{tpu_custom_call.1} parent=87 // pred_region
          %s1916 = ssub.s32 128, 128
          %1917 = vsyncadd %s1908, %s1916
          %s1918 = smul.addr %s38, 128
          %s1919 = scalar_lea.hbm %s17, %s1918
          %s1921 = sshll.u32 %s1911, 4
          %s1922 = int_to_ptr.vmem [resolvable:$true] %s1921
          %1924 = dma.vmem_to_hbm [thread:$0]  %s1922, 128, %s1919, %s1908
        $region104: #{tpu_custom_call.1} parent=87 // pred_fallthru
          _
      $region88: #{tpu_custom_call.1} parent=5 // pred_fallthru
        _
      %p1925 = scmp.le.s32.totalorder 2, %s29
      // Predicated region
      $region105: #{tpu_custom_call.1} parent=5 // pred_check
        %p1926 = pneg %p1925
      $region106: #{tpu_custom_call.1} parent=5 // pred_check_branch
        %1928 = sbr.rel (%p1926) target = $region108
      $region107: #{tpu_custom_call.1} parent=5 // pred_region
        %s1929 = ssub.s32 %s29, 2
        // Predicated region
        $region109: #{tpu_custom_call.1} parent=107 // pred_check
          %p1930 = pneg %p447
        $region110: #{tpu_custom_call.1} parent=107 // pred_check_branch
          %1932 = sbr.rel (%p1930) target = $region112
        $region111: #{tpu_custom_call.1} parent=107 // pred_region
          %s1933 = sand.u32 %s432, 1
          %s1934 = scalar_lea.sflag [#allocation6], %s1933
          %s1935 = sand.u32 %s432, 1
          %s1936 = smul.addr %s1935, 8
          %s1937 = scalar_lea.vmem [#allocation7], %s1936
          %1938 = dma.done %s1934, 128
        $region112: #{tpu_custom_call.1} parent=107 // pred_fallthru
          _
      $region108: #{tpu_custom_call.1} parent=5 // pred_fallthru
        _
    $region6: #{tpu_custom_call.1} parent=1 // loop_footer
      %s33 = sadd.s32 1, %s29
    $region7: #{tpu_custom_call.1} parent=1 // loop_footer_branch
      %28 = sbr.rel target = $region3
    $region8: #{tpu_custom_call.1} parent=1 // loop_exit
      _
    %1939 = vsyncpa [#allocation5], 1
    %s1940 = scalar_lea.sflag [#allocation5], 1
    %1941 = vsyncpa %s1940, 1
    %1942 = vsyncpa [#allocation6], 1
    %s1943 = scalar_lea.sflag [#allocation6], 1
    %1944 = vsyncpa %s1943, 1

// kernel: tpu_custom_call.1
$region0: #{tpu_custom_call.1}
  #allocation0 [shape = 'u32[]', space=smem, size = 0x4, offset = 0x4, fixed_abs, tag = 'smem constant byte address 0x4 - core index']
  #allocation1 [shape = 'u32[144,128]{1,0:T(1,128)}', space=vmem, size = 0x12000, scoped, tag = 'internal scratch']
  #allocation2 [shape = 'f32[8,32]{1,0:T(8,128)}', space=vmem, size = 0x1000, scoped, tag = 'scratch operand']
  #allocation3 [shape = 'f32[8,32]{1,0:T(8,128)}', space=vmem, size = 0x1000, scoped, tag = 'scratch operand']
  %s0 = inlined_call_operand.hbm [shape: f32[2,8,32], index: 0, kind: input, shape index: {}]
  %s1 = inlined_call_operand.vmem [shape: f32[32,32], index: 1, kind: input, shape index: {}]
  %s2 = inlined_call_operand.vmem [shape: f32[32,32], index: 2, kind: input, shape index: {}]
  %s3 = inlined_call_operand.vmem [shape: f32[32,32], index: 3, kind: input, shape index: {}]
  %s4 = inlined_call_operand.vmem [shape: f32[32,32], index: 4, kind: input, shape index: {}]
  %s5 = inlined_call_operand.vmem [shape: f32[1,32], index: 5, kind: input, shape index: {}]
  %s6 = inlined_call_operand.vmem [shape: f32[1,32], index: 6, kind: input, shape index: {}]
  %s7 = inlined_call_operand.vmem [shape: f32[1,32], index: 7, kind: input, shape index: {}]
  %s8 = inlined_call_operand.vmem [shape: f32[1,32], index: 8, kind: input, shape index: {}]
  %s9 = inlined_call_operand.vmem [shape: f32[32,128], index: 9, kind: input, shape index: {}]
  %s10 = inlined_call_operand.vmem [shape: f32[1,128], index: 10, kind: input, shape index: {}]
  %s11 = inlined_call_operand.vmem [shape: f32[128,32], index: 11, kind: input, shape index: {}]
  %s12 = inlined_call_operand.vmem [shape: f32[1,32], index: 12, kind: input, shape index: {}]
  %s13 = inlined_call_operand.vmem [shape: f32[1,32], index: 13, kind: input, shape index: {}]
  %s14 = inlined_call_operand.vmem [shape: f32[1,32], index: 14, kind: input, shape index: {}]
  %s15 = inlined_call_operand.vmem [shape: f32[1,32], index: 15, kind: input, shape index: {}]
  %s16 = inlined_call_operand.vmem [shape: f32[1,32], index: 16, kind: input, shape index: {}]
  %s17 = inlined_call_operand.hbm [shape: f32[2,8,32], index: 17, kind: output, shape index: {}]
  %s18 = sld [smem:[#allocation0]]
  $region113: #{tpu_custom_call.1} parent=0
    _
  %s20 = ssub.s32 1, %s18
  %s21 = scalar_select 0, %s20, %s18
  $region1: #{tpu_custom_call.1} parent=0
    #allocation4 [shape = 'u8[8192]{0}', space=vmem, size = 0x2000, scoped, tag = 'input window, operand 0']
    #allocation5 [shape = 's32[2]{0}', space=sflag, size = 0x8, scoped, tag = 'scoped memory for tpu_custom_call.1']
    #allocation6 [shape = 's32[2]{0}', space=sflag, size = 0x8, scoped, tag = 'scoped memory for tpu_custom_call.1']
    #allocation7 [shape = 'u8[8192]{0}', space=vmem, size = 0x2000, scoped, tag = 'output window, operand 0']
    %22 = vsyncpa [#allocation5], 0
    %s23 = scalar_lea.sflag [#allocation5], 1
    %24 = vsyncpa %s23, 0
    %25 = vsyncpa [#allocation6], 0
    %s26 = scalar_lea.sflag [#allocation6], 1
    %27 = vsyncpa %s26, 0
    loop: start=0, step=1, limit=4
    $region2: #{tpu_custom_call.1} parent=1 // loop_pre_header
      _
    $region3: #{tpu_custom_call.1} parent=1 // loop_header
      %s29 = sphi 0, %s33
      %p30 = scmp.ge.s32.totalorder %s29, 4
      %s36 = sphi 0, %s48
      %s37 = sphi 0, %s44
      %s38 = sphi 0, %s36
      %s39 = sphi 0, %s37
      %s40 = sphi 0, %s38
      %s41 = sphi 0, %s39
      %s51 = sphi 0, %s53
      %s54 = sphi 0, %s51
      %s55 = sphi 0, %s54
      %s71 = sphi 0, %s55
      %s75 = sphi 0, %s75
      %s77 = sphi 0, %s75
      %s78 = sphi 0, %s77
      %s92 = sphi 0, %s78
      %s96 = sphi 0, %s96
      %s98 = sphi 0, %s96
      %s99 = sphi 0, %s98
      %s113 = sphi 0, %s99
      %s117 = sphi 0, %s117
      %s119 = sphi 0, %s117
      %s120 = sphi 0, %s119
      %s134 = sphi 0, %s120
      %s138 = sphi 0, %s138
      %s140 = sphi 0, %s138
      %s141 = sphi 0, %s140
      %s155 = sphi 0, %s141
      %s159 = sphi 0, %s159
      %s161 = sphi 0, %s159
      %s162 = sphi 0, %s161
      %s176 = sphi 0, %s162
      %s180 = sphi 0, %s180
      %s182 = sphi 0, %s180
      %s183 = sphi 0, %s182
      %s197 = sphi 0, %s183
      %s201 = sphi 0, %s201
      %s203 = sphi 0, %s201
      %s204 = sphi 0, %s203
      %s218 = sphi 0, %s204
      %s222 = sphi 0, %s222
      %s224 = sphi 0, %s222
      %s225 = sphi 0, %s224
      %s239 = sphi 0, %s225
      %s245 = sphi 0, %s247
      %s248 = sphi 0, %s245
      %s249 = sphi 0, %s248
      %s265 = sphi 0, %s249
      %s271 = sphi 0, %s273
      %s274 = sphi 0, %s271
      %s275 = sphi 0, %s274
      %s291 = sphi 0, %s275
      %s297 = sphi 0, %s299
      %s300 = sphi 0, %s297
      %s301 = sphi 0, %s300
      %s317 = sphi 0, %s301
      %s321 = sphi 0, %s321
      %s323 = sphi 0, %s321
      %s324 = sphi 0, %s323
      %s338 = sphi 0, %s324
      %s342 = sphi 0, %s342
      %s344 = sphi 0, %s342
      %s345 = sphi 0, %s344
      %s359 = sphi 0, %s345
      %s363 = sphi 0, %s363
      %s365 = sphi 0, %s363
      %s366 = sphi 0, %s365
      %s380 = sphi 0, %s366
      %s384 = sphi 0, %s384
      %s386 = sphi 0, %s384
      %s387 = sphi 0, %s386
      %s401 = sphi 0, %s387
      %s405 = sphi 0, %s405
      %s407 = sphi 0, %s405
      %s408 = sphi 0, %s407
      %s422 = sphi 0, %s408
      %s428 = sphi 0, %s430
      %s431 = sphi 0, %s428
      %s432 = sphi 0, %s431
      %s448 = sphi 0, %s432
    $region4: #{tpu_custom_call.1} parent=1 // loop_header_branch
      %32 = sbr.rel (%p30) target = $region8
    $region5: #{tpu_custom_call.1} parent=1 // loop_body
      %s34 = ssub.s32 %s29, 1
      %s35 = ssub.s32 %s29, 2
      %s42 = sadd.s32 1, %s37
      %p43 = scmp.ge.s32.totalorder %s42, 1
      %s44 = scalar_select %p43, 0, %s42
      %s45 = sadd.s32 1, %s36
      %s46 = scalar_select %p43, %s45, %s36
      %p47 = scmp.ge.s32.totalorder %s46, 2
      %s48 = scalar_select %p47, 0, %s46
      %s49 = ssub.s32 %s36, %s48
      %p50 = scmp.eq.s32.totalorder %s49, 0
      %s52 = sadd.s32 %s51, 1
      %s53 = scalar_select %p50, %s51, %s52
      %p56 = pneg %p50
      %p57 = scmp.eq.s32.totalorder %s29, 1
      %p58 = por %p56, %p57
      %p59 = scmp.ne.s32.totalorder %s51, %s54
      %p60 = scmp.eq.s32.totalorder %s29, 0
      %p61 = por %p59, %p60
      %p62 = scmp.ne.s32.totalorder %s51, %s54
      %p63 = scmp.eq.s32.totalorder %s34, 1
      %p64 = por %p62, %p63
      %p65 = scmp.ne.s32.totalorder %s54, %s55
      %p66 = scmp.eq.s32.totalorder %s34, 0
      %p67 = por %p65, %p66
      %p68 = scmp.ne.s32.totalorder %s54, %s55
      %p69 = scmp.eq.s32.totalorder %s35, 1
      %p70 = por %p68, %p69
      %p72 = scmp.ne.s32.totalorder %s55, %s71
      %p73 = scmp.eq.s32.totalorder %s35, 0
      %p74 = por %p72, %p73
      %s76 = sadd.s32 %s75, 1
      %p79 = scmp.eq.s32.totalorder %s29, 1
      %p80 = scmp.ne.s32.totalorder %s75, %s77
      %p81 = scmp.eq.s32.totalorder %s29, 0
      %p82 = por %p80, %p81
      %p83 = scmp.ne.s32.totalorder %s75, %s77
      %p84 = scmp.eq.s32.totalorder %s34, 1
      %p85 = por %p83, %p84
      %p86 = scmp.ne.s32.totalorder %s77, %s78
      %p87 = scmp.eq.s32.totalorder %s34, 0
      %p88 = por %p86, %p87
      %p89 = scmp.ne.s32.totalorder %s77, %s78
      %p90 = scmp.eq.s32.totalorder %s35, 1
      %p91 = por %p89, %p90
      %p93 = scmp.ne.s32.totalorder %s78, %s92
      %p94 = scmp.eq.s32.totalorder %s35, 0
      %p95 = por %p93, %p94
      %s97 = sadd.s32 %s96, 1
      %p100 = scmp.eq.s32.totalorder %s29, 1
      %p101 = scmp.ne.s32.totalorder %s96, %s98
      %p102 = scmp.eq.s32.totalorder %s29, 0
      %p103 = por %p101, %p102
      %p104 = scmp.ne.s32.totalorder %s96, %s98
      %p105 = scmp.eq.s32.totalorder %s34, 1
      %p106 = por %p104, %p105
      %p107 = scmp.ne.s32.totalorder %s98, %s99
      %p108 = scmp.eq.s32.totalorder %s34, 0
      %p109 = por %p107, %p108
      %p110 = scmp.ne.s32.totalorder %s98, %s99
      %p111 = scmp.eq.s32.totalorder %s35, 1
      %p112 = por %p110, %p111
      %p114 = scmp.ne.s32.totalorder %s99, %s113
      %p115 = scmp.eq.s32.totalorder %s35, 0
      %p116 = por %p114, %p115
      %s118 = sadd.s32 %s117, 1
      %p121 = scmp.eq.s32.totalorder %s29, 1
      %p122 = scmp.ne.s32.totalorder %s117, %s119
      %p123 = scmp.eq.s32.totalorder %s29, 0
      %p124 = por %p122, %p123
      %p125 = scmp.ne.s32.totalorder %s117, %s119
      %p126 = scmp.eq.s32.totalorder %s34, 1
      %p127 = por %p125, %p126
      %p128 = scmp.ne.s32.totalorder %s119, %s120
      %p129 = scmp.eq.s32.totalorder %s34, 0
      %p130 = por %p128, %p129
      %p131 = scmp.ne.s32.totalorder %s119, %s120
      %p132 = scmp.eq.s32.totalorder %s35, 1
      %p133 = por %p131, %p132
      %p135 = scmp.ne.s32.totalorder %s120, %s134
      %p136 = scmp.eq.s32.totalorder %s35, 0
      %p137 = por %p135, %p136
      %s139 = sadd.s32 %s138, 1
      %p142 = scmp.eq.s32.totalorder %s29, 1
      %p143 = scmp.ne.s32.totalorder %s138, %s140
      %p144 = scmp.eq.s32.totalorder %s29, 0
      %p145 = por %p143, %p144
      %p146 = scmp.ne.s32.totalorder %s138, %s140
      %p147 = scmp.eq.s32.totalorder %s34, 1
      %p148 = por %p146, %p147
      %p149 = scmp.ne.s32.totalorder %s140, %s141
      %p150 = scmp.eq.s32.totalorder %s34, 0
      %p151 = por %p149, %p150
      %p152 = scmp.ne.s32.totalorder %s140, %s141
      %p153 = scmp.eq.s32.totalorder %s35, 1
      %p154 = por %p152, %p153
      %p156 = scmp.ne.s32.totalorder %s141, %s155
      %p157 = scmp.eq.s32.totalorder %s35, 0
      %p158 = por %p156, %p157
      %s160 = sadd.s32 %s159, 1
      %p163 = scmp.eq.s32.totalorder %s29, 1
      %p164 = scmp.ne.s32.totalorder %s159, %s161
      %p165 = scmp.eq.s32.totalorder %s29, 0
      %p166 = por %p164, %p165
      %p167 = scmp.ne.s32.totalorder %s159, %s161
      %p168 = scmp.eq.s32.totalorder %s34, 1
      %p169 = por %p167, %p168
      %p170 = scmp.ne.s32.totalorder %s161, %s162
      %p171 = scmp.eq.s32.totalorder %s34, 0
      %p172 = por %p170, %p171
      %p173 = scmp.ne.s32.totalorder %s161, %s162
      %p174 = scmp.eq.s32.totalorder %s35, 1
      %p175 = por %p173, %p174
      %p177 = scmp.ne.s32.totalorder %s162, %s176
      %p178 = scmp.eq.s32.totalorder %s35, 0
      %p179 = por %p177, %p178
      %s181 = sadd.s32 %s180, 1
      %p184 = scmp.eq.s32.totalorder %s29, 1
      %p185 = scmp.ne.s32.totalorder %s180, %s182
      %p186 = scmp.eq.s32.totalorder %s29, 0
      %p187 = por %p185, %p186
      %p188 = scmp.ne.s32.totalorder %s180, %s182
      %p189 = scmp.eq.s32.totalorder %s34, 1
      %p190 = por %p188, %p189
      %p191 = scmp.ne.s32.totalorder %s182, %s183
      %p192 = scmp.eq.s32.totalorder %s34, 0
      %p193 = por %p191, %p192
      %p194 = scmp.ne.s32.totalorder %s182, %s183
      %p195 = scmp.eq.s32.totalorder %s35, 1
      %p196 = por %p194, %p195
      %p198 = scmp.ne.s32.totalorder %s183, %s197
      %p199 = scmp.eq.s32.totalorder %s35, 0
      %p200 = por %p198, %p199
      %s202 = sadd.s32 %s201, 1
      %p205 = scmp.eq.s32.totalorder %s29, 1
      %p206 = scmp.ne.s32.totalorder %s201, %s203
      %p207 = scmp.eq.s32.totalorder %s29, 0
      %p208 = por %p206, %p207
      %p209 = scmp.ne.s32.totalorder %s201, %s203
      %p210 = scmp.eq.s32.totalorder %s34, 1
      %p211 = por %p209, %p210
      %p212 = scmp.ne.s32.totalorder %s203, %s204
      %p213 = scmp.eq.s32.totalorder %s34, 0
      %p214 = por %p212, %p213
      %p215 = scmp.ne.s32.totalorder %s203, %s204
      %p216 = scmp.eq.s32.totalorder %s35, 1
      %p217 = por %p215, %p216
      %p219 = scmp.ne.s32.totalorder %s204, %s218
      %p220 = scmp.eq.s32.totalorder %s35, 0
      %p221 = por %p219, %p220
      %s223 = sadd.s32 %s222, 1
      %p226 = scmp.eq.s32.totalorder %s29, 1
      %p227 = scmp.ne.s32.totalorder %s222, %s224
      %p228 = scmp.eq.s32.totalorder %s29, 0
      %p229 = por %p227, %p228
      %p230 = scmp.ne.s32.totalorder %s222, %s224
      %p231 = scmp.eq.s32.totalorder %s34, 1
      %p232 = por %p230, %p231
      %p233 = scmp.ne.s32.totalorder %s224, %s225
      %p234 = scmp.eq.s32.totalorder %s34, 0
      %p235 = por %p233, %p234
      %p236 = scmp.ne.s32.totalorder %s224, %s225
      %p237 = scmp.eq.s32.totalorder %s35, 1
      %p238 = por %p236, %p237
      %p240 = scmp.ne.s32.totalorder %s225, %s239
      %p241 = scmp.eq.s32.totalorder %s35, 0
      %p242 = por %p240, %p241
      %s243 = ssub.s32 %s37, %s44
      %p244 = scmp.eq.s32.totalorder %s243, 0
      %s246 = sadd.s32 %s245, 1
      %s247 = scalar_select %p244, %s245, %s246
      %p250 = pneg %p244
      %p251 = scmp.eq.s32.totalorder %s29, 1
      %p252 = por %p250, %p251
      %p253 = scmp.ne.s32.totalorder %s245, %s248
      %p254 = scmp.eq.s32.totalorder %s29, 0
      %p255 = por %p253, %p254
      %p256 = scmp.ne.s32.totalorder %s245, %s248
      %p257 = scmp.eq.s32.totalorder %s34, 1
      %p258 = por %p256, %p257
      %p259 = scmp.ne.s32.totalorder %s248, %s249
      %p260 = scmp.eq.s32.totalorder %s34, 0
      %p261 = por %p259, %p260
      %p262 = scmp.ne.s32.totalorder %s248, %s249
      %p263 = scmp.eq.s32.totalorder %s35, 1
      %p264 = por %p262, %p263
      %p266 = scmp.ne.s32.totalorder %s249, %s265
      %p267 = scmp.eq.s32.totalorder %s35, 0
      %p268 = por %p266, %p267
      %s269 = ssub.s32 %s37, %s44
      %p270 = scmp.eq.s32.totalorder %s269, 0
      %s272 = sadd.s32 %s271, 1
      %s273 = scalar_select %p270, %s271, %s272
      %p276 = pneg %p270
      %p277 = scmp.eq.s32.totalorder %s29, 1
      %p278 = por %p276, %p277
      %p279 = scmp.ne.s32.totalorder %s271, %s274
      %p280 = scmp.eq.s32.totalorder %s29, 0
      %p281 = por %p279, %p280
      %p282 = scmp.ne.s32.totalorder %s271, %s274
      %p283 = scmp.eq.s32.totalorder %s34, 1
      %p284 = por %p282, %p283
      %p285 = scmp.ne.s32.totalorder %s274, %s275
      %p286 = scmp.eq.s32.totalorder %s34, 0
      %p287 = por %p285, %p286
      %p288 = scmp.ne.s32.totalorder %s274, %s275
      %p289 = scmp.eq.s32.totalorder %s35, 1
      %p290 = por %p288, %p289
      %p292 = scmp.ne.s32.totalorder %s275, %s291
      %p293 = scmp.eq.s32.totalorder %s35, 0
      %p294 = por %p292, %p293
      %s295 = ssub.s32 %s37, %s44
      %p296 = scmp.eq.s32.totalorder %s295, 0
      %s298 = sadd.s32 %s297, 1
      %s299 = scalar_select %p296, %s297, %s298
      %p302 = pneg %p296
      %p303 = scmp.eq.s32.totalorder %s29, 1
      %p304 = por %p302, %p303
      %p305 = scmp.ne.s32.totalorder %s297, %s300
      %p306 = scmp.eq.s32.totalorder %s29, 0
      %p307 = por %p305, %p306
      %p308 = scmp.ne.s32.totalorder %s297, %s300
      %p309 = scmp.eq.s32.totalorder %s34, 1
      %p310 = por %p308, %p309
      %p311 = scmp.ne.s32.totalorder %s300, %s301
      %p312 = scmp.eq.s32.totalorder %s34, 0
      %p313 = por %p311, %p312
      %p314 = scmp.ne.s32.totalorder %s300, %s301
      %p315 = scmp.eq.s32.totalorder %s35, 1
      %p316 = por %p314, %p315
      %p318 = scmp.ne.s32.totalorder %s301, %s317
      %p319 = scmp.eq.s32.totalorder %s35, 0
      %p320 = por %p318, %p319
      %s322 = sadd.s32 %s321, 1
      %p325 = scmp.eq.s32.totalorder %s29, 1
      %p326 = scmp.ne.s32.totalorder %s321, %s323
      %p327 = scmp.eq.s32.totalorder %s29, 0
      %p328 = por %p326, %p327
      %p329 = scmp.ne.s32.totalorder %s321, %s323
      %p330 = scmp.eq.s32.totalorder %s34, 1
      %p331 = por %p329, %p330
      %p332 = scmp.ne.s32.totalorder %s323, %s324
      %p333 = scmp.eq.s32.totalorder %s34, 0
      %p334 = por %p332, %p333
      %p335 = scmp.ne.s32.totalorder %s323, %s324
      %p336 = scmp.eq.s32.totalorder %s35, 1
      %p337 = por %p335, %p336
      %p339 = scmp.ne.s32.totalorder %s324, %s338
      %p340 = scmp.eq.s32.totalorder %s35, 0
      %p341 = por %p339, %p340
      %s343 = sadd.s32 %s342, 1
      %p346 = scmp.eq.s32.totalorder %s29, 1
      %p347 = scmp.ne.s32.totalorder %s342, %s344
      %p348 = scmp.eq.s32.totalorder %s29, 0
      %p349 = por %p347, %p348
      %p350 = scmp.ne.s32.totalorder %s342, %s344
      %p351 = scmp.eq.s32.totalorder %s34, 1
      %p352 = por %p350, %p351
      %p353 = scmp.ne.s32.totalorder %s344, %s345
      %p354 = scmp.eq.s32.totalorder %s34, 0
      %p355 = por %p353, %p354
      %p356 = scmp.ne.s32.totalorder %s344, %s345
      %p357 = scmp.eq.s32.totalorder %s35, 1
      %p358 = por %p356, %p357
      %p360 = scmp.ne.s32.totalorder %s345, %s359
      %p361 = scmp.eq.s32.totalorder %s35, 0
      %p362 = por %p360, %p361
      %s364 = sadd.s32 %s363, 1
      %p367 = scmp.eq.s32.totalorder %s29, 1
      %p368 = scmp.ne.s32.totalorder %s363, %s365
      %p369 = scmp.eq.s32.totalorder %s29, 0
      %p370 = por %p368, %p369
      %p371 = scmp.ne.s32.totalorder %s363, %s365
      %p372 = scmp.eq.s32.totalorder %s34, 1
      %p373 = por %p371, %p372
      %p374 = scmp.ne.s32.totalorder %s365, %s366
      %p375 = scmp.eq.s32.totalorder %s34, 0
      %p376 = por %p374, %p375
      %p377 = scmp.ne.s32.totalorder %s365, %s366
      %p378 = scmp.eq.s32.totalorder %s35, 1
      %p379 = por %p377, %p378
      %p381 = scmp.ne.s32.totalorder %s366, %s380
      %p382 = scmp.eq.s32.totalorder %s35, 0
      %p383 = por %p381, %p382
      %s385 = sadd.s32 %s384, 1
      %p388 = scmp.eq.s32.totalorder %s29, 1
      %p389 = scmp.ne.s32.totalorder %s384, %s386
      %p390 = scmp.eq.s32.totalorder %s29, 0
      %p391 = por %p389, %p390
      %p392 = scmp.ne.s32.totalorder %s384, %s386
      %p393 = scmp.eq.s32.totalorder %s34, 1
      %p394 = por %p392, %p393
      %p395 = scmp.ne.s32.totalorder %s386, %s387
      %p396 = scmp.eq.s32.totalorder %s34, 0
      %p397 = por %p395, %p396
      %p398 = scmp.ne.s32.totalorder %s386, %s387
      %p399 = scmp.eq.s32.totalorder %s35, 1
      %p400 = por %p398, %p399
      %p402 = scmp.ne.s32.totalorder %s387, %s401
      %p403 = scmp.eq.s32.totalorder %s35, 0
      %p404 = por %p402, %p403
      %s406 = sadd.s32 %s405, 1
      %p409 = scmp.eq.s32.totalorder %s29, 1
      %p410 = scmp.ne.s32.totalorder %s405, %s407
      %p411 = scmp.eq.s32.totalorder %s29, 0
      %p412 = por %p410, %p411
      %p413 = scmp.ne.s32.totalorder %s405, %s407
      %p414 = scmp.eq.s32.totalorder %s34, 1
      %p415 = por %p413, %p414
      %p416 = scmp.ne.s32.totalorder %s407, %s408
      %p417 = scmp.eq.s32.totalorder %s34, 0
      %p418 = por %p416, %p417
      %p419 = scmp.ne.s32.totalorder %s407, %s408
      %p420 = scmp.eq.s32.totalorder %s35, 1
      %p421 = por %p419, %p420
      %p423 = scmp.ne.s32.totalorder %s408, %s422
      %p424 = scmp.eq.s32.totalorder %s35, 0
      %p425 = por %p423, %p424
      %s426 = ssub.s32 %s36, %s48
      %p427 = scmp.eq.s32.totalorder %s426, 0
      %s429 = sadd.s32 %s428, 1
      %s430 = scalar_select %p427, %s428, %s429
      %p433 = pneg %p427
      %p434 = scmp.eq.s32.totalorder %s29, 1
      %p435 = por %p433, %p434
      %p436 = scmp.ne.s32.totalorder %s428, %s431
      %p437 = scmp.eq.s32.totalorder %s29, 0
      %p438 = por %p436, %p437
      %p439 = scmp.ne.s32.totalorder %s428, %s431
      %p440 = scmp.eq.s32.totalorder %s34, 1
      %p441 = por %p439, %p440
      %p442 = scmp.ne.s32.totalorder %s431, %s432
      %p443 = scmp.eq.s32.totalorder %s34, 0
      %p444 = por %p442, %p443
      %p445 = scmp.ne.s32.totalorder %s431, %s432
      %p446 = scmp.eq.s32.totalorder %s35, 1
      %p447 = por %p445, %p446
      %p449 = scmp.ne.s32.totalorder %s432, %s448
      %p450 = scmp.eq.s32.totalorder %s35, 0
      %p451 = por %p449, %p450
      %p452 = scmp.le.s32.totalorder 1, %s29
      %p453 = scmp.lt.s32.totalorder %s29, 3
      %p454 = pnand %p452, %p453
      %p455 = pneg %p454
      // Predicated region
      $region9: #{tpu_custom_call.1} parent=5 // pred_check
        _
      $region10: #{tpu_custom_call.1} parent=5 // pred_check_branch
        %457 = sbr.rel (%p454) target = $region12
      $region11: #{tpu_custom_call.1} parent=5 // pred_region
        %s458 = ssub.s32 %s29, 1
        // Predicated region
        $region13: #{tpu_custom_call.1} parent=11 // pred_check
          %p459 = pneg %p88
        $region14: #{tpu_custom_call.1} parent=11 // pred_check_branch
          %461 = sbr.rel (%p459) target = $region16
        $region15: #{tpu_custom_call.1} parent=11 // pred_region
          _
        $region16: #{tpu_custom_call.1} parent=11 // pred_fallthru
          _
        // Predicated region
        $region17: #{tpu_custom_call.1} parent=11 // pred_check
          %p462 = pneg %p109
        $region18: #{tpu_custom_call.1} parent=11 // pred_check_branch
          %464 = sbr.rel (%p462) target = $region20
        $region19: #{tpu_custom_call.1} parent=11 // pred_region
          _
        $region20: #{tpu_custom_call.1} parent=11 // pred_fallthru
          _
        // Predicated region
        $region21: #{tpu_custom_call.1} parent=11 // pred_check
          %p465 = pneg %p130
        $region22: #{tpu_custom_call.1} parent=11 // pred_check_branch
          %467 = sbr.rel (%p465) target = $region24
        $region23: #{tpu_custom_call.1} parent=11 // pred_region
          _
        $region24: #{tpu_custom_call.1} parent=11 // pred_fallthru
          _
        // Predicated region
        $region25: #{tpu_custom_call.1} parent=11 // pred_check
          %p468 = pneg %p151
        $region26: #{tpu_custom_call.1} parent=11 // pred_check_branch
          %470 = sbr.rel (%p468) target = $region28
        $region27: #{tpu_custom_call.1} parent=11 // pred_region
          _
        $region28: #{tpu_custom_call.1} parent=11 // pred_fallthru
          _
        // Predicated region
        $region29: #{tpu_custom_call.1} parent=11 // pred_check
          %p471 = pneg %p172
        $region30: #{tpu_custom_call.1} parent=11 // pred_check_branch
          %473 = sbr.rel (%p471) target = $region32
        $region31: #{tpu_custom_call.1} parent=11 // pred_region
          _
        $region32: #{tpu_custom_call.1} parent=11 // pred_fallthru
          _
        // Predicated region
        $region33: #{tpu_custom_call.1} parent=11 // pred_check
          %p474 = pneg %p193
        $region34: #{tpu_custom_call.1} parent=11 // pred_check_branch
          %476 = sbr.rel (%p474) target = $region36
        $region35: #{tpu_custom_call.1} parent=11 // pred_region
          _
        $region36: #{tpu_custom_call.1} parent=11 // pred_fallthru
          _
        // Predicated region
        $region37: #{tpu_custom_call.1} parent=11 // pred_check
          %p477 = pneg %p214
        $region38: #{tpu_custom_call.1} parent=11 // pred_check_branch
          %479 = sbr.rel (%p477) target = $region40
        $region39: #{tpu_custom_call.1} parent=11 // pred_region
          _
        $region40: #{tpu_custom_call.1} parent=11 // pred_fallthru
          _
        // Predicated region
        $region41: #{tpu_custom_call.1} parent=11 // pred_check
          %p480 = pneg %p235
        $region42: #{tpu_custom_call.1} parent=11 // pred_check_branch
          %482 = sbr.rel (%p480) target = $region44
        $region43: #{tpu_custom_call.1} parent=11 // pred_region
          _
        $region44: #{tpu_custom_call.1} parent=11 // pred_fallthru
          _
        // Predicated region
        $region45: #{tpu_custom_call.1} parent=11 // pred_check
          %p483 = pneg %p261
        $region46: #{tpu_custom_call.1} parent=11 // pred_check_branch
          %485 = sbr.rel (%p483) target = $region48
        $region47: #{tpu_custom_call.1} parent=11 // pred_region
          %p486 = scmp.lt.s32.totalorder %s39, 0
          %s487 = scalar_select %p486, %s39, 0
          %s488 = smul.addr %s487, 8
          %s489 = scalar_lea.vmem %s9, %s488
        $region48: #{tpu_custom_call.1} parent=11 // pred_fallthru
          _
        // Predicated region
        $region49: #{tpu_custom_call.1} parent=11 // pred_check
          %p490 = pneg %p287
        $region50: #{tpu_custom_call.1} parent=11 // pred_check_branch
          %492 = sbr.rel (%p490) target = $region52
        $region51: #{tpu_custom_call.1} parent=11 // pred_region
          %p493 = scmp.lt.s32.totalorder %s39, 0
          %s494 = scalar_select %p493, %s39, 0
          %s495 = scalar_lea.vmem %s10, %s494
        $region52: #{tpu_custom_call.1} parent=11 // pred_fallthru
          _
        // Predicated region
        $region53: #{tpu_custom_call.1} parent=11 // pred_check
          %p496 = pneg %p313
        $region54: #{tpu_custom_call.1} parent=11 // pred_check_branch
          %498 = sbr.rel (%p496) target = $region56
        $region55: #{tpu_custom_call.1} parent=11 // pred_region
          %s499 = smul.u32 16, %s39
          %p500 = scmp.lt.s32.totalorder %s499, 15
          %s501 = scalar_select %p500, %s499, 15
          %s502 = smul.addr %s501, 8
          %s503 = scalar_lea.vmem %s11, %s502
          %s504 = smul.u32 16, %s39
        $region56: #{tpu_custom_call.1} parent=11 // pred_fallthru
          _
        // Predicated region
        $region57: #{tpu_custom_call.1} parent=11 // pred_check
          %p505 = pneg %p334
        $region58: #{tpu_custom_call.1} parent=11 // pred_check_branch
          %507 = sbr.rel (%p505) target = $region60
        $region59: #{tpu_custom_call.1} parent=11 // pred_region
          _
        $region60: #{tpu_custom_call.1} parent=11 // pred_fallthru
          _
        // Predicated region
        $region61: #{tpu_custom_call.1} parent=11 // pred_check
          %p508 = pneg %p355
        $region62: #{tpu_custom_call.1} parent=11 // pred_check_branch
          %510 = sbr.rel (%p508) target = $region64
        $region63: #{tpu_custom_call.1} parent=11 // pred_region
          _
        $region64: #{tpu_custom_call.1} parent=11 // pred_fallthru
          _
        // Predicated region
        $region65: #{tpu_custom_call.1} parent=11 // pred_check
          %p511 = pneg %p376
        $region66: #{tpu_custom_call.1} parent=11 // pred_check_branch
          %513 = sbr.rel (%p511) target = $region68
        $region67: #{tpu_custom_call.1} parent=11 // pred_region
          _
        $region68: #{tpu_custom_call.1} parent=11 // pred_fallthru
          _
        // Predicated region
        $region69: #{tpu_custom_call.1} parent=11 // pred_check
          %p514 = pneg %p397
        $region70: #{tpu_custom_call.1} parent=11 // pred_check_branch
          %516 = sbr.rel (%p514) target = $region72
        $region71: #{tpu_custom_call.1} parent=11 // pred_region
          _
        $region72: #{tpu_custom_call.1} parent=11 // pred_fallthru
          _
        // Predicated region
        $region73: #{tpu_custom_call.1} parent=11 // pred_check
          %p517 = pneg %p418
        $region74: #{tpu_custom_call.1} parent=11 // pred_check_branch
          %519 = sbr.rel (%p517) target = $region76
        $region75: #{tpu_custom_call.1} parent=11 // pred_region
          _
        $region76: #{tpu_custom_call.1} parent=11 // pred_fallthru
          _
      $region12: #{tpu_custom_call.1} parent=5 // pred_fallthru
        _
      %p520 = scmp.lt.s32.totalorder %s29, 2
      // Predicated region
      $region77: #{tpu_custom_call.1} parent=5 // pred_check
        %p521 = pneg %p520
      $region78: #{tpu_custom_call.1} parent=5 // pred_check_branch
        %523 = sbr.rel (%p521) target = $region80
      $region79: #{tpu_custom_call.1} parent=5 // pred_region
        // Predicated region
        $region81: #{tpu_custom_call.1} parent=79 // pred_check
          %p524 = pneg %p61
        $region82: #{tpu_custom_call.1} parent=79 // pred_check_branch
          %526 = sbr.rel (%p524) target = $region84
        $region83: #{tpu_custom_call.1} parent=79 // pred_region
          %s527 = sand.u32 %s51, 1
          %s528 = scalar_lea.sflag [#allocation5], %s527
          %s529 = sand.u32 %s51, 1
          %s530 = smul.addr %s529, 8
          %s531 = scalar_lea.vmem [#allocation4], %s530
          %s533 = ssub.s32 128, 128
          %534 = vsyncadd %s528, %s533
          %s535 = smul.addr %s36, 128
          %s536 = scalar_lea.hbm %s0, %s535
          %s538 = sshll.u32 %s531, 4
          %s539 = int_to_ptr.vmem [resolvable:$true] %s538
          %541 = dma.hbm_to_vmem [thread:$0]  %s536, 128, %s539, %s528
        $region84: #{tpu_custom_call.1} parent=79 // pred_fallthru
          _
      $region80: #{tpu_custom_call.1} parent=5 // pred_fallthru
        _
      %p542 = scmp.le.s32.totalorder 1, %s29
      %p543 = scmp.lt.s32.totalorder %s29, 3
      %p544 = pnand %p542, %p543
      %p545 = pneg %p544
      // Predicated region
      $region85: #{tpu_custom_call.1} parent=5 // pred_check
        _
      $region86: #{tpu_custom_call.1} parent=5 // pred_check_branch
        %547 = sbr.rel (%p544) target = $region88
      $region87: #{tpu_custom_call.1} parent=5 // pred_region
        %s548 = ssub.s32 %s29, 1
        %s549 = sand.u32 %s54, 1
        %s550 = scalar_lea.sflag [#allocation5], %s549
        %s551 = sand.u32 %s54, 1
        %s552 = smul.addr %s551, 8
        %s553 = scalar_lea.vmem [#allocation4], %s552
        // Predicated region
        $region89: #{tpu_custom_call.1} parent=87 // pred_check
          %p554 = pneg %p67
        $region90: #{tpu_custom_call.1} parent=87 // pred_check_branch
          %556 = sbr.rel (%p554) target = $region92
        $region91: #{tpu_custom_call.1} parent=87 // pred_region
          %557 = dma.done %s550, 128
        $region92: #{tpu_custom_call.1} parent=87 // pred_fallthru
          _
        %s558 = sand.u32 %s54, 1
        %s559 = scalar_lea.sflag [#allocation5], %s558
        %s560 = sand.u32 %s54, 1
        %s561 = smul.addr %s560, 8
        %s562 = scalar_lea.vmem [#allocation4], %s561
        %p563 = pneg %p67
        %p564 = pneg %p64
        %p565 = pneg %p88
        %p566 = pneg %p85
        %p567 = pneg %p109
        %p568 = pneg %p106
        %p569 = pneg %p130
        %p570 = pneg %p127
        %p571 = pneg %p151
        %p572 = pneg %p148
        %p573 = pneg %p172
        %p574 = pneg %p169
        %p575 = pneg %p193
        %p576 = pneg %p190
        %p577 = pneg %p214
        %p578 = pneg %p211
        %p579 = pneg %p235
        %p580 = pneg %p232
        %p581 = scmp.lt.s32.totalorder %s39, 0
        %s582 = scalar_select %p581, %s39, 0
        %s583 = smul.addr %s582, 8
        %s584 = scalar_lea.vmem %s9, %s583
        %p585 = pneg %p261
        %p586 = pneg %p258
        %p587 = scmp.lt.s32.totalorder %s39, 0
        %s588 = scalar_select %p587, %s39, 0
        %s589 = scalar_lea.vmem %s10, %s588
        %p590 = pneg %p287
        %p591 = pneg %p284
        %s592 = smul.u32 16, %s39
        %p593 = scmp.lt.s32.totalorder %s592, 15
        %s594 = scalar_select %p593, %s592, 15
        %s595 = smul.addr %s594, 8
        %s596 = scalar_lea.vmem %s11, %s595
        %p597 = pneg %p313
        %p598 = pneg %p310
        %p599 = pneg %p334
        %p600 = pneg %p331
        %p601 = pneg %p355
        %p602 = pneg %p352
        %p603 = pneg %p376
        %p604 = pneg %p373
        %p605 = pneg %p397
        %p606 = pneg %p394
        %p607 = pneg %p418
        %p608 = pneg %p415
        %p609 = pneg %p444
        %p610 = pneg %p441
        %s611 = sand.u32 %s431, 1
        %s612 = scalar_lea.sflag [#allocation6], %s611
        %s613 = sand.u32 %s431, 1
        %s614 = smul.addr %s613, 8
        %s615 = scalar_lea.vmem [#allocation7], %s614
        %p616 = scmp.lt.s32.totalorder %s39, 0
        %s617 = scalar_select %p616, %s39, 0
        %s618 = smul.addr %s617, 8
        %s619 = scalar_lea.vmem %s9, %s618
        %p620 = scmp.lt.s32.totalorder %s39, 0
        %s621 = scalar_select %p620, %s39, 0
        %s622 = scalar_lea.vmem %s10, %s621
        %s623 = smul.u32 16, %s39
        %p624 = scmp.lt.s32.totalorder %s623, 15
        %s625 = scalar_select %p624, %s623, 15
        %s626 = smul.addr %s625, 8
        %s627 = scalar_lea.vmem %s11, %s626
        %s628 = smul.u32 16, %s39
        %p629 = scmp.eq.s32.totalorder %s39, 0
        // Predicated region
        $region93: #{tpu_custom_call.1} parent=87 // pred_check
          %p630 = pneg %p629
        $region94: #{tpu_custom_call.1} parent=87 // pred_check_branch
          %632 = sbr.rel (%p630) target = $region96
        $region95: #{tpu_custom_call.1} parent=87 // pred_region
          %v633 = vld [vmem:[%s553] sm:$0xff]
          %v634 = vld [vmem:[%s1] sm:$0xff]
          %v635 = vld [vmem:[%s1 + $0x8] sm:$0xff]
          %v636 = vld [vmem:[%s1 + $0x10] sm:$0xff]
          %v637 = vld [vmem:[%s1 + $0x18] sm:$0xff]
          %v638 = vld [vmem:[%s5] sm:$0x1]
          %v640 = vlaneseq
          %v641 = vshrl.u32 %v640, 7
          %v642 = vsub.s32 0, %v641
          %v643 = vrot.slane %v638, %v642
          %vm645 = vcmask 261120
          %v647 = vsel %vm645, %v633, 0
          %649 = vmatprep.subr.mxu0 0.0
          %650 = vmatpush1.msra.mxu0 0.0
          %651 = vmatprep.subr.mxu0 0.0
          %652 = vmatpush1.msra.mxu0 0.0
          %653 = vmatprep.subr.mxu0 0.0
          %654 = vmatpush1.msra.mxu0 0.0
          %655 = vmatprep.subr.mxu0 0.0
          %656 = vmatpush1.msra.mxu0 0.0
          %657 = vmatprep.subr.mxu0 0.0
          %658 = vmatpush1.msra.mxu0 0.0
          %659 = vmatprep.subr.mxu0 0.0
          %660 = vmatpush1.msra.mxu0 0.0
          %661 = vmatprep.subr.mxu0 0.0
          %662 = vmatpush1.msra.mxu0 0.0
          %663 = vmatprep.subr.mxu0 0.0
          %664 = vmatpush1.msra.mxu0 0.0
          %665 = vmatprep.subr.mxu0 0.0
          %666 = vmatpush1.msra.mxu0 0.0
          %667 = vmatprep.subr.mxu0 0.0
          %668 = vmatpush1.msra.mxu0 0.0
          %669 = vmatprep.subr.mxu0 0.0
          %670 = vmatpush1.msra.mxu0 0.0
          %671 = vmatprep.subr.mxu0 0.0
          %672 = vmatpush1.msra.mxu0 0.0
          %673 = vmatprep.subr.mxu0 0.0
          %674 = vmatpush1.msra.mxu0 %v637
          %675 = vmatprep.subr.mxu0 0.0
          %676 = vmatpush1.msra.mxu0 %v636
          %677 = vmatprep.subr.mxu0 0.0
          %678 = vmatpush1.msra.mxu0 %v635
          %679 = vmatprep.subr.mxu0 0.0
          %680 = vmatpush1.msra.mxu0 %v634
          %681 = vmatprep.subr.mxu0 0.0
          %682 = vmatpush2.msra.mxu0 0.0
          %683 = vmatprep.subr.mxu0 0.0
          %684 = vmatpush2.msra.mxu0 0.0
          %685 = vmatprep.subr.mxu0 0.0
          %686 = vmatpush2.msra.mxu0 0.0
          %687 = vmatprep.subr.mxu0 0.0
          %688 = vmatpush2.msra.mxu0 0.0
          %689 = vmatprep.subr.mxu0 0.0
          %690 = vmatpush2.msra.mxu0 0.0
          %691 = vmatprep.subr.mxu0 0.0
          %692 = vmatpush2.msra.mxu0 0.0
          %693 = vmatprep.subr.mxu0 0.0
          %694 = vmatpush2.msra.mxu0 0.0
          %695 = vmatprep.subr.mxu0 0.0
          %696 = vmatpush2.msra.mxu0 0.0
          %697 = vmatprep.subr.mxu0 0.0
          %698 = vmatpush2.msra.mxu0 0.0
          %699 = vmatprep.subr.mxu0 0.0
          %700 = vmatpush2.msra.mxu0 0.0
          %701 = vmatprep.subr.mxu0 0.0
          %702 = vmatpush2.msra.mxu0 0.0
          %703 = vmatprep.subr.mxu0 0.0
          %704 = vmatpush2.msra.mxu0 0.0
          %705 = vmatprep.subr.mxu0 0.0
          %706 = vmatpush2.msra.mxu0 0.0
          %707 = vmatprep.subr.mxu0 0.0
          %708 = vmatpush2.msra.mxu0 0.0
          %709 = vmatprep.subr.mxu0 0.0
          %710 = vmatpush2.msra.mxu0 0.0
          %711 = vmatprep.subr.mxu0 0.0
          %712 = vmatpush2.msra.mxu0 0.0
          %713 = vmatprep.mubr.f32.mxu0 0.0
          %714 = vmatmul.mubr.f32.gmra.mxu0 %v647
          %v715 = vpop.f32.mrf.mxu0
          %v716 = vadd.f32 %v643, %v715
          %v717 = vpop.f32.mrf.mxu0
          %718 = vdwg.mxu0
          %v719 = vld [vmem:[%s2] sm:$0xff]
          %v720 = vld [vmem:[%s2 + $0x8] sm:$0xff]
          %v721 = vld [vmem:[%s2 + $0x10] sm:$0xff]
          %v722 = vld [vmem:[%s2 + $0x18] sm:$0xff]
          %v723 = vld [vmem:[%s6] sm:$0x1]
          %v725 = vlaneseq
          %v726 = vshrl.u32 %v725, 7
          %v727 = vsub.s32 0, %v726
          %v728 = vrot.slane %v723, %v727
          %730 = vmatprep.subr.mxu0 0.0
          %731 = vmatpush1.msra.mxu0 0.0
          %732 = vmatprep.subr.mxu0 0.0
          %733 = vmatpush1.msra.mxu0 0.0
          %734 = vmatprep.subr.mxu0 0.0
          %735 = vmatpush1.msra.mxu0 0.0
          %736 = vmatprep.subr.mxu0 0.0
          %737 = vmatpush1.msra.mxu0 0.0
          %738 = vmatprep.subr.mxu0 0.0
          %739 = vmatpush1.msra.mxu0 0.0
          %740 = vmatprep.subr.mxu0 0.0
          %741 = vmatpush1.msra.mxu0 0.0
          %742 = vmatprep.subr.mxu0 0.0
          %743 = vmatpush1.msra.mxu0 0.0
          %744 = vmatprep.subr.mxu0 0.0
          %745 = vmatpush1.msra.mxu0 0.0
          %746 = vmatprep.subr.mxu0 0.0
          %747 = vmatpush1.msra.mxu0 0.0
          %748 = vmatprep.subr.mxu0 0.0
          %749 = vmatpush1.msra.mxu0 0.0
          %750 = vmatprep.subr.mxu0 0.0
          %751 = vmatpush1.msra.mxu0 0.0
          %752 = vmatprep.subr.mxu0 0.0
          %753 = vmatpush1.msra.mxu0 0.0
          %754 = vmatprep.subr.mxu0 0.0
          %755 = vmatpush1.msra.mxu0 %v722
          %756 = vmatprep.subr.mxu0 0.0
          %757 = vmatpush1.msra.mxu0 %v721
          %758 = vmatprep.subr.mxu0 0.0
          %759 = vmatpush1.msra.mxu0 %v720
          %760 = vmatprep.subr.mxu0 0.0
          %761 = vmatpush1.msra.mxu0 %v719
          %762 = vmatprep.subr.mxu0 0.0
          %763 = vmatpush2.msra.mxu0 0.0
          %764 = vmatprep.subr.mxu0 0.0
          %765 = vmatpush2.msra.mxu0 0.0
          %766 = vmatprep.subr.mxu0 0.0
          %767 = vmatpush2.msra.mxu0 0.0
          %768 = vmatprep.subr.mxu0 0.0
          %769 = vmatpush2.msra.mxu0 0.0
          %770 = vmatprep.subr.mxu0 0.0
          %771 = vmatpush2.msra.mxu0 0.0
          %772 = vmatprep.subr.mxu0 0.0
          %773 = vmatpush2.msra.mxu0 0.0
          %774 = vmatprep.subr.mxu0 0.0
          %775 = vmatpush2.msra.mxu0 0.0
          %776 = vmatprep.subr.mxu0 0.0
          %777 = vmatpush2.msra.mxu0 0.0
          %778 = vmatprep.subr.mxu0 0.0
          %779 = vmatpush2.msra.mxu0 0.0
          %780 = vmatprep.subr.mxu0 0.0
          %781 = vmatpush2.msra.mxu0 0.0
          %782 = vmatprep.subr.mxu0 0.0
          %783 = vmatpush2.msra.mxu0 0.0
          %784 = vmatprep.subr.mxu0 0.0
          %785 = vmatpush2.msra.mxu0 0.0
          %786 = vmatprep.subr.mxu0 0.0
          %787 = vmatpush2.msra.mxu0 0.0
          %788 = vmatprep.subr.mxu0 0.0
          %789 = vmatpush2.msra.mxu0 0.0
          %790 = vmatprep.subr.mxu0 0.0
          %791 = vmatpush2.msra.mxu0 0.0
          %792 = vmatprep.subr.mxu0 0.0
          %793 = vmatpush2.msra.mxu0 0.0
          %794 = vmatprep.mubr.f32.mxu0 0.0
          %795 = vmatmul.mubr.f32.gmra.mxu0 %v647
          %v796 = vpop.f32.mrf.mxu0
          %v797 = vadd.f32 %v728, %v796
          %v798 = vpop.f32.mrf.mxu0
          %799 = vdwg.mxu0
          %v800 = vld [vmem:[%s3] sm:$0xff]
          %v801 = vld [vmem:[%s3 + $0x8] sm:$0xff]
          %v802 = vld [vmem:[%s3 + $0x10] sm:$0xff]
          %v803 = vld [vmem:[%s3 + $0x18] sm:$0xff]
          %v804 = vld [vmem:[%s7] sm:$0x1]
          %v806 = vlaneseq
          %v807 = vshrl.u32 %v806, 7
          %v808 = vsub.s32 0, %v807
          %v809 = vrot.slane %v804, %v808
          %811 = vmatprep.subr.mxu0 0.0
          %812 = vmatpush1.msra.mxu0 0.0
          %813 = vmatprep.subr.mxu0 0.0
          %814 = vmatpush1.msra.mxu0 0.0
          %815 = vmatprep.subr.mxu0 0.0
          %816 = vmatpush1.msra.mxu0 0.0
          %817 = vmatprep.subr.mxu0 0.0
          %818 = vmatpush1.msra.mxu0 0.0
          %819 = vmatprep.subr.mxu0 0.0
          %820 = vmatpush1.msra.mxu0 0.0
          %821 = vmatprep.subr.mxu0 0.0
          %822 = vmatpush1.msra.mxu0 0.0
          %823 = vmatprep.subr.mxu0 0.0
          %824 = vmatpush1.msra.mxu0 0.0
          %825 = vmatprep.subr.mxu0 0.0
          %826 = vmatpush1.msra.mxu0 0.0
          %827 = vmatprep.subr.mxu0 0.0
          %828 = vmatpush1.msra.mxu0 0.0
          %829 = vmatprep.subr.mxu0 0.0
          %830 = vmatpush1.msra.mxu0 0.0
          %831 = vmatprep.subr.mxu0 0.0
          %832 = vmatpush1.msra.mxu0 0.0
          %833 = vmatprep.subr.mxu0 0.0
          %834 = vmatpush1.msra.mxu0 0.0
          %835 = vmatprep.subr.mxu0 0.0
          %836 = vmatpush1.msra.mxu0 %v803
          %837 = vmatprep.subr.mxu0 0.0
          %838 = vmatpush1.msra.mxu0 %v802
          %839 = vmatprep.subr.mxu0 0.0
          %840 = vmatpush1.msra.mxu0 %v801
          %841 = vmatprep.subr.mxu0 0.0
          %842 = vmatpush1.msra.mxu0 %v800
          %843 = vmatprep.subr.mxu0 0.0
          %844 = vmatpush2.msra.mxu0 0.0
          %845 = vmatprep.subr.mxu0 0.0
          %846 = vmatpush2.msra.mxu0 0.0
          %847 = vmatprep.subr.mxu0 0.0
          %848 = vmatpush2.msra.mxu0 0.0
          %849 = vmatprep.subr.mxu0 0.0
          %850 = vmatpush2.msra.mxu0 0.0
          %851 = vmatprep.subr.mxu0 0.0
          %852 = vmatpush2.msra.mxu0 0.0
          %853 = vmatprep.subr.mxu0 0.0
          %854 = vmatpush2.msra.mxu0 0.0
          %855 = vmatprep.subr.mxu0 0.0
          %856 = vmatpush2.msra.mxu0 0.0
          %857 = vmatprep.subr.mxu0 0.0
          %858 = vmatpush2.msra.mxu0 0.0
          %859 = vmatprep.subr.mxu0 0.0
          %860 = vmatpush2.msra.mxu0 0.0
          %861 = vmatprep.subr.mxu0 0.0
          %862 = vmatpush2.msra.mxu0 0.0
          %863 = vmatprep.subr.mxu0 0.0
          %864 = vmatpush2.msra.mxu0 0.0
          %865 = vmatprep.subr.mxu0 0.0
          %866 = vmatpush2.msra.mxu0 0.0
          %867 = vmatprep.subr.mxu0 0.0
          %868 = vmatpush2.msra.mxu0 0.0
          %869 = vmatprep.subr.mxu0 0.0
          %870 = vmatpush2.msra.mxu0 0.0
          %871 = vmatprep.subr.mxu0 0.0
          %872 = vmatpush2.msra.mxu0 0.0
          %873 = vmatprep.subr.mxu0 0.0
          %874 = vmatpush2.msra.mxu0 0.0
          %875 = vmatprep.mubr.f32.mxu0 0.0
          %876 = vmatmul.mubr.f32.gmra.mxu0 %v647
          %v877 = vpop.f32.mrf.mxu0
          %v878 = vadd.f32 %v809, %v877
          %v879 = vpop.f32.mrf.mxu0
          %880 = vdwg.mxu0
          %vm881 = vcmask 64512
          %v883 = vsel %vm881, %v716, 0
          %v886 = vsel %vm881, %v797, 0
          %888 = vmatprep.subr.mxu0 0.0
          %889 = vmatpush1.xpose.msra.mxu0 0.0
          %890 = vmatprep.subr.mxu0 0.0
          %891 = vmatpush1.xpose.msra.mxu0 0.0
          %892 = vmatprep.subr.mxu0 0.0
          %893 = vmatpush1.xpose.msra.mxu0 0.0
          %894 = vmatprep.subr.mxu0 0.0
          %895 = vmatpush1.xpose.msra.mxu0 0.0
          %896 = vmatprep.subr.mxu0 0.0
          %897 = vmatpush1.xpose.msra.mxu0 0.0
          %898 = vmatprep.subr.mxu0 0.0
          %899 = vmatpush1.xpose.msra.mxu0 0.0
          %900 = vmatprep.subr.mxu0 0.0
          %901 = vmatpush1.xpose.msra.mxu0 0.0
          %902 = vmatprep.subr.mxu0 0.0
          %903 = vmatpush1.xpose.msra.mxu0 0.0
          %904 = vmatprep.subr.mxu0 0.0
          %905 = vmatpush1.xpose.msra.mxu0 0.0
          %906 = vmatprep.subr.mxu0 0.0
          %907 = vmatpush1.xpose.msra.mxu0 0.0
          %908 = vmatprep.subr.mxu0 0.0
          %909 = vmatpush1.xpose.msra.mxu0 0.0
          %910 = vmatprep.subr.mxu0 0.0
          %911 = vmatpush1.xpose.msra.mxu0 0.0
          %912 = vmatprep.subr.mxu0 0.0
          %913 = vmatpush1.xpose.msra.mxu0 0.0
          %914 = vmatprep.subr.mxu0 0.0
          %915 = vmatpush1.xpose.msra.mxu0 0.0
          %916 = vmatprep.subr.mxu0 0.0
          %917 = vmatpush1.xpose.msra.mxu0 0.0
          %918 = vmatprep.subr.mxu0 0.0
          %919 = vmatpush1.xpose.msra.mxu0 %v886
          %920 = vmatprep.subr.mxu0 0.0
          %921 = vmatpush2.xpose.msra.mxu0 0.0
          %922 = vmatprep.subr.mxu0 0.0
          %923 = vmatpush2.xpose.msra.mxu0 0.0
          %924 = vmatprep.subr.mxu0 0.0
          %925 = vmatpush2.xpose.msra.mxu0 0.0
          %926 = vmatprep.subr.mxu0 0.0
          %927 = vmatpush2.xpose.msra.mxu0 0.0
          %928 = vmatprep.subr.mxu0 0.0
          %929 = vmatpush2.xpose.msra.mxu0 0.0
          %930 = vmatprep.subr.mxu0 0.0
          %931 = vmatpush2.xpose.msra.mxu0 0.0
          %932 = vmatprep.subr.mxu0 0.0
          %933 = vmatpush2.xpose.msra.mxu0 0.0
          %934 = vmatprep.subr.mxu0 0.0
          %935 = vmatpush2.xpose.msra.mxu0 0.0
          %936 = vmatprep.subr.mxu0 0.0
          %937 = vmatpush2.xpose.msra.mxu0 0.0
          %938 = vmatprep.subr.mxu0 0.0
          %939 = vmatpush2.xpose.msra.mxu0 0.0
          %940 = vmatprep.subr.mxu0 0.0
          %941 = vmatpush2.xpose.msra.mxu0 0.0
          %942 = vmatprep.subr.mxu0 0.0
          %943 = vmatpush2.xpose.msra.mxu0 0.0
          %944 = vmatprep.subr.mxu0 0.0
          %945 = vmatpush2.xpose.msra.mxu0 0.0
          %946 = vmatprep.subr.mxu0 0.0
          %947 = vmatpush2.xpose.msra.mxu0 0.0
          %948 = vmatprep.subr.mxu0 0.0
          %949 = vmatpush2.xpose.msra.mxu0 0.0
          %950 = vmatprep.subr.mxu0 0.0
          %951 = vmatpush2.xpose.msra.mxu0 0.0
          %952 = vmatprep.mubr.f32.mxu0 0.0
          %953 = vmatmul.mubr.f32.gmra.mxu0 %v883
          %v954 = vpop.f32.mrf.mxu0
          %v955 = vadd.f32 0.0, %v954
          %v956 = vpop.f32.mrf.mxu0
          %957 = vdwg.mxu0
          %v958 = vsel %vm881, %v955, -inf
          %959 = vmax.xlane.f32.xlu0 %v958
          %v960 = vpop.xlane.xlu0 %959
          %v961 = vsub.f32 %v955, %v960
          %v962 = vmul.f32 %v961, 1.442695
          %v963 = vpow.pop %v962
          %v964 = vsel %vm881, %v963, 0.0
          %965 = vadd.xlane.f32.xlu0 %v964
          %v966 = vpop.xlane.xlu0 %965
          %v968 = vsel %vm881, %v963, 0
          %970 = vmatprep.subr.mxu0 0.0
          %971 = vmatpush1.msra.mxu0 0.0
          %972 = vmatprep.subr.mxu0 0.0
          %973 = vmatpush1.msra.mxu0 0.0
          %974 = vmatprep.subr.mxu0 0.0
          %975 = vmatpush1.msra.mxu0 0.0
          %976 = vmatprep.subr.mxu0 0.0
          %977 = vmatpush1.msra.mxu0 0.0
          %978 = vmatprep.subr.mxu0 0.0
          %979 = vmatpush1.msra.mxu0 0.0
          %980 = vmatprep.subr.mxu0 0.0
          %981 = vmatpush1.msra.mxu0 0.0
          %982 = vmatprep.subr.mxu0 0.0
          %983 = vmatpush1.msra.mxu0 0.0
          %984 = vmatprep.subr.mxu0 0.0
          %985 = vmatpush1.msra.mxu0 0.0
          %986 = vmatprep.subr.mxu0 0.0
          %987 = vmatpush1.msra.mxu0 0.0
          %988 = vmatprep.subr.mxu0 0.0
          %989 = vmatpush1.msra.mxu0 0.0
          %990 = vmatprep.subr.mxu0 0.0
          %991 = vmatpush1.msra.mxu0 0.0
          %992 = vmatprep.subr.mxu0 0.0
          %993 = vmatpush1.msra.mxu0 0.0
          %994 = vmatprep.subr.mxu0 0.0
          %995 = vmatpush1.msra.mxu0 0.0
          %996 = vmatprep.subr.mxu0 0.0
          %997 = vmatpush1.msra.mxu0 0.0
          %998 = vmatprep.subr.mxu0 0.0
          %999 = vmatpush1.msra.mxu0 0.0
          %1000 = vmatprep.subr.mxu0 0.0
          %1001 = vmatpush1.msra.mxu0 %v878
          %1002 = vmatprep.subr.mxu0 0.0
          %1003 = vmatpush2.msra.mxu0 0.0
          %1004 = vmatprep.subr.mxu0 0.0
          %1005 = vmatpush2.msra.mxu0 0.0
          %1006 = vmatprep.subr.mxu0 0.0
          %1007 = vmatpush2.msra.mxu0 0.0
          %1008 = vmatprep.subr.mxu0 0.0
          %1009 = vmatpush2.msra.mxu0 0.0
          %1010 = vmatprep.subr.mxu0 0.0
          %1011 = vmatpush2.msra.mxu0 0.0
          %1012 = vmatprep.subr.mxu0 0.0
          %1013 = vmatpush2.msra.mxu0 0.0
          %1014 = vmatprep.subr.mxu0 0.0
          %1015 = vmatpush2.msra.mxu0 0.0
          %1016 = vmatprep.subr.mxu0 0.0
          %1017 = vmatpush2.msra.mxu0 0.0
          %1018 = vmatprep.subr.mxu0 0.0
          %1019 = vmatpush2.msra.mxu0 0.0
          %1020 = vmatprep.subr.mxu0 0.0
          %1021 = vmatpush2.msra.mxu0 0.0
          %1022 = vmatprep.subr.mxu0 0.0
          %1023 = vmatpush2.msra.mxu0 0.0
          %1024 = vmatprep.subr.mxu0 0.0
          %1025 = vmatpush2.msra.mxu0 0.0
          %1026 = vmatprep.subr.mxu0 0.0
          %1027 = vmatpush2.msra.mxu0 0.0
          %1028 = vmatprep.subr.mxu0 0.0
          %1029 = vmatpush2.msra.mxu0 0.0
          %1030 = vmatprep.subr.mxu0 0.0
          %1031 = vmatpush2.msra.mxu0 0.0
          %1032 = vmatprep.subr.mxu0 0.0
          %1033 = vmatpush2.msra.mxu0 0.0
          %1034 = vmatprep.mubr.f32.mxu0 0.0
          %1035 = vmatmul.mubr.f32.gmra.mxu0 %v968
          %v1036 = vpop.f32.mrf.mxu0
          %v1037 = vadd.f32 0.0, %v1036
          %v1038 = vpop.f32.mrf.mxu0
          %1039 = vdwg.mxu0
          %v1040 = vrcp.pop %v966
          %v1041 = vmul.f32 %v1037, %v1040
          %1042 = vrot.lane.b32.xlu0 %v716, 120
          %v1043 = vpop.permute.xlu0 %1042
          %1044 = vrot.lane.b32.xlu0 %v797, 120
          %v1045 = vpop.permute.xlu0 %1044
          %v1046 = vsel %vm881, %v1043, 0
          %v1048 = vsel %vm881, %v1045, 0
          %1050 = vmatprep.subr.mxu0 0.0
          %1051 = vmatpush1.xpose.msra.mxu0 0.0
          %1052 = vmatprep.subr.mxu0 0.0
          %1053 = vmatpush1.xpose.msra.mxu0 0.0
          %1054 = vmatprep.subr.mxu0 0.0
          %1055 = vmatpush1.xpose.msra.mxu0 0.0
          %1056 = vmatprep.subr.mxu0 0.0
          %1057 = vmatpush1.xpose.msra.mxu0 0.0
          %1058 = vmatprep.subr.mxu0 0.0
          %1059 = vmatpush1.xpose.msra.mxu0 0.0
          %1060 = vmatprep.subr.mxu0 0.0
          %1061 = vmatpush1.xpose.msra.mxu0 0.0
          %1062 = vmatprep.subr.mxu0 0.0
          %1063 = vmatpush1.xpose.msra.mxu0 0.0
          %1064 = vmatprep.subr.mxu0 0.0
          %1065 = vmatpush1.xpose.msra.mxu0 0.0
          %1066 = vmatprep.subr.mxu0 0.0
          %1067 = vmatpush1.xpose.msra.mxu0 0.0
          %1068 = vmatprep.subr.mxu0 0.0
          %1069 = vmatpush1.xpose.msra.mxu0 0.0
          %1070 = vmatprep.subr.mxu0 0.0
          %1071 = vmatpush1.xpose.msra.mxu0 0.0
          %1072 = vmatprep.subr.mxu0 0.0
          %1073 = vmatpush1.xpose.msra.mxu0 0.0
          %1074 = vmatprep.subr.mxu0 0.0
          %1075 = vmatpush1.xpose.msra.mxu0 0.0
          %1076 = vmatprep.subr.mxu0 0.0
          %1077 = vmatpush1.xpose.msra.mxu0 0.0
          %1078 = vmatprep.subr.mxu0 0.0
          %1079 = vmatpush1.xpose.msra.mxu0 0.0
          %1080 = vmatprep.subr.mxu0 0.0
          %1081 = vmatpush1.xpose.msra.mxu0 %v1048
          %1082 = vmatprep.subr.mxu0 0.0
          %1083 = vmatpush2.xpose.msra.mxu0 0.0
          %1084 = vmatprep.subr.mxu0 0.0
          %1085 = vmatpush2.xpose.msra.mxu0 0.0
          %1086 = vmatprep.subr.mxu0 0.0
          %1087 = vmatpush2.xpose.msra.mxu0 0.0
          %1088 = vmatprep.subr.mxu0 0.0
          %1089 = vmatpush2.xpose.msra.mxu0 0.0
          %1090 = vmatprep.subr.mxu0 0.0
          %1091 = vmatpush2.xpose.msra.mxu0 0.0
          %1092 = vmatprep.subr.mxu0 0.0
          %1093 = vmatpush2.xpose.msra.mxu0 0.0
          %1094 = vmatprep.subr.mxu0 0.0
          %1095 = vmatpush2.xpose.msra.mxu0 0.0
          %1096 = vmatprep.subr.mxu0 0.0
          %1097 = vmatpush2.xpose.msra.mxu0 0.0
          %1098 = vmatprep.subr.mxu0 0.0
          %1099 = vmatpush2.xpose.msra.mxu0 0.0
          %1100 = vmatprep.subr.mxu0 0.0
          %1101 = vmatpush2.xpose.msra.mxu0 0.0
          %1102 = vmatprep.subr.mxu0 0.0
          %1103 = vmatpush2.xpose.msra.mxu0 0.0
          %1104 = vmatprep.subr.mxu0 0.0
          %1105 = vmatpush2.xpose.msra.mxu0 0.0
          %1106 = vmatprep.subr.mxu0 0.0
          %1107 = vmatpush2.xpose.msra.mxu0 0.0
          %1108 = vmatprep.subr.mxu0 0.0
          %1109 = vmatpush2.xpose.msra.mxu0 0.0
          %1110 = vmatprep.subr.mxu0 0.0
          %1111 = vmatpush2.xpose.msra.mxu0 0.0
          %1112 = vmatprep.subr.mxu0 0.0
          %1113 = vmatpush2.xpose.msra.mxu0 0.0
          %1114 = vmatprep.mubr.f32.mxu0 0.0
          %1115 = vmatmul.mubr.f32.gmra.mxu0 %v1046
          %v1116 = vpop.f32.mrf.mxu0
          %v1117 = vadd.f32 0.0, %v1116
          %v1118 = vpop.f32.mrf.mxu0
          %1119 = vdwg.mxu0
          %v1120 = vsel %vm881, %v1117, -inf
          %1121 = vmax.xlane.f32.xlu0 %v1120
          %v1122 = vpop.xlane.xlu0 %1121
          %v1123 = vsub.f32 %v1117, %v1122
          %v1124 = vmul.f32 %v1123, 1.442695
          %v1125 = vpow.pop %v1124
          %v1126 = vsel %vm881, %v1125, 0.0
          %1127 = vadd.xlane.f32.xlu0 %v1126
          %v1128 = vpop.xlane.xlu0 %1127
          %1130 = vrot.lane.b32.xlu0 %v878, 120
          %v1131 = vpop.permute.xlu0 %1130
          %v1134 = vsel %vm881, %v1125, 0
          %1136 = vmatprep.subr.mxu0 0.0
          %1137 = vmatpush1.msra.mxu0 0.0
          %1138 = vmatprep.subr.mxu0 0.0
          %1139 = vmatpush1.msra.mxu0 0.0
          %1140 = vmatprep.subr.mxu0 0.0
          %1141 = vmatpush1.msra.mxu0 0.0
          %1142 = vmatprep.subr.mxu0 0.0
          %1143 = vmatpush1.msra.mxu0 0.0
          %1144 = vmatprep.subr.mxu0 0.0
          %1145 = vmatpush1.msra.mxu0 0.0
          %1146 = vmatprep.subr.mxu0 0.0
          %1147 = vmatpush1.msra.mxu0 0.0
          %1148 = vmatprep.subr.mxu0 0.0
          %1149 = vmatpush1.msra.mxu0 0.0
          %1150 = vmatprep.subr.mxu0 0.0
          %1151 = vmatpush1.msra.mxu0 0.0
          %1152 = vmatprep.subr.mxu0 0.0
          %1153 = vmatpush1.msra.mxu0 0.0
          %1154 = vmatprep.subr.mxu0 0.0
          %1155 = vmatpush1.msra.mxu0 0.0
          %1156 = vmatprep.subr.mxu0 0.0
          %1157 = vmatpush1.msra.mxu0 0.0
          %1158 = vmatprep.subr.mxu0 0.0
          %1159 = vmatpush1.msra.mxu0 0.0
          %1160 = vmatprep.subr.mxu0 0.0
          %1161 = vmatpush1.msra.mxu0 0.0
          %1162 = vmatprep.subr.mxu0 0.0
          %1163 = vmatpush1.msra.mxu0 0.0
          %1164 = vmatprep.subr.mxu0 0.0
          %1165 = vmatpush1.msra.mxu0 0.0
          %1166 = vmatprep.subr.mxu0 0.0
          %1167 = vmatpush1.msra.mxu0 %v1131
          %1168 = vmatprep.subr.mxu0 0.0
          %1169 = vmatpush2.msra.mxu0 0.0
          %1170 = vmatprep.subr.mxu0 0.0
          %1171 = vmatpush2.msra.mxu0 0.0
          %1172 = vmatprep.subr.mxu0 0.0
          %1173 = vmatpush2.msra.mxu0 0.0
          %1174 = vmatprep.subr.mxu0 0.0
          %1175 = vmatpush2.msra.mxu0 0.0
          %1176 = vmatprep.subr.mxu0 0.0
          %1177 = vmatpush2.msra.mxu0 0.0
          %1178 = vmatprep.subr.mxu0 0.0
          %1179 = vmatpush2.msra.mxu0 0.0
          %1180 = vmatprep.subr.mxu0 0.0
          %1181 = vmatpush2.msra.mxu0 0.0
          %1182 = vmatprep.subr.mxu0 0.0
          %1183 = vmatpush2.msra.mxu0 0.0
          %1184 = vmatprep.subr.mxu0 0.0
          %1185 = vmatpush2.msra.mxu0 0.0
          %1186 = vmatprep.subr.mxu0 0.0
          %1187 = vmatpush2.msra.mxu0 0.0
          %1188 = vmatprep.subr.mxu0 0.0
          %1189 = vmatpush2.msra.mxu0 0.0
          %1190 = vmatprep.subr.mxu0 0.0
          %1191 = vmatpush2.msra.mxu0 0.0
          %1192 = vmatprep.subr.mxu0 0.0
          %1193 = vmatpush2.msra.mxu0 0.0
          %1194 = vmatprep.subr.mxu0 0.0
          %1195 = vmatpush2.msra.mxu0 0.0
          %1196 = vmatprep.subr.mxu0 0.0
          %1197 = vmatpush2.msra.mxu0 0.0
          %1198 = vmatprep.subr.mxu0 0.0
          %1199 = vmatpush2.msra.mxu0 0.0
          %1200 = vmatprep.mubr.f32.mxu0 0.0
          %1201 = vmatmul.mubr.f32.gmra.mxu0 %v1134
          %v1202 = vpop.f32.mrf.mxu0
          %v1203 = vadd.f32 0.0, %v1202
          %v1204 = vpop.f32.mrf.mxu0
          %1205 = vdwg.mxu0
          %v1206 = vrcp.pop %v1128
          %v1207 = vmul.f32 %v1203, %v1206
          %1208 = vrot.lane.b32.xlu0 %v716, 112
          %v1209 = vpop.permute.xlu0 %1208
          %1210 = vrot.lane.b32.xlu0 %v797, 112
          %v1211 = vpop.permute.xlu0 %1210
          %v1212 = vsel %vm881, %v1209, 0
          %v1214 = vsel %vm881, %v1211, 0
          %1216 = vmatprep.subr.mxu0 0.0
          %1217 = vmatpush1.xpose.msra.mxu0 0.0
          %1218 = vmatprep.subr.mxu0 0.0
          %1219 = vmatpush1.xpose.msra.mxu0 0.0
          %1220 = vmatprep.subr.mxu0 0.0
          %1221 = vmatpush1.xpose.msra.mxu0 0.0
          %1222 = vmatprep.subr.mxu0 0.0
          %1223 = vmatpush1.xpose.msra.mxu0 0.0
          %1224 = vmatprep.subr.mxu0 0.0
          %1225 = vmatpush1.xpose.msra.mxu0 0.0
          %1226 = vmatprep.subr.mxu0 0.0
          %1227 = vmatpush1.xpose.msra.mxu0 0.0
          %1228 = vmatprep.subr.mxu0 0.0
          %1229 = vmatpush1.xpose.msra.mxu0 0.0
          %1230 = vmatprep.subr.mxu0 0.0
          %1231 = vmatpush1.xpose.msra.mxu0 0.0
          %1232 = vmatprep.subr.mxu0 0.0
          %1233 = vmatpush1.xpose.msra.mxu0 0.0
          %1234 = vmatprep.subr.mxu0 0.0
          %1235 = vmatpush1.xpose.msra.mxu0 0.0
          %1236 = vmatprep.subr.mxu0 0.0
          %1237 = vmatpush1.xpose.msra.mxu0 0.0
          %1238 = vmatprep.subr.mxu0 0.0
          %1239 = vmatpush1.xpose.msra.mxu0 0.0
          %1240 = vmatprep.subr.mxu0 0.0
          %1241 = vmatpush1.xpose.msra.mxu0 0.0
          %1242 = vmatprep.subr.mxu0 0.0
          %1243 = vmatpush1.xpose.msra.mxu0 0.0
          %1244 = vmatprep.subr.mxu0 0.0
          %1245 = vmatpush1.xpose.msra.mxu0 0.0
          %1246 = vmatprep.subr.mxu0 0.0
          %1247 = vmatpush1.xpose.msra.mxu0 %v1214
          %1248 = vmatprep.subr.mxu0 0.0
          %1249 = vmatpush2.xpose.msra.mxu0 0.0
          %1250 = vmatprep.subr.mxu0 0.0
          %1251 = vmatpush2.xpose.msra.mxu0 0.0
          %1252 = vmatprep.subr.mxu0 0.0
          %1253 = vmatpush2.xpose.msra.mxu0 0.0
          %1254 = vmatprep.subr.mxu0 0.0
          %1255 = vmatpush2.xpose.msra.mxu0 0.0
          %1256 = vmatprep.subr.mxu0 0.0
          %1257 = vmatpush2.xpose.msra.mxu0 0.0
          %1258 = vmatprep.subr.mxu0 0.0
          %1259 = vmatpush2.xpose.msra.mxu0 0.0
          %1260 = vmatprep.subr.mxu0 0.0
          %1261 = vmatpush2.xpose.msra.mxu0 0.0
          %1262 = vmatprep.subr.mxu0 0.0
          %1263 = vmatpush2.xpose.msra.mxu0 0.0
          %1264 = vmatprep.subr.mxu0 0.0
          %1265 = vmatpush2.xpose.msra.mxu0 0.0
          %1266 = vmatprep.subr.mxu0 0.0
          %1267 = vmatpush2.xpose.msra.mxu0 0.0
          %1268 = vmatprep.subr.mxu0 0.0
          %1269 = vmatpush2.xpose.msra.mxu0 0.0
          %1270 = vmatprep.subr.mxu0 0.0
          %1271 = vmatpush2.xpose.msra.mxu0 0.0
          %1272 = vmatprep.subr.mxu0 0.0
          %1273 = vmatpush2.xpose.msra.mxu0 0.0
          %1274 = vmatprep.subr.mxu0 0.0
          %1275 = vmatpush2.xpose.msra.mxu0 0.0
          %1276 = vmatprep.subr.mxu0 0.0
          %1277 = vmatpush2.xpose.msra.mxu0 0.0
          %1278 = vmatprep.subr.mxu0 0.0
          %1279 = vmatpush2.xpose.msra.mxu0 0.0
          %1280 = vmatprep.mubr.f32.mxu0 0.0
          %1281 = vmatmul.mubr.f32.gmra.mxu0 %v1212
          %v1282 = vpop.f32.mrf.mxu0
          %v1283 = vadd.f32 0.0, %v1282
          %v1284 = vpop.f32.mrf.mxu0
          %1285 = vdwg.mxu0
          %v1286 = vsel %vm881, %v1283, -inf
          %1287 = vmax.xlane.f32.xlu0 %v1286
          %v1288 = vpop.xlane.xlu0 %1287
          %v1289 = vsub.f32 %v1283, %v1288
          %v1290 = vmul.f32 %v1289, 1.442695
          %v1291 = vpow.pop %v1290
          %v1292 = vsel %vm881, %v1291, 0.0
          %1293 = vadd.xlane.f32.xlu0 %v1292
          %v1294 = vpop.xlane.xlu0 %1293
          %1295 = vrot.lane.b32.xlu0 %v878, 112
          %v1296 = vpop.permute.xlu0 %1295
          %v1299 = vsel %vm881, %v1291, 0
          %1301 = vmatprep.subr.mxu0 0.0
          %1302 = vmatpush1.msra.mxu0 0.0
          %1303 = vmatprep.subr.mxu0 0.0
          %1304 = vmatpush1.msra.mxu0 0.0
          %1305 = vmatprep.subr.mxu0 0.0
          %1306 = vmatpush1.msra.mxu0 0.0
          %1307 = vmatprep.subr.mxu0 0.0
          %1308 = vmatpush1.msra.mxu0 0.0
          %1309 = vmatprep.subr.mxu0 0.0
          %1310 = vmatpush1.msra.mxu0 0.0
          %1311 = vmatprep.subr.mxu0 0.0
          %1312 = vmatpush1.msra.mxu0 0.0
          %1313 = vmatprep.subr.mxu0 0.0
          %1314 = vmatpush1.msra.mxu0 0.0
          %1315 = vmatprep.subr.mxu0 0.0
          %1316 = vmatpush1.msra.mxu0 0.0
          %1317 = vmatprep.subr.mxu0 0.0
          %1318 = vmatpush1.msra.mxu0 0.0
          %1319 = vmatprep.subr.mxu0 0.0
          %1320 = vmatpush1.msra.mxu0 0.0
          %1321 = vmatprep.subr.mxu0 0.0
          %1322 = vmatpush1.msra.mxu0 0.0
          %1323 = vmatprep.subr.mxu0 0.0
          %1324 = vmatpush1.msra.mxu0 0.0
          %1325 = vmatprep.subr.mxu0 0.0
          %1326 = vmatpush1.msra.mxu0 0.0
          %1327 = vmatprep.subr.mxu0 0.0
          %1328 = vmatpush1.msra.mxu0 0.0
          %1329 = vmatprep.subr.mxu0 0.0
          %1330 = vmatpush1.msra.mxu0 0.0
          %1331 = vmatprep.subr.mxu0 0.0
          %1332 = vmatpush1.msra.mxu0 %v1296
          %1333 = vmatprep.subr.mxu0 0.0
          %1334 = vmatpush2.msra.mxu0 0.0
          %1335 = vmatprep.subr.mxu0 0.0
          %1336 = vmatpush2.msra.mxu0 0.0
          %1337 = vmatprep.subr.mxu0 0.0
          %1338 = vmatpush2.msra.mxu0 0.0
          %1339 = vmatprep.subr.mxu0 0.0
          %1340 = vmatpush2.msra.mxu0 0.0
          %1341 = vmatprep.subr.mxu0 0.0
          %1342 = vmatpush2.msra.mxu0 0.0
          %1343 = vmatprep.subr.mxu0 0.0
          %1344 = vmatpush2.msra.mxu0 0.0
          %1345 = vmatprep.subr.mxu0 0.0
          %1346 = vmatpush2.msra.mxu0 0.0
          %1347 = vmatprep.subr.mxu0 0.0
          %1348 = vmatpush2.msra.mxu0 0.0
          %1349 = vmatprep.subr.mxu0 0.0
          %1350 = vmatpush2.msra.mxu0 0.0
          %1351 = vmatprep.subr.mxu0 0.0
          %1352 = vmatpush2.msra.mxu0 0.0
          %1353 = vmatprep.subr.mxu0 0.0
          %1354 = vmatpush2.msra.mxu0 0.0
          %1355 = vmatprep.subr.mxu0 0.0
          %1356 = vmatpush2.msra.mxu0 0.0
          %1357 = vmatprep.subr.mxu0 0.0
          %1358 = vmatpush2.msra.mxu0 0.0
          %1359 = vmatprep.subr.mxu0 0.0
          %1360 = vmatpush2.msra.mxu0 0.0
          %1361 = vmatprep.subr.mxu0 0.0
          %1362 = vmatpush2.msra.mxu0 0.0
          %1363 = vmatprep.subr.mxu0 0.0
          %1364 = vmatpush2.msra.mxu0 0.0
          %1365 = vmatprep.mubr.f32.mxu0 0.0
          %1366 = vmatmul.mubr.f32.gmra.mxu0 %v1299
          %v1367 = vpop.f32.mrf.mxu0
          %v1368 = vadd.f32 0.0, %v1367
          %v1369 = vpop.f32.mrf.mxu0
          %1370 = vdwg.mxu0
          %v1371 = vrcp.pop %v1294
          %v1372 = vmul.f32 %v1368, %v1371
          %1373 = vrot.lane.b32.xlu0 %v716, 104
          %v1374 = vpop.permute.xlu0 %1373
          %1375 = vrot.lane.b32.xlu0 %v797, 104
          %v1376 = vpop.permute.xlu0 %1375
          %v1377 = vsel %vm881, %v1374, 0
          %v1379 = vsel %vm881, %v1376, 0
          %1381 = vmatprep.subr.mxu0 0.0
          %1382 = vmatpush1.xpose.msra.mxu0 0.0
          %1383 = vmatprep.subr.mxu0 0.0
          %1384 = vmatpush1.xpose.msra.mxu0 0.0
          %1385 = vmatprep.subr.mxu0 0.0
          %1386 = vmatpush1.xpose.msra.mxu0 0.0
          %1387 = vmatprep.subr.mxu0 0.0
          %1388 = vmatpush1.xpose.msra.mxu0 0.0
          %1389 = vmatprep.subr.mxu0 0.0
          %1390 = vmatpush1.xpose.msra.mxu0 0.0
          %1391 = vmatprep.subr.mxu0 0.0
          %1392 = vmatpush1.xpose.msra.mxu0 0.0
          %1393 = vmatprep.subr.mxu0 0.0
          %1394 = vmatpush1.xpose.msra.mxu0 0.0
          %1395 = vmatprep.subr.mxu0 0.0
          %1396 = vmatpush1.xpose.msra.mxu0 0.0
          %1397 = vmatprep.subr.mxu0 0.0
          %1398 = vmatpush1.xpose.msra.mxu0 0.0
          %1399 = vmatprep.subr.mxu0 0.0
          %1400 = vmatpush1.xpose.msra.mxu0 0.0
          %1401 = vmatprep.subr.mxu0 0.0
          %1402 = vmatpush1.xpose.msra.mxu0 0.0
          %1403 = vmatprep.subr.mxu0 0.0
          %1404 = vmatpush1.xpose.msra.mxu0 0.0
          %1405 = vmatprep.subr.mxu0 0.0
          %1406 = vmatpush1.xpose.msra.mxu0 0.0
          %1407 = vmatprep.subr.mxu0 0.0
          %1408 = vmatpush1.xpose.msra.mxu0 0.0
          %1409 = vmatprep.subr.mxu0 0.0
          %1410 = vmatpush1.xpose.msra.mxu0 0.0
          %1411 = vmatprep.subr.mxu0 0.0
          %1412 = vmatpush1.xpose.msra.mxu0 %v1379
          %1413 = vmatprep.subr.mxu0 0.0
          %1414 = vmatpush2.xpose.msra.mxu0 0.0
          %1415 = vmatprep.subr.mxu0 0.0
          %1416 = vmatpush2.xpose.msra.mxu0 0.0
          %1417 = vmatprep.subr.mxu0 0.0
          %1418 = vmatpush2.xpose.msra.mxu0 0.0
          %1419 = vmatprep.subr.mxu0 0.0
          %1420 = vmatpush2.xpose.msra.mxu0 0.0
          %1421 = vmatprep.subr.mxu0 0.0
          %1422 = vmatpush2.xpose.msra.mxu0 0.0
          %1423 = vmatprep.subr.mxu0 0.0
          %1424 = vmatpush2.xpose.msra.mxu0 0.0
          %1425 = vmatprep.subr.mxu0 0.0
          %1426 = vmatpush2.xpose.msra.mxu0 0.0
          %1427 = vmatprep.subr.mxu0 0.0
          %1428 = vmatpush2.xpose.msra.mxu0 0.0
          %1429 = vmatprep.subr.mxu0 0.0
          %1430 = vmatpush2.xpose.msra.mxu0 0.0
          %1431 = vmatprep.subr.mxu0 0.0
          %1432 = vmatpush2.xpose.msra.mxu0 0.0
          %1433 = vmatprep.subr.mxu0 0.0
          %1434 = vmatpush2.xpose.msra.mxu0 0.0
          %1435 = vmatprep.subr.mxu0 0.0
          %1436 = vmatpush2.xpose.msra.mxu0 0.0
          %1437 = vmatprep.subr.mxu0 0.0
          %1438 = vmatpush2.xpose.msra.mxu0 0.0
          %1439 = vmatprep.subr.mxu0 0.0
          %1440 = vmatpush2.xpose.msra.mxu0 0.0
          %1441 = vmatprep.subr.mxu0 0.0
          %1442 = vmatpush2.xpose.msra.mxu0 0.0
          %1443 = vmatprep.subr.mxu0 0.0
          %1444 = vmatpush2.xpose.msra.mxu0 0.0
          %1445 = vmatprep.mubr.f32.mxu0 0.0
          %1446 = vmatmul.mubr.f32.gmra.mxu0 %v1377
          %v1447 = vpop.f32.mrf.mxu0
          %v1448 = vadd.f32 0.0, %v1447
          %v1449 = vpop.f32.mrf.mxu0
          %1450 = vdwg.mxu0
          %v1451 = vsel %vm881, %v1448, -inf
          %1452 = vmax.xlane.f32.xlu0 %v1451
          %v1453 = vpop.xlane.xlu0 %1452
          %v1454 = vsub.f32 %v1448, %v1453
          %v1455 = vmul.f32 %v1454, 1.442695
          %v1456 = vpow.pop %v1455
          %v1457 = vsel %vm881, %v1456, 0.0
          %1458 = vadd.xlane.f32.xlu0 %v1457
          %v1459 = vpop.xlane.xlu0 %1458
          %1460 = vrot.lane.b32.xlu0 %v878, 104
          %v1461 = vpop.permute.xlu0 %1460
          %v1464 = vsel %vm881, %v1456, 0
          %1466 = vmatprep.subr.mxu0 0.0
          %1467 = vmatpush1.msra.mxu0 0.0
          %1468 = vmatprep.subr.mxu0 0.0
          %1469 = vmatpush1.msra.mxu0 0.0
          %1470 = vmatprep.subr.mxu0 0.0
          %1471 = vmatpush1.msra.mxu0 0.0
          %1472 = vmatprep.subr.mxu0 0.0
          %1473 = vmatpush1.msra.mxu0 0.0
          %1474 = vmatprep.subr.mxu0 0.0
          %1475 = vmatpush1.msra.mxu0 0.0
          %1476 = vmatprep.subr.mxu0 0.0
          %1477 = vmatpush1.msra.mxu0 0.0
          %1478 = vmatprep.subr.mxu0 0.0
          %1479 = vmatpush1.msra.mxu0 0.0
          %1480 = vmatprep.subr.mxu0 0.0
          %1481 = vmatpush1.msra.mxu0 0.0
          %1482 = vmatprep.subr.mxu0 0.0
          %1483 = vmatpush1.msra.mxu0 0.0
          %1484 = vmatprep.subr.mxu0 0.0
          %1485 = vmatpush1.msra.mxu0 0.0
          %1486 = vmatprep.subr.mxu0 0.0
          %1487 = vmatpush1.msra.mxu0 0.0
          %1488 = vmatprep.subr.mxu0 0.0
          %1489 = vmatpush1.msra.mxu0 0.0
          %1490 = vmatprep.subr.mxu0 0.0
          %1491 = vmatpush1.msra.mxu0 0.0
          %1492 = vmatprep.subr.mxu0 0.0
          %1493 = vmatpush1.msra.mxu0 0.0
          %1494 = vmatprep.subr.mxu0 0.0
          %1495 = vmatpush1.msra.mxu0 0.0
          %1496 = vmatprep.subr.mxu0 0.0
          %1497 = vmatpush1.msra.mxu0 %v1461
          %1498 = vmatprep.subr.mxu0 0.0
          %1499 = vmatpush2.msra.mxu0 0.0
          %1500 = vmatprep.subr.mxu0 0.0
          %1501 = vmatpush2.msra.mxu0 0.0
          %1502 = vmatprep.subr.mxu0 0.0
          %1503 = vmatpush2.msra.mxu0 0.0
          %1504 = vmatprep.subr.mxu0 0.0
          %1505 = vmatpush2.msra.mxu0 0.0
          %1506 = vmatprep.subr.mxu0 0.0
          %1507 = vmatpush2.msra.mxu0 0.0
          %1508 = vmatprep.subr.mxu0 0.0
          %1509 = vmatpush2.msra.mxu0 0.0
          %1510 = vmatprep.subr.mxu0 0.0
          %1511 = vmatpush2.msra.mxu0 0.0
          %1512 = vmatprep.subr.mxu0 0.0
          %1513 = vmatpush2.msra.mxu0 0.0
          %1514 = vmatprep.subr.mxu0 0.0
          %1515 = vmatpush2.msra.mxu0 0.0
          %1516 = vmatprep.subr.mxu0 0.0
          %1517 = vmatpush2.msra.mxu0 0.0
          %1518 = vmatprep.subr.mxu0 0.0
          %1519 = vmatpush2.msra.mxu0 0.0
          %1520 = vmatprep.subr.mxu0 0.0
          %1521 = vmatpush2.msra.mxu0 0.0
          %1522 = vmatprep.subr.mxu0 0.0
          %1523 = vmatpush2.msra.mxu0 0.0
          %1524 = vmatprep.subr.mxu0 0.0
          %1525 = vmatpush2.msra.mxu0 0.0
          %1526 = vmatprep.subr.mxu0 0.0
          %1527 = vmatpush2.msra.mxu0 0.0
          %1528 = vmatprep.subr.mxu0 0.0
          %1529 = vmatpush2.msra.mxu0 0.0
          %1530 = vmatprep.mubr.f32.mxu0 0.0
          %1531 = vmatmul.mubr.f32.gmra.mxu0 %v1464
          %v1532 = vpop.f32.mrf.mxu0
          %v1533 = vadd.f32 0.0, %v1532
          %v1534 = vpop.f32.mrf.mxu0
          %1535 = vdwg.mxu0
          %v1536 = vrcp.pop %v1459
          %v1537 = vmul.f32 %v1533, %v1536
          %1539 = vrot.lane.b32.xlu0 %v1207, 8
          %v1540 = vpop.permute.xlu0 %1539
          %1543 = vrot.lane.b32.xlu0 %v1372, 16
          %v1544 = vpop.permute.xlu0 %1543
          %1547 = vrot.lane.b32.xlu0 %v1537, 24
          %v1548 = vpop.permute.xlu0 %1547
          %v1550 = vsel %vm881, %v1041, %v1540
          %vm1551 = vcmask 130048
          %v1552 = vsel %vm1551, %v1550, %v1544
          %vm1553 = vcmask 195584
          %v1554 = vsel %vm1553, %v1552, %v1548
          %v1555 = vld [vmem:[%s4] sm:$0xff]
          %v1556 = vld [vmem:[%s4 + $0x8] sm:$0xff]
          %v1557 = vld [vmem:[%s4 + $0x10] sm:$0xff]
          %v1558 = vld [vmem:[%s4 + $0x18] sm:$0xff]
          %v1559 = vld [vmem:[%s8] sm:$0x1]
          %v1561 = vlaneseq
          %v1562 = vshrl.u32 %v1561, 7
          %v1563 = vsub.s32 0, %v1562
          %v1564 = vrot.slane %v1559, %v1563
          %v1567 = vsel %vm645, %v1554, 0
          %1569 = vmatprep.subr.mxu0 0.0
          %1570 = vmatpush1.msra.mxu0 0.0
          %1571 = vmatprep.subr.mxu0 0.0
          %1572 = vmatpush1.msra.mxu0 0.0
          %1573 = vmatprep.subr.mxu0 0.0
          %1574 = vmatpush1.msra.mxu0 0.0
          %1575 = vmatprep.subr.mxu0 0.0
          %1576 = vmatpush1.msra.mxu0 0.0
          %1577 = vmatprep.subr.mxu0 0.0
          %1578 = vmatpush1.msra.mxu0 0.0
          %1579 = vmatprep.subr.mxu0 0.0
          %1580 = vmatpush1.msra.mxu0 0.0
          %1581 = vmatprep.subr.mxu0 0.0
          %1582 = vmatpush1.msra.mxu0 0.0
          %1583 = vmatprep.subr.mxu0 0.0
          %1584 = vmatpush1.msra.mxu0 0.0
          %1585 = vmatprep.subr.mxu0 0.0
          %1586 = vmatpush1.msra.mxu0 0.0
          %1587 = vmatprep.subr.mxu0 0.0
          %1588 = vmatpush1.msra.mxu0 0.0
          %1589 = vmatprep.subr.mxu0 0.0
          %1590 = vmatpush1.msra.mxu0 0.0
          %1591 = vmatprep.subr.mxu0 0.0
          %1592 = vmatpush1.msra.mxu0 0.0
          %1593 = vmatprep.subr.mxu0 0.0
          %1594 = vmatpush1.msra.mxu0 %v1558
          %1595 = vmatprep.subr.mxu0 0.0
          %1596 = vmatpush1.msra.mxu0 %v1557
          %1597 = vmatprep.subr.mxu0 0.0
          %1598 = vmatpush1.msra.mxu0 %v1556
          %1599 = vmatprep.subr.mxu0 0.0
          %1600 = vmatpush1.msra.mxu0 %v1555
          %1601 = vmatprep.subr.mxu0 0.0
          %1602 = vmatpush2.msra.mxu0 0.0
          %1603 = vmatprep.subr.mxu0 0.0
          %1604 = vmatpush2.msra.mxu0 0.0
          %1605 = vmatprep.subr.mxu0 0.0
          %1606 = vmatpush2.msra.mxu0 0.0
          %1607 = vmatprep.subr.mxu0 0.0
          %1608 = vmatpush2.msra.mxu0 0.0
          %1609 = vmatprep.subr.mxu0 0.0
          %1610 = vmatpush2.msra.mxu0 0.0
          %1611 = vmatprep.subr.mxu0 0.0
          %1612 = vmatpush2.msra.mxu0 0.0
          %1613 = vmatprep.subr.mxu0 0.0
          %1614 = vmatpush2.msra.mxu0 0.0
          %1615 = vmatprep.subr.mxu0 0.0
          %1616 = vmatpush2.msra.mxu0 0.0
          %1617 = vmatprep.subr.mxu0 0.0
          %1618 = vmatpush2.msra.mxu0 0.0
          %1619 = vmatprep.subr.mxu0 0.0
          %1620 = vmatpush2.msra.mxu0 0.0
          %1621 = vmatprep.subr.mxu0 0.0
          %1622 = vmatpush2.msra.mxu0 0.0
          %1623 = vmatprep.subr.mxu0 0.0
          %1624 = vmatpush2.msra.mxu0 0.0
          %1625 = vmatprep.subr.mxu0 0.0
          %1626 = vmatpush2.msra.mxu0 0.0
          %1627 = vmatprep.subr.mxu0 0.0
          %1628 = vmatpush2.msra.mxu0 0.0
          %1629 = vmatprep.subr.mxu0 0.0
          %1630 = vmatpush2.msra.mxu0 0.0
          %1631 = vmatprep.subr.mxu0 0.0
          %1632 = vmatpush2.msra.mxu0 0.0
          %1633 = vmatprep.mubr.f32.mxu0 0.0
          %1634 = vmatmul.mubr.f32.gmra.mxu0 %v1567
          %v1635 = vpop.f32.mrf.mxu0
          %v1636 = vadd.f32 %v1564, %v1635
          %v1637 = vpop.f32.mrf.mxu0
          %1638 = vdwg.mxu0
          %v1639 = vadd.f32 %v1636, %v633
          %v1640 = vld [vmem:[%s13] sm:$0x1]
          %v1641 = vld [vmem:[%s14] sm:$0x1]
          %v1642 = vsel %vm645, %v1639, 0.0
          %1643 = vadd.xlane.f32.xlu0 %v1642
          %v1644 = vpop.xlane.xlu0 %1643
          %v1645 = vrcp.pop 32.0
          %v1646 = vmul.f32 %v1644, %v1645
          %v1647 = vsub.f32 %v1639, %v1646
          %v1648 = vmul.f32 %v1647, %v1647
          %v1649 = vsel %vm645, %v1648, 0.0
          %1650 = vadd.xlane.f32.xlu0 %v1649
          %v1651 = vpop.xlane.xlu0 %1650
          %v1652 = vmul.f32 %v1651, 0.032258064
          %v1653 = vrsqrt.pop %v1652
          %v1654 = vmul.f32 %v1652, %v1653
          %vm1655 = vcmp.eq.f32.partialorder %v1652, inf
          %v1656 = vsel %vm1655, %v1652, %v1654
          %vm1657 = vcmp.eq.f32.partialorder %v1652, 0.0
          %v1658 = vand.u32 %v1652, 2147483648
          %v1659 = vsel %vm1657, %v1658, %v1656
          %v1660 = vadd.f32 %v1659, 1e-06
          %v1661 = vrcp.pop %v1660
          %v1663 = vlaneseq
          %v1664 = vshrl.u32 %v1663, 7
          %v1665 = vsub.s32 0, %v1664
          %v1666 = vrot.slane %v1640, %v1665
          %v1668 = vmul.f32 %v1666, %v1647
          %v1669 = vmul.f32 %v1668, %v1661
          %v1671 = vlaneseq
          %v1672 = vshrl.u32 %v1671, 7
          %v1673 = vsub.s32 0, %v1672
          %v1674 = vrot.slane %v1641, %v1673
          %v1676 = vadd.f32 %v1669, %v1674
          %1677 = vst.msk [vmem:[#allocation2] sm:$0xff] %vm645, %v1676
          %1678 = vst.msk [vmem:[#allocation3] sm:$0xff] %vm645, 0.0
        $region96: #{tpu_custom_call.1} parent=87 // pred_fallthru
          _
        %v1679 = vld [vmem:[#allocation2] sm:$0xff]
        %v1680 = vld [vmem:[%s619] sm:$0xff]
        %v1681 = vld [vmem:[%s619 + $0x8] sm:$0xff]
        %v1682 = vld [vmem:[%s619 + $0x10] sm:$0xff]
        %v1683 = vld [vmem:[%s619 + $0x18] sm:$0xff]
        %v1684 = vld [vmem:[%s622] sm:$0x1]
        %v1686 = vlaneseq
        %v1687 = vshrl.u32 %v1686, 7
        %v1688 = vsub.s32 0, %v1687
        %v1689 = vrot.slane %v1684, %v1688
        %vm1691 = vcmask 261120
        %v1693 = vsel %vm1691, %v1679, 0
        %1695 = vmatprep.subr.mxu0 0.0
        %1696 = vmatpush1.msra.mxu0 0.0
        %1697 = vmatprep.subr.mxu0 0.0
        %1698 = vmatpush1.msra.mxu0 0.0
        %1699 = vmatprep.subr.mxu0 0.0
        %1700 = vmatpush1.msra.mxu0 0.0
        %1701 = vmatprep.subr.mxu0 0.0
        %1702 = vmatpush1.msra.mxu0 0.0
        %1703 = vmatprep.subr.mxu0 0.0
        %1704 = vmatpush1.msra.mxu0 0.0
        %1705 = vmatprep.subr.mxu0 0.0
        %1706 = vmatpush1.msra.mxu0 0.0
        %1707 = vmatprep.subr.mxu0 0.0
        %1708 = vmatpush1.msra.mxu0 0.0
        %1709 = vmatprep.subr.mxu0 0.0
        %1710 = vmatpush1.msra.mxu0 0.0
        %1711 = vmatprep.subr.mxu0 0.0
        %1712 = vmatpush1.msra.mxu0 0.0
        %1713 = vmatprep.subr.mxu0 0.0
        %1714 = vmatpush1.msra.mxu0 0.0
        %1715 = vmatprep.subr.mxu0 0.0
        %1716 = vmatpush1.msra.mxu0 0.0
        %1717 = vmatprep.subr.mxu0 0.0
        %1718 = vmatpush1.msra.mxu0 0.0
        %1719 = vmatprep.subr.mxu0 0.0
        %1720 = vmatpush1.msra.mxu0 %v1683
        %1721 = vmatprep.subr.mxu0 0.0
        %1722 = vmatpush1.msra.mxu0 %v1682
        %1723 = vmatprep.subr.mxu0 0.0
        %1724 = vmatpush1.msra.mxu0 %v1681
        %1725 = vmatprep.subr.mxu0 0.0
        %1726 = vmatpush1.msra.mxu0 %v1680
        %1727 = vmatprep.subr.mxu0 0.0
        %1728 = vmatpush2.msra.mxu0 0.0
        %1729 = vmatprep.subr.mxu0 0.0
        %1730 = vmatpush2.msra.mxu0 0.0
        %1731 = vmatprep.subr.mxu0 0.0
        %1732 = vmatpush2.msra.mxu0 0.0
        %1733 = vmatprep.subr.mxu0 0.0
        %1734 = vmatpush2.msra.mxu0 0.0
        %1735 = vmatprep.subr.mxu0 0.0
        %1736 = vmatpush2.msra.mxu0 0.0
        %1737 = vmatprep.subr.mxu0 0.0
        %1738 = vmatpush2.msra.mxu0 0.0
        %1739 = vmatprep.subr.mxu0 0.0
        %1740 = vmatpush2.msra.mxu0 0.0
        %1741 = vmatprep.subr.mxu0 0.0
        %1742 = vmatpush2.msra.mxu0 0.0
        %1743 = vmatprep.subr.mxu0 0.0
        %1744 = vmatpush2.msra.mxu0 0.0
        %1745 = vmatprep.subr.mxu0 0.0
        %1746 = vmatpush2.msra.mxu0 0.0
        %1747 = vmatprep.subr.mxu0 0.0
        %1748 = vmatpush2.msra.mxu0 0.0
        %1749 = vmatprep.subr.mxu0 0.0
        %1750 = vmatpush2.msra.mxu0 0.0
        %1751 = vmatprep.subr.mxu0 0.0
        %1752 = vmatpush2.msra.mxu0 0.0
        %1753 = vmatprep.subr.mxu0 0.0
        %1754 = vmatpush2.msra.mxu0 0.0
        %1755 = vmatprep.subr.mxu0 0.0
        %1756 = vmatpush2.msra.mxu0 0.0
        %1757 = vmatprep.subr.mxu0 0.0
        %1758 = vmatpush2.msra.mxu0 0.0
        %1759 = vmatprep.mubr.f32.mxu0 0.0
        %1760 = vmatmul.mubr.f32.gmra.mxu0 %v1693
        %v1761 = vpop.f32.mrf.mxu0
        %v1762 = vadd.f32 %v1689, %v1761
        %v1763 = vpop.f32.mrf.mxu0
        %1764 = vdwg.mxu0
        %v1765 = vmax.f32 %v1762, 0.0
        %v1766 = vld [vmem:[#allocation3] sm:$0xff]
        %v1767 = vld [vmem:[%s627] sm:$0xff]
        %v1768 = vld [vmem:[%s627 + $0x8] sm:$0xff]
        %v1769 = vld [vmem:[%s627 + $0x10] sm:$0xff]
        %v1770 = vld [vmem:[%s627 + $0x18] sm:$0xff]
        %v1771 = vld [vmem:[%s627 + $0x20] sm:$0xff]
        %v1772 = vld [vmem:[%s627 + $0x28] sm:$0xff]
        %v1773 = vld [vmem:[%s627 + $0x30] sm:$0xff]
        %v1774 = vld [vmem:[%s627 + $0x38] sm:$0xff]
        %v1775 = vld [vmem:[%s627 + $0x40] sm:$0xff]
        %v1776 = vld [vmem:[%s627 + $0x48] sm:$0xff]
        %v1777 = vld [vmem:[%s627 + $0x50] sm:$0xff]
        %v1778 = vld [vmem:[%s627 + $0x58] sm:$0xff]
        %v1779 = vld [vmem:[%s627 + $0x60] sm:$0xff]
        %v1780 = vld [vmem:[%s627 + $0x68] sm:$0xff]
        %v1781 = vld [vmem:[%s627 + $0x70] sm:$0xff]
        %v1782 = vld [vmem:[%s627 + $0x78] sm:$0xff]
        %1783 = vmatprep.subr.mxu0 0.0
        %1784 = vmatpush1.msra.mxu0 %v1782
        %1785 = vmatprep.subr.mxu0 0.0
        %1786 = vmatpush1.msra.mxu0 %v1781
        %1787 = vmatprep.subr.mxu0 0.0
        %1788 = vmatpush1.msra.mxu0 %v1780
        %1789 = vmatprep.subr.mxu0 0.0
        %1790 = vmatpush1.msra.mxu0 %v1779
        %1791 = vmatprep.subr.mxu0 0.0
        %1792 = vmatpush1.msra.mxu0 %v1778
        %1793 = vmatprep.subr.mxu0 0.0
        %1794 = vmatpush1.msra.mxu0 %v1777
        %1795 = vmatprep.subr.mxu0 0.0
        %1796 = vmatpush1.msra.mxu0 %v1776
        %1797 = vmatprep.subr.mxu0 0.0
        %1798 = vmatpush1.msra.mxu0 %v1775
        %1799 = vmatprep.subr.mxu0 0.0
        %1800 = vmatpush1.msra.mxu0 %v1774
        %1801 = vmatprep.subr.mxu0 0.0
        %1802 = vmatpush1.msra.mxu0 %v1773
        %1803 = vmatprep.subr.mxu0 0.0
        %1804 = vmatpush1.msra.mxu0 %v1772
        %1805 = vmatprep.subr.mxu0 0.0
        %1806 = vmatpush1.msra.mxu0 %v1771
        %1807 = vmatprep.subr.mxu0 0.0
        %1808 = vmatpush1.msra.mxu0 %v1770
        %1809 = vmatprep.subr.mxu0 0.0
        %1810 = vmatpush1.msra.mxu0 %v1769
        %1811 = vmatprep.subr.mxu0 0.0
        %1812 = vmatpush1.msra.mxu0 %v1768
        %1813 = vmatprep.subr.mxu0 0.0
        %1814 = vmatpush1.msra.mxu0 %v1767
        %1815 = vmatprep.subr.mxu0 0.0
        %1816 = vmatpush2.msra.mxu0 0.0
        %1817 = vmatprep.subr.mxu0 0.0
        %1818 = vmatpush2.msra.mxu0 0.0
        %1819 = vmatprep.subr.mxu0 0.0
        %1820 = vmatpush2.msra.mxu0 0.0
        %1821 = vmatprep.subr.mxu0 0.0
        %1822 = vmatpush2.msra.mxu0 0.0
        %1823 = vmatprep.subr.mxu0 0.0
        %1824 = vmatpush2.msra.mxu0 0.0
        %1825 = vmatprep.subr.mxu0 0.0
        %1826 = vmatpush2.msra.mxu0 0.0
        %1827 = vmatprep.subr.mxu0 0.0
        %1828 = vmatpush2.msra.mxu0 0.0
        %1829 = vmatprep.subr.mxu0 0.0
        %1830 = vmatpush2.msra.mxu0 0.0
        %1831 = vmatprep.subr.mxu0 0.0
        %1832 = vmatpush2.msra.mxu0 0.0
        %1833 = vmatprep.subr.mxu0 0.0
        %1834 = vmatpush2.msra.mxu0 0.0
        %1835 = vmatprep.subr.mxu0 0.0
        %1836 = vmatpush2.msra.mxu0 0.0
        %1837 = vmatprep.subr.mxu0 0.0
        %1838 = vmatpush2.msra.mxu0 0.0
        %1839 = vmatprep.subr.mxu0 0.0
        %1840 = vmatpush2.msra.mxu0 0.0
        %1841 = vmatprep.subr.mxu0 0.0
        %1842 = vmatpush2.msra.mxu0 0.0
        %1843 = vmatprep.subr.mxu0 0.0
        %1844 = vmatpush2.msra.mxu0 0.0
        %1845 = vmatprep.subr.mxu0 0.0
        %1846 = vmatpush2.msra.mxu0 0.0
        %1847 = vmatprep.mubr.f32.mxu0 0.0
        %1848 = vmatmul.mubr.f32.gmra.mxu0 %v1765
        %v1849 = vpop.f32.mrf.mxu0
        %v1850 = vadd.f32 0.0, %v1849
        %v1851 = vpop.f32.mrf.mxu0
        %1852 = vdwg.mxu0
        %v1853 = vadd.f32 %v1766, %v1850
        %1854 = vst.msk [vmem:[#allocation3] sm:$0xff] %vm1691, %v1853
        // Predicated region
        $region97: #{tpu_custom_call.1} parent=87 // pred_check
          %p1855 = pneg %p629
        $region98: #{tpu_custom_call.1} parent=87 // pred_check_branch
          %1857 = sbr.rel (%p1855) target = $region100
        $region99: #{tpu_custom_call.1} parent=87 // pred_region
          %v1858 = vld [vmem:[#allocation3] sm:$0xff]
          %v1859 = vld [vmem:[%s12] sm:$0x1]
          %v1861 = vlaneseq
          %v1862 = vshrl.u32 %v1861, 7
          %v1863 = vsub.s32 0, %v1862
          %v1864 = vrot.slane %v1859, %v1863
          %v1866 = vadd.f32 %v1858, %v1864
          %v1867 = vld [vmem:[#allocation2] sm:$0xff]
          %v1868 = vadd.f32 %v1866, %v1867
          %v1869 = vld [vmem:[%s15] sm:$0x1]
          %v1870 = vld [vmem:[%s16] sm:$0x1]
          %v1871 = vsel %vm1691, %v1868, 0.0
          %1872 = vadd.xlane.f32.xlu0 %v1871
          %v1873 = vpop.xlane.xlu0 %1872
          %v1874 = vrcp.pop 32.0
          %v1875 = vmul.f32 %v1873, %v1874
          %v1876 = vsub.f32 %v1868, %v1875
          %v1877 = vmul.f32 %v1876, %v1876
          %v1878 = vsel %vm1691, %v1877, 0.0
          %1879 = vadd.xlane.f32.xlu0 %v1878
          %v1880 = vpop.xlane.xlu0 %1879
          %v1881 = vmul.f32 %v1880, 0.032258064
          %v1882 = vrsqrt.pop %v1881
          %v1883 = vmul.f32 %v1881, %v1882
          %vm1884 = vcmp.eq.f32.partialorder %v1881, inf
          %v1885 = vsel %vm1884, %v1881, %v1883
          %vm1886 = vcmp.eq.f32.partialorder %v1881, 0.0
          %v1887 = vand.u32 %v1881, 2147483648
          %v1888 = vsel %vm1886, %v1887, %v1885
          %v1889 = vadd.f32 %v1888, 1e-06
          %v1890 = vrcp.pop %v1889
          %v1892 = vlaneseq
          %v1893 = vshrl.u32 %v1892, 7
          %v1894 = vsub.s32 0, %v1893
          %v1895 = vrot.slane %v1869, %v1894
          %v1897 = vmul.f32 %v1895, %v1876
          %v1898 = vmul.f32 %v1897, %v1890
          %v1900 = vlaneseq
          %v1901 = vshrl.u32 %v1900, 7
          %v1902 = vsub.s32 0, %v1901
          %v1903 = vrot.slane %v1870, %v1902
          %v1905 = vadd.f32 %v1898, %v1903
          %1906 = vst.msk [vmem:[%s615] sm:$0xff] %vm1691, %v1905
        $region100: #{tpu_custom_call.1} parent=87 // pred_fallthru
          _
        %s1907 = sand.u32 %s431, 1
        %s1908 = scalar_lea.sflag [#allocation6], %s1907
        %s1909 = sand.u32 %s431, 1
        %s1910 = smul.addr %s1909, 8
        %s1911 = scalar_lea.vmem [#allocation7], %s1910
        // Predicated region
        $region101: #{tpu_custom_call.1} parent=87 // pred_check
          %p1912 = pneg %p441
        $region102: #{tpu_custom_call.1} parent=87 // pred_check_branch
          %1914 = sbr.rel (%p1912) target = $region104
        $region103: #{tpu_custom_call.1} parent=87 // pred_region
          %s1916 = ssub.s32 128, 128
          %1917 = vsyncadd %s1908, %s1916
          %s1918 = smul.addr %s38, 128
          %s1919 = scalar_lea.hbm %s17, %s1918
          %s1921 = sshll.u32 %s1911, 4
          %s1922 = int_to_ptr.vmem [resolvable:$true] %s1921
          %1924 = dma.vmem_to_hbm [thread:$0]  %s1922, 128, %s1919, %s1908
        $region104: #{tpu_custom_call.1} parent=87 // pred_fallthru
          _
      $region88: #{tpu_custom_call.1} parent=5 // pred_fallthru
        _
      %p1925 = scmp.le.s32.totalorder 2, %s29
      // Predicated region
      $region105: #{tpu_custom_call.1} parent=5 // pred_check
        %p1926 = pneg %p1925
      $region106: #{tpu_custom_call.1} parent=5 // pred_check_branch
        %1928 = sbr.rel (%p1926) target = $region108
      $region107: #{tpu_custom_call.1} parent=5 // pred_region
        %s1929 = ssub.s32 %s29, 2
        // Predicated region
        $region109: #{tpu_custom_call.1} parent=107 // pred_check
          %p1930 = pneg %p447
        $region110: #{tpu_custom_call.1} parent=107 // pred_check_branch
          %1932 = sbr.rel (%p1930) target = $region112
        $region111: #{tpu_custom_call.1} parent=107 // pred_region
          %s1933 = sand.u32 %s432, 1
          %s1934 = scalar_lea.sflag [#allocation6], %s1933
          %s1935 = sand.u32 %s432, 1
          %s1936 = smul.addr %s1935, 8
          %s1937 = scalar_lea.vmem [#allocation7], %s1936
          %1938 = dma.done %s1934, 128
        $region112: #{tpu_custom_call.1} parent=107 // pred_fallthru
          _
      $region108: #{tpu_custom_call.1} parent=5 // pred_fallthru
        _
    $region6: #{tpu_custom_call.1} parent=1 // loop_footer
      %s33 = sadd.s32 1, %s29
    $region7: #{tpu_custom_call.1} parent=1 // loop_footer_branch
      %28 = sbr.rel target = $region3
    $region8: #{tpu_custom_call.1} parent=1 // loop_exit
      _
    %1939 = vsyncpa [#allocation5], 1
    %s1940 = scalar_lea.sflag [#allocation5], 1
    %1941 = vsyncpa %s1940, 1
    %1942 = vsyncpa [#allocation6], 1
    %s1943 = scalar_lea.sflag [#allocation6], 1
    %1944 = vsyncpa %s1943, 1

</llo_original>
